<compile_context>
chip_gen: v5e
topology: v5e:2x2
jax: 0.10.0
libtpu: 0.0.40
codegen_flags: <defaults>
</compile_context>

<pallas_src>
import functools

import numpy as np
import jax
import jax.numpy as jnp
from jax import lax
from jax.experimental import pallas as pl
from jax.experimental.pallas import tpu as pltpu

BN_EPS = 1e-5
LANE = 128     # padded lane width for every feature dimension
SUB = 8        # sublane granularity

_VMEM = pl.BlockSpec(memory_space=pltpu.MemorySpace.VMEM)


# --------------------------------------------------------------------------- #
# numerics helpers (stable, EUP-friendly)
# --------------------------------------------------------------------------- #
def _softplus(x):
    # == torch.nn.Softplus(beta=1, threshold=20) to < 1e-8
    return jnp.maximum(x, 0.0) + jnp.log1p(jnp.exp(-jnp.abs(x)))


def _sigmoid(x):
    # sigmoid(x) = 0.5*(tanh(x/2)+1): stable, tanh runs on the EUP slot
    return 0.5 * (jnp.tanh(0.5 * x) + 1.0)


# --------------------------------------------------------------------------- #
# The single fused kernel (no grid; everything resident in VMEM)
# --------------------------------------------------------------------------- #
def _cgcnn_kernel(atom_ref, nbr_ref, g_ref, e_ref, sum_ref, pool_ref,
                  emb_w_ref, emb_b_ref,
                  cs_ref, cg_ref, cb_ref, cfb_ref, c1w_ref, c1b_ref,
                  c2w_ref, c2b_ref,
                  rs_ref, rg_ref, rb_ref, rfb_ref, r1w_ref, r1b_ref,
                  r2w_ref, r2b_ref,
                  fc1_w_ref, fc1_b_ref, out_w_ref, out_b_ref,
                  o_ref, *, n_conv, n_res, AP):
    f32 = jnp.float32

    def dot(a, b):
        return jnp.dot(a, b, preferred_element_type=f32)

    def bn(x, w, b):
        # training-mode BatchNorm1d, one-pass batch stats (biased variance)
        mean = jnp.mean(x, axis=0, keepdims=True)
        var = jnp.maximum(jnp.mean(x * x, axis=0, keepdims=True) - mean * mean, 0.0)
        return (x - mean) * lax.rsqrt(var + BN_EPS) * w + b

    expand = e_ref[...]     # (NM, N) one-hot: self-expansion over M neighbors
    gather = g_ref[...]     # (NM, N) one-hot: neighbor gather
    bond = nbr_ref[...]     # (NM, BP) padded bond features (layer-invariant)
    summ = sum_ref[...]     # (N, NM)  0/1 block-sum over neighbors

    def conv_apply(atom_in, w_s, w_g, w_b, fb, bn1w, bn1b, bn2w, bn2b):
        # Reference: gated = [self|gathered|bond] @ fc_w + fc_b.
        # Since E/G are one-hot row selectors:  E@(X@Ws) == (E@X)@Ws exactly,
        # so fold the gather past the (much smaller, N-row) projections.
        gated = (dot(expand, dot(atom_in, w_s))
                 + dot(gather, dot(atom_in, w_g))
                 + dot(bond, w_b) + fb)                       # (NM, 2*AP)
        gated = bn(gated, bn1w, bn1b)
        nbr_filter = _sigmoid(gated[:, :AP])                  # filter half
        nbr_core = _softplus(gated[:, AP:])                   # core half
        nbr_sumed = dot(summ, nbr_filter * nbr_core)          # sum over M (MXU)
        nbr_sumed = bn(nbr_sumed, bn2w, bn2b)                 # (N, AP)
        return _softplus(atom_in + nbr_sumed)

    # ---- embedding -------------------------------------------------------- #
    atom_emb = dot(atom_ref[...], emb_w_ref[...]) + emb_b_ref[...]   # (N, AP)

    # ---- conv layers (reference reads the embedded features every time) --- #
    atom_fea1 = atom_emb
    for l in range(n_conv):
        atom_fea1 = conv_apply(atom_emb, cs_ref[l], cg_ref[l], cb_ref[l],
                               cfb_ref[l], c1w_ref[l], c1b_ref[l],
                               c2w_ref[l], c2b_ref[l])

    # ---- residual blocks (every block reads atom_fea1, per the reference) - #
    atom_fea2 = atom_fea1
    for l in range(n_res):
        c = conv_apply(atom_fea1, rs_ref[l], rg_ref[l], rb_ref[l],
                       rfb_ref[l], r1w_ref[l], r1b_ref[l],
                       r2w_ref[l], r2b_ref[l])
        atom_fea2 = _softplus(c + atom_fea1)

    # ---- crystal mean-pooling + MLP head ---------------------------------- #
    crys = dot(pool_ref[...], atom_fea2)                      # (Cp, AP)
    crys = _softplus(dot(_softplus(crys), fc1_w_ref[...]) + fc1_b_ref[...])
    # TODO(synk): classification branch (dropout + logsoftmax) and n_h>1 hidden
    # fcs are not exercised (classification=False, n_h=1 defaults).
    out = dot(crys, out_w_ref[...]) + out_b_ref[...]
    o_ref[...] = out.astype(o_ref.dtype)


# --------------------------------------------------------------------------- #
# Host-side padding / packing helpers
# --------------------------------------------------------------------------- #
def _pad2(a, rows, cols):
    a = np.asarray(a, np.float32)
    out = np.zeros((rows, cols), np.float32)
    out[:a.shape[0], :a.shape[1]] = a
    return out


def _pack_conv_stack(plist, A, B, AP):
    """Stack + lane-pad a list of ConvLayer params, split fc_full by source.

    fc_w rows [0:A]=self -> ws, [A:2A]=gathered -> wg, [2A:2A+B]=bond -> wb;
    output cols [0:A]=filter half -> lanes [0:A], cols [A:2A]=core half ->
    lanes [AP:AP+A].  All other entries are zero so padded lanes never
    contaminate real lanes.
    """
    n = len(plist)
    ws = np.zeros((n, AP, 2 * AP), np.float32)
    wg = np.zeros((n, AP, 2 * AP), np.float32)
    wb = np.zeros((n, AP, 2 * AP), np.float32)
    fb = np.zeros((n, 1, 2 * AP), np.float32)
    bn1w = np.zeros((n, 1, 2 * AP), np.float32)
    bn1b = np.zeros((n, 1, 2 * AP), np.float32)
    bn2w = np.zeros((n, 1, AP), np.float32)
    bn2b = np.zeros((n, 1, AP), np.float32)
    for i, p in enumerate(plist):
        w = np.asarray(p["fc_w"], np.float32)        # (2A+B, 2A)
        bias = np.asarray(p["fc_b"], np.float32)     # (2A,)
        for dst, src in ((ws, w[0:A]), (wg, w[A:2 * A]), (wb, w[2 * A:2 * A + B])):
            dst[i, :src.shape[0], 0:A] = src[:, 0:A]
            dst[i, :src.shape[0], AP:AP + A] = src[:, A:2 * A]
        fb[i, 0, 0:A] = bias[0:A]
        fb[i, 0, AP:AP + A] = bias[A:2 * A]
        b1w = np.asarray(p["bn1_w"], np.float32)
        b1b = np.asarray(p["bn1_b"], np.float32)
        bn1w[i, 0, 0:A] = b1w[0:A]
        bn1w[i, 0, AP:AP + A] = b1w[A:2 * A]
        bn1b[i, 0, 0:A] = b1b[0:A]
        bn1b[i, 0, AP:AP + A] = b1b[A:2 * A]
        bn2w[i, 0, 0:A] = np.asarray(p["bn2_w"], np.float32)
        bn2b[i, 0, 0:A] = np.asarray(p["bn2_b"], np.float32)
    return ws, wg, wb, fb, bn1w, bn1b, bn2w, bn2b


# --------------------------------------------------------------------------- #
# Full forward pass (classification=False, n_h=1 defaults)
# --------------------------------------------------------------------------- #
def cgcnn_forward(params, atom_fea, nbr_fea, nbr_fea_idx, crystal_atom_idx):
    atom_fea = np.asarray(atom_fea, np.float32)
    nbr_fea = np.asarray(nbr_fea, np.float32)
    idx = np.asarray(nbr_fea_idx, np.int32)

    N, orig = atom_fea.shape
    M = idx.shape[1]
    B = nbr_fea.shape[2]
    A = int(params["emb_w"].shape[1])
    H = int(params["fc1_w"].shape[1])
    n_out = int(params["out_w"].shape[1])
    n_conv = len(params["convs"])
    n_res = len(params["res_blocks"])
    AP = LANE
    NM = N * M

    assert A <= AP and B <= AP and orig <= AP and H <= AP
    # BN uses batch statistics, so atom/neighbor rows must not be padded.
    assert N % SUB == 0 and NM % SUB == 0

    # ---- constant 0/1 matrices built once on the host --------------------- #
    G = np.zeros((NM, N), np.float32)                  # gather: row k picks atom idx
    G[np.arange(NM), idx.reshape(-1)] = 1.0
    E = np.zeros((NM, N), np.float32)                  # self-expand over M neighbors
    E[np.arange(NM), np.repeat(np.arange(N), M)] = 1.0
    SUMM = np.zeros((N, NM), np.float32)               # block-sum over neighbors
    SUMM[np.repeat(np.arange(N), M), np.arange(NM)] = 1.0
    C = len(crystal_atom_idx)
    Cp = max(SUB, ((C + SUB - 1) // SUB) * SUB)
    POOL = np.zeros((Cp, N), np.float32)               # crystal mean-pooling
    for c, idx_map in enumerate(crystal_atom_idx):
        POOL[c, np.asarray(idx_map)] = 1.0 / len(idx_map)

    # ---- lane-padded data & parameters ------------------------------------ #
    atom_p = _pad2(atom_fea, N, AP)
    nbr_p = _pad2(nbr_fea.reshape(NM, B), NM, AP)

    emb_w = _pad2(params["emb_w"], AP, AP)
    emb_b = _pad2(np.asarray(params["emb_b"]).reshape(1, -1), 1, AP)
    fc1_w = _pad2(params["fc1_w"], AP, AP)
    fc1_b = _pad2(np.asarray(params["fc1_b"]).reshape(1, -1), 1, AP)
    out_w = _pad2(params["out_w"], AP, AP)
    out_b = _pad2(np.asarray(params["out_b"]).reshape(1, -1), 1, AP)

    cs, cg, cb, cfb, c1w, c1b, c2w, c2b = _pack_conv_stack(params["convs"], A, B, AP)
    rs, rg, rb, rfb, r1w, r1b, r2w, r2b = _pack_conv_stack(params["res_blocks"], A, B, AP)

    kern = functools.partial(_cgcnn_kernel, n_conv=n_conv, n_res=n_res, AP=AP)
    out_p = pl.pallas_call(
        kern,
        out_shape=jax.ShapeDtypeStruct((Cp, AP), jnp.float32),
        in_specs=[_VMEM] * 28,
        out_specs=_VMEM,
    )(atom_p, nbr_p, G, E, SUMM, POOL,
      emb_w, emb_b,
      cs, cg, cb, cfb, c1w, c1b, c2w, c2b,
      rs, rg, rb, rfb, r1w, r1b, r2w, r2b,
      fc1_w, fc1_b, out_w, out_b)

    return out_p[:C, :n_out]


# --------------------------------------------------------------------------- #
# Parameter init (deterministic, synthetic)
# --------------------------------------------------------------------------- #
def init_params(key, orig_atom_fea_len, nbr_fea_len, atom_fea_len,
                n_conv, h_fea_len, n_res):
    keys = iter(jax.random.split(key, 128))

    def lin(in_d, out_d):
        w = 0.1 * jax.random.normal(next(keys), (in_d, out_d), jnp.float32)
        b = 0.1 * jax.random.normal(next(keys), (out_d,), jnp.float32)
        return w, b

    def conv_p():
        fc_w, fc_b = lin(2 * atom_fea_len + nbr_fea_len, 2 * atom_fea_len)
        return dict(fc_w=fc_w, fc_b=fc_b,
                    bn1_w=jnp.ones((2 * atom_fea_len,), jnp.float32),
                    bn1_b=jnp.zeros((2 * atom_fea_len,), jnp.float32),
                    bn2_w=jnp.ones((atom_fea_len,), jnp.float32),
                    bn2_b=jnp.zeros((atom_fea_len,), jnp.float32))

    emb_w, emb_b = lin(orig_atom_fea_len, atom_fea_len)
    fc1_w, fc1_b = lin(atom_fea_len, h_fea_len)
    out_w, out_b = lin(h_fea_len, 1)
    return dict(emb_w=emb_w, emb_b=emb_b,
                convs=[conv_p() for _ in range(n_conv)],
                res_blocks=[conv_p() for _ in range(n_res)],
                fc1_w=fc1_w, fc1_b=fc1_b,
                out_w=out_w, out_b=out_b)


# --------------------------------------------------------------------------- #
# Pure NumPy (float64) reference forward — mirrors the PyTorch module
# --------------------------------------------------------------------------- #
def _np_softplus(x):
    return np.maximum(x, 0.0) + np.log1p(np.exp(-np.abs(x)))


def _np_sigmoid(x):
    return 1.0 / (1.0 + np.exp(-x))


def ref_forward(params, atom_fea, nbr_fea, nbr_fea_idx, crystal_atom_idx):
    P = jax.tree_util.tree_map(lambda a: np.asarray(a, np.float64), params)
    atom = np.asarray(atom_fea, np.float64)
    nbr = np.asarray(nbr_fea, np.float64)
    idx = np.asarray(nbr_fea_idx)
    N, M = idx.shape

    def conv(atom_in, p):
        A = atom_in.shape[1]
        atom_nbr = atom_in[idx]                                        # (N,M,A)
        total = np.concatenate(
            [np.broadcast_to(atom_in[:, None, :], (N, M, A)), atom_nbr, nbr], axis=2)
        gated = total @ p["fc_w"] + p["fc_b"]                          # (N,M,2A)
        g = gated.reshape(N * M, 2 * A)
        mean, var = g.mean(0), g.var(0)
        g = (g - mean) / np.sqrt(var + BN_EPS) * p["bn1_w"] + p["bn1_b"]
        g = g.reshape(N, M, 2 * A)
        filt, core = _np_sigmoid(g[..., :A]), _np_softplus(g[..., A:])
        s = (filt * core).sum(1)
        mean2, var2 = s.mean(0), s.var(0)
        s = (s - mean2) / np.sqrt(var2 + BN_EPS) * p["bn2_w"] + p["bn2_b"]
        return _np_softplus(atom_in + s)

    atom_emb = atom @ P["emb_w"] + P["emb_b"]
    fea1 = atom_emb
    for p in P["convs"]:
        fea1 = conv(atom_emb, p)
    fea2 = fea1
    for p in P["res_blocks"]:
        fea2 = _np_softplus(conv(fea1, p) + fea1)
    crys = np.stack([fea2[np.asarray(im)].mean(0) for im in crystal_atom_idx])
    crys = _np_softplus(_np_softplus(crys) @ P["fc1_w"] + P["fc1_b"])
    return crys @ P["out_w"] + P["out_b"]


# --------------------------------------------------------------------------- #
if __name__ == "__main__":
    # small but representative sizes
    ORIG_FEA = 16     # orig_atom_fea_len
    NBR_FEA = 16      # nbr_fea_len
    ATOM_FEA = 32     # atom_fea_len
    H_FEA = 64        # h_fea_len
    N_CONV, N_RES = 3, 1
    N_ATOMS, M_NBR = 16, 8

    key = jax.random.PRNGKey(0)
    k_p, k_a, k_n, k_i = jax.random.split(key, 4)

    params = init_params(k_p, ORIG_FEA, NBR_FEA, ATOM_FEA, N_CONV, H_FEA, N_RES)

    atom_fea = np.asarray(jax.random.normal(k_a, (N_ATOMS, ORIG_FEA), jnp.float32))
    nbr_fea = np.asarray(jax.random.normal(k_n, (N_ATOMS, M_NBR, NBR_FEA), jnp.float32))
    nbr_fea_idx = np.asarray(jax.random.randint(k_i, (N_ATOMS, M_NBR), 0, N_ATOMS,
                                                dtype=jnp.int32))
    # two crystals of 8 atoms each
    crystal_atom_idx = [np.arange(0, 8), np.arange(8, 16)]

    out = cgcnn_forward(params, atom_fea, nbr_fea, nbr_fea_idx, crystal_atom_idx)
    out = jax.block_until_ready(out)
    out_np = np.asarray(out, np.float64)

    ref = ref_forward(params, atom_fea, nbr_fea, nbr_fea_idx, crystal_atom_idx)

    assert out.shape == (len(crystal_atom_idx), 1)
    assert np.all(np.isfinite(out_np))
    assert np.allclose(out_np, ref, rtol=2e-2, atol=2e-2), (out_np, ref)
    print("KERNEL_OK")
</pallas_src>

<mosaic_0001>
module attributes {stable_mosaic.version = 11 : i64} {
  func.func @_cgcnn_kernel(%arg0: memref<16x128xf32, #tpu.memory_space<vmem>>, %arg1: memref<128x128xf32, #tpu.memory_space<vmem>>, %arg2: memref<128x16xf32, #tpu.memory_space<vmem>>, %arg3: memref<128x16xf32, #tpu.memory_space<vmem>>, %arg4: memref<16x128xf32, #tpu.memory_space<vmem>>, %arg5: memref<8x16xf32, #tpu.memory_space<vmem>>, %arg6: memref<128x128xf32, #tpu.memory_space<vmem>>, %arg7: memref<1x128xf32, #tpu.memory_space<vmem>>, %arg8: memref<3x128x256xf32, #tpu.memory_space<vmem>>, %arg9: memref<3x128x256xf32, #tpu.memory_space<vmem>>, %arg10: memref<3x128x256xf32, #tpu.memory_space<vmem>>, %arg11: memref<3x1x256xf32, #tpu.memory_space<vmem>>, %arg12: memref<3x1x256xf32, #tpu.memory_space<vmem>>, %arg13: memref<3x1x256xf32, #tpu.memory_space<vmem>>, %arg14: memref<3x1x128xf32, #tpu.memory_space<vmem>>, %arg15: memref<3x1x128xf32, #tpu.memory_space<vmem>>, %arg16: memref<1x128x256xf32, #tpu.memory_space<vmem>>, %arg17: memref<1x128x256xf32, #tpu.memory_space<vmem>>, %arg18: memref<1x128x256xf32, #tpu.memory_space<vmem>>, %arg19: memref<1x1x256xf32, #tpu.memory_space<vmem>>, %arg20: memref<1x1x256xf32, #tpu.memory_space<vmem>>, %arg21: memref<1x1x256xf32, #tpu.memory_space<vmem>>, %arg22: memref<1x1x128xf32, #tpu.memory_space<vmem>>, %arg23: memref<1x1x128xf32, #tpu.memory_space<vmem>>, %arg24: memref<128x128xf32, #tpu.memory_space<vmem>>, %arg25: memref<1x128xf32, #tpu.memory_space<vmem>>, %arg26: memref<128x128xf32, #tpu.memory_space<vmem>>, %arg27: memref<1x128xf32, #tpu.memory_space<vmem>>, %arg28: memref<8x128xf32, #tpu.memory_space<vmem>>) attributes {dimension_semantics = [], scalar_prefetch = 0 : i64, scratch_operands = 0 : i64, tpu.core_type = #tpu.core_type<tc>} {
    %c0 = arith.constant 0 : index
    %c0_0 = arith.constant 0 : index
    %0 = vector.load %arg3[%c0, %c0_0] : memref<128x16xf32, #tpu.memory_space<vmem>>, vector<128x16xf32>
    %c0_1 = arith.constant 0 : index
    %c0_2 = arith.constant 0 : index
    %1 = vector.load %arg2[%c0_1, %c0_2] : memref<128x16xf32, #tpu.memory_space<vmem>>, vector<128x16xf32>
    %c0_3 = arith.constant 0 : index
    %c0_4 = arith.constant 0 : index
    %2 = vector.load %arg1[%c0_3, %c0_4] : memref<128x128xf32, #tpu.memory_space<vmem>>, vector<128x128xf32>
    %c0_5 = arith.constant 0 : index
    %c0_6 = arith.constant 0 : index
    %3 = vector.load %arg4[%c0_5, %c0_6] : memref<16x128xf32, #tpu.memory_space<vmem>>, vector<16x128xf32>
    %c0_7 = arith.constant 0 : index
    %c0_8 = arith.constant 0 : index
    %4 = vector.load %arg0[%c0_7, %c0_8] : memref<16x128xf32, #tpu.memory_space<vmem>>, vector<16x128xf32>
    %c0_9 = arith.constant 0 : index
    %c0_10 = arith.constant 0 : index
    %5 = vector.load %arg6[%c0_9, %c0_10] : memref<128x128xf32, #tpu.memory_space<vmem>>, vector<128x128xf32>
    %cst = arith.constant dense<0.000000e+00> : vector<16x128xf32>
    %6 = tpu.matmul %4, %5, %cst {dimension_numbers = #tpu.dot_dimension_numbers<[1], [0], [0], [1], [0, 0, 1, 1], [], []>} : vector<16x128xf32>, vector<128x128xf32>, vector<16x128xf32> -> vector<16x128xf32>
    %c0_11 = arith.constant 0 : index
    %c0_12 = arith.constant 0 : index
    %7 = vector.load %arg7[%c0_11, %c0_12] : memref<1x128xf32, #tpu.memory_space<vmem>>, vector<1x128xf32>
    %8 = vector.broadcast %7 : vector<1x128xf32> to vector<16x128xf32>
    %9 = arith.addf %6, %8 : vector<16x128xf32>
    %c2 = arith.constant 2 : index
    %c0_13 = arith.constant 0 : index
    %c0_14 = arith.constant 0 : index
    %10 = vector.load %arg8[%c2, %c0_13, %c0_14] : memref<3x128x256xf32, #tpu.memory_space<vmem>>, vector<1x128x256xf32>
    %11 = vector.shape_cast %10 : vector<1x128x256xf32> to vector<128x256xf32>
    %c2_15 = arith.constant 2 : index
    %c0_16 = arith.constant 0 : index
    %c0_17 = arith.constant 0 : index
    %12 = vector.load %arg9[%c2_15, %c0_16, %c0_17] : memref<3x128x256xf32, #tpu.memory_space<vmem>>, vector<1x128x256xf32>
    %13 = vector.shape_cast %12 : vector<1x128x256xf32> to vector<128x256xf32>
    %c2_18 = arith.constant 2 : index
    %c0_19 = arith.constant 0 : index
    %c0_20 = arith.constant 0 : index
    %14 = vector.load %arg10[%c2_18, %c0_19, %c0_20] : memref<3x128x256xf32, #tpu.memory_space<vmem>>, vector<1x128x256xf32>
    %15 = vector.shape_cast %14 : vector<1x128x256xf32> to vector<128x256xf32>
    %c2_21 = arith.constant 2 : index
    %c0_22 = arith.constant 0 : index
    %c0_23 = arith.constant 0 : index
    %16 = vector.load %arg11[%c2_21, %c0_22, %c0_23] : memref<3x1x256xf32, #tpu.memory_space<vmem>>, vector<1x1x256xf32>
    %17 = vector.shape_cast %16 : vector<1x1x256xf32> to vector<1x256xf32>
    %c2_24 = arith.constant 2 : index
    %c0_25 = arith.constant 0 : index
    %c0_26 = arith.constant 0 : index
    %18 = vector.load %arg12[%c2_24, %c0_25, %c0_26] : memref<3x1x256xf32, #tpu.memory_space<vmem>>, vector<1x1x256xf32>
    %19 = vector.shape_cast %18 : vector<1x1x256xf32> to vector<1x256xf32>
    %c2_27 = arith.constant 2 : index
    %c0_28 = arith.constant 0 : index
    %c0_29 = arith.constant 0 : index
    %20 = vector.load %arg13[%c2_27, %c0_28, %c0_29] : memref<3x1x256xf32, #tpu.memory_space<vmem>>, vector<1x1x256xf32>
    %21 = vector.shape_cast %20 : vector<1x1x256xf32> to vector<1x256xf32>
    %c2_30 = arith.constant 2 : index
    %c0_31 = arith.constant 0 : index
    %c0_32 = arith.constant 0 : index
    %22 = vector.load %arg14[%c2_30, %c0_31, %c0_32] : memref<3x1x128xf32, #tpu.memory_space<vmem>>, vector<1x1x128xf32>
    %23 = vector.shape_cast %22 : vector<1x1x128xf32> to vector<1x128xf32>
    %c2_33 = arith.constant 2 : index
    %c0_34 = arith.constant 0 : index
    %c0_35 = arith.constant 0 : index
    %24 = vector.load %arg15[%c2_33, %c0_34, %c0_35] : memref<3x1x128xf32, #tpu.memory_space<vmem>>, vector<1x1x128xf32>
    %25 = vector.shape_cast %24 : vector<1x1x128xf32> to vector<1x128xf32>
    %cst_36 = arith.constant dense<0.000000e+00> : vector<16x256xf32>
    %26 = tpu.matmul %9, %11, %cst_36 {dimension_numbers = #tpu.dot_dimension_numbers<[1], [0], [0], [1], [0, 0, 1, 1], [], []>} : vector<16x128xf32>, vector<128x256xf32>, vector<16x256xf32> -> vector<16x256xf32>
    %cst_37 = arith.constant dense<0.000000e+00> : vector<128x256xf32>
    %27 = tpu.matmul %0, %26, %cst_37 {dimension_numbers = #tpu.dot_dimension_numbers<[1], [0], [0], [1], [0, 0, 1, 1], [], []>} : vector<128x16xf32>, vector<16x256xf32>, vector<128x256xf32> -> vector<128x256xf32>
    %cst_38 = arith.constant dense<0.000000e+00> : vector<16x256xf32>
    %28 = tpu.matmul %9, %13, %cst_38 {dimension_numbers = #tpu.dot_dimension_numbers<[1], [0], [0], [1], [0, 0, 1, 1], [], []>} : vector<16x128xf32>, vector<128x256xf32>, vector<16x256xf32> -> vector<16x256xf32>
    %cst_39 = arith.constant dense<0.000000e+00> : vector<128x256xf32>
    %29 = tpu.matmul %1, %28, %cst_39 {dimension_numbers = #tpu.dot_dimension_numbers<[1], [0], [0], [1], [0, 0, 1, 1], [], []>} : vector<128x16xf32>, vector<16x256xf32>, vector<128x256xf32> -> vector<128x256xf32>
    %30 = arith.addf %27, %29 : vector<128x256xf32>
    %cst_40 = arith.constant dense<0.000000e+00> : vector<128x256xf32>
    %31 = tpu.matmul %2, %15, %cst_40 {dimension_numbers = #tpu.dot_dimension_numbers<[1], [0], [0], [1], [0, 0, 1, 1], [], []>} : vector<128x128xf32>, vector<128x256xf32>, vector<128x256xf32> -> vector<128x256xf32>
    %32 = arith.addf %30, %31 : vector<128x256xf32>
    %33 = vector.broadcast %17 : vector<1x256xf32> to vector<128x256xf32>
    %34 = arith.addf %32, %33 : vector<128x256xf32>
    %cst_41 = arith.constant dense<0.000000e+00> : vector<256xf32>
    %35 = vector.multi_reduction <add>, %34, %cst_41 [0] : vector<128x256xf32> to vector<256xf32>
    %36 = vector.shape_cast %35 : vector<256xf32> to vector<1x256xf32>
    %cst_42 = arith.constant 1.280000e+02 : f32
    %37 = vector.broadcast %cst_42 : f32 to vector<1x256xf32>
    %38 = arith.divf %36, %37 : vector<1x256xf32>
    %39 = arith.mulf %34, %34 : vector<128x256xf32>
    %cst_43 = arith.constant dense<0.000000e+00> : vector<256xf32>
    %40 = vector.multi_reduction <add>, %39, %cst_43 [0] : vector<128x256xf32> to vector<256xf32>
    %41 = vector.shape_cast %40 : vector<256xf32> to vector<1x256xf32>
    %cst_44 = arith.constant 1.280000e+02 : f32
    %42 = vector.broadcast %cst_44 : f32 to vector<1x256xf32>
    %43 = arith.divf %41, %42 : vector<1x256xf32>
    %44 = arith.mulf %38, %38 : vector<1x256xf32>
    %45 = arith.subf %43, %44 : vector<1x256xf32>
    %cst_45 = arith.constant 0.000000e+00 : f32
    %46 = vector.broadcast %cst_45 : f32 to vector<1x256xf32>
    %47 = arith.maximumf %45, %46 : vector<1x256xf32>
    %48 = vector.broadcast %38 : vector<1x256xf32> to vector<128x256xf32>
    %49 = arith.subf %34, %48 : vector<128x256xf32>
    %cst_46 = arith.constant 9.99999974E-6 : f32
    %50 = vector.broadcast %cst_46 : f32 to vector<1x256xf32>
    %51 = arith.addf %47, %50 : vector<1x256xf32>
    %52 = math.rsqrt %51 : vector<1x256xf32>
    %53 = vector.broadcast %52 : vector<1x256xf32> to vector<128x256xf32>
    %54 = arith.mulf %49, %53 : vector<128x256xf32>
    %55 = vector.broadcast %19 : vector<1x256xf32> to vector<128x256xf32>
    %56 = arith.mulf %54, %55 : vector<128x256xf32>
    %57 = vector.broadcast %21 : vector<1x256xf32> to vector<128x256xf32>
    %58 = arith.addf %56, %57 : vector<128x256xf32>
    %59 = vector.extract_strided_slice %58 {offsets = [0, 0], sizes = [128, 128], strides = [1, 1]} : vector<128x256xf32> to vector<128x128xf32>
    %cst_47 = arith.constant 5.000000e-01 : f32
    %60 = vector.broadcast %cst_47 : f32 to vector<128x128xf32>
    %61 = arith.mulf %60, %59 : vector<128x128xf32>
    %62 = math.tanh %61 : vector<128x128xf32>
    %cst_48 = arith.constant 1.000000e+00 : f32
    %63 = vector.broadcast %cst_48 : f32 to vector<128x128xf32>
    %64 = arith.addf %62, %63 : vector<128x128xf32>
    %cst_49 = arith.constant 5.000000e-01 : f32
    %65 = vector.broadcast %cst_49 : f32 to vector<128x128xf32>
    %66 = arith.mulf %65, %64 : vector<128x128xf32>
    %67 = vector.extract_strided_slice %58 {offsets = [0, 128], sizes = [128, 128], strides = [1, 1]} : vector<128x256xf32> to vector<128x128xf32>
    %cst_50 = arith.constant 0.000000e+00 : f32
    %68 = vector.broadcast %cst_50 : f32 to vector<128x128xf32>
    %69 = arith.maximumf %67, %68 : vector<128x128xf32>
    %70 = math.absf %67 : vector<128x128xf32>
    %cst_51 = arith.constant 0.000000e+00 : f32
    %71 = vector.broadcast %cst_51 : f32 to vector<128x128xf32>
    %72 = arith.subf %71, %70 : vector<128x128xf32>
    %73 = math.exp %72 : vector<128x128xf32>
    %74 = math.log1p %73 : vector<128x128xf32>
    %75 = arith.addf %69, %74 : vector<128x128xf32>
    %76 = arith.mulf %66, %75 : vector<128x128xf32>
    %cst_52 = arith.constant dense<0.000000e+00> : vector<16x128xf32>
    %77 = tpu.matmul %3, %76, %cst_52 {dimension_numbers = #tpu.dot_dimension_numbers<[1], [0], [0], [1], [0, 0, 1, 1], [], []>} : vector<16x128xf32>, vector<128x128xf32>, vector<16x128xf32> -> vector<16x128xf32>
    %cst_53 = arith.constant dense<0.000000e+00> : vector<128xf32>
    %78 = vector.multi_reduction <add>, %77, %cst_53 [0] : vector<16x128xf32> to vector<128xf32>
    %79 = vector.shape_cast %78 : vector<128xf32> to vector<1x128xf32>
    %cst_54 = arith.constant 1.600000e+01 : f32
    %80 = vector.broadcast %cst_54 : f32 to vector<1x128xf32>
    %81 = arith.divf %79, %80 : vector<1x128xf32>
    %82 = arith.mulf %77, %77 : vector<16x128xf32>
    %cst_55 = arith.constant dense<0.000000e+00> : vector<128xf32>
    %83 = vector.multi_reduction <add>, %82, %cst_55 [0] : vector<16x128xf32> to vector<128xf32>
    %84 = vector.shape_cast %83 : vector<128xf32> to vector<1x128xf32>
    %cst_56 = arith.constant 1.600000e+01 : f32
    %85 = vector.broadcast %cst_56 : f32 to vector<1x128xf32>
    %86 = arith.divf %84, %85 : vector<1x128xf32>
    %87 = arith.mulf %81, %81 : vector<1x128xf32>
    %88 = arith.subf %86, %87 : vector<1x128xf32>
    %cst_57 = arith.constant 0.000000e+00 : f32
    %89 = vector.broadcast %cst_57 : f32 to vector<1x128xf32>
    %90 = arith.maximumf %88, %89 : vector<1x128xf32>
    %91 = vector.broadcast %81 : vector<1x128xf32> to vector<16x128xf32>
    %92 = arith.subf %77, %91 : vector<16x128xf32>
    %cst_58 = arith.constant 9.99999974E-6 : f32
    %93 = vector.broadcast %cst_58 : f32 to vector<1x128xf32>
    %94 = arith.addf %90, %93 : vector<1x128xf32>
    %95 = math.rsqrt %94 : vector<1x128xf32>
    %96 = vector.broadcast %95 : vector<1x128xf32> to vector<16x128xf32>
    %97 = arith.mulf %92, %96 : vector<16x128xf32>
    %98 = vector.broadcast %23 : vector<1x128xf32> to vector<16x128xf32>
    %99 = arith.mulf %97, %98 : vector<16x128xf32>
    %100 = vector.broadcast %25 : vector<1x128xf32> to vector<16x128xf32>
    %101 = arith.addf %99, %100 : vector<16x128xf32>
    %102 = arith.addf %9, %101 : vector<16x128xf32>
    %cst_59 = arith.constant 0.000000e+00 : f32
    %103 = vector.broadcast %cst_59 : f32 to vector<16x128xf32>
    %104 = arith.maximumf %102, %103 : vector<16x128xf32>
    %105 = math.absf %102 : vector<16x128xf32>
    %cst_60 = arith.constant 0.000000e+00 : f32
    %106 = vector.broadcast %cst_60 : f32 to vector<16x128xf32>
    %107 = arith.subf %106, %105 : vector<16x128xf32>
    %108 = math.exp %107 : vector<16x128xf32>
    %109 = math.log1p %108 : vector<16x128xf32>
    %110 = arith.addf %104, %109 : vector<16x128xf32>
    %c0_61 = arith.constant 0 : index
    %c0_62 = arith.constant 0 : index
    %c0_63 = arith.constant 0 : index
    %111 = vector.load %arg16[%c0_61, %c0_62, %c0_63] : memref<1x128x256xf32, #tpu.memory_space<vmem>>, vector<1x128x256xf32>
    %112 = vector.shape_cast %111 : vector<1x128x256xf32> to vector<128x256xf32>
    %c0_64 = arith.constant 0 : index
    %c0_65 = arith.constant 0 : index
    %c0_66 = arith.constant 0 : index
    %113 = vector.load %arg17[%c0_64, %c0_65, %c0_66] : memref<1x128x256xf32, #tpu.memory_space<vmem>>, vector<1x128x256xf32>
    %114 = vector.shape_cast %113 : vector<1x128x256xf32> to vector<128x256xf32>
    %c0_67 = arith.constant 0 : index
    %c0_68 = arith.constant 0 : index
    %c0_69 = arith.constant 0 : index
    %115 = vector.load %arg18[%c0_67, %c0_68, %c0_69] : memref<1x128x256xf32, #tpu.memory_space<vmem>>, vector<1x128x256xf32>
    %116 = vector.shape_cast %115 : vector<1x128x256xf32> to vector<128x256xf32>
    %c0_70 = arith.constant 0 : index
    %c0_71 = arith.constant 0 : index
    %c0_72 = arith.constant 0 : index
    %117 = vector.load %arg19[%c0_70, %c0_71, %c0_72] : memref<1x1x256xf32, #tpu.memory_space<vmem>>, vector<1x1x256xf32>
    %118 = vector.shape_cast %117 : vector<1x1x256xf32> to vector<1x256xf32>
    %c0_73 = arith.constant 0 : index
    %c0_74 = arith.constant 0 : index
    %c0_75 = arith.constant 0 : index
    %119 = vector.load %arg20[%c0_73, %c0_74, %c0_75] : memref<1x1x256xf32, #tpu.memory_space<vmem>>, vector<1x1x256xf32>
    %120 = vector.shape_cast %119 : vector<1x1x256xf32> to vector<1x256xf32>
    %c0_76 = arith.constant 0 : index
    %c0_77 = arith.constant 0 : index
    %c0_78 = arith.constant 0 : index
    %121 = vector.load %arg21[%c0_76, %c0_77, %c0_78] : memref<1x1x256xf32, #tpu.memory_space<vmem>>, vector<1x1x256xf32>
    %122 = vector.shape_cast %121 : vector<1x1x256xf32> to vector<1x256xf32>
    %c0_79 = arith.constant 0 : index
    %c0_80 = arith.constant 0 : index
    %c0_81 = arith.constant 0 : index
    %123 = vector.load %arg22[%c0_79, %c0_80, %c0_81] : memref<1x1x128xf32, #tpu.memory_space<vmem>>, vector<1x1x128xf32>
    %124 = vector.shape_cast %123 : vector<1x1x128xf32> to vector<1x128xf32>
    %c0_82 = arith.constant 0 : index
    %c0_83 = arith.constant 0 : index
    %c0_84 = arith.constant 0 : index
    %125 = vector.load %arg23[%c0_82, %c0_83, %c0_84] : memref<1x1x128xf32, #tpu.memory_space<vmem>>, vector<1x1x128xf32>
    %126 = vector.shape_cast %125 : vector<1x1x128xf32> to vector<1x128xf32>
    %cst_85 = arith.constant dense<0.000000e+00> : vector<16x256xf32>
    %127 = tpu.matmul %110, %112, %cst_85 {dimension_numbers = #tpu.dot_dimension_numbers<[1], [0], [0], [1], [0, 0, 1, 1], [], []>} : vector<16x128xf32>, vector<128x256xf32>, vector<16x256xf32> -> vector<16x256xf32>
    %cst_86 = arith.constant dense<0.000000e+00> : vector<128x256xf32>
    %128 = tpu.matmul %0, %127, %cst_86 {dimension_numbers = #tpu.dot_dimension_numbers<[1], [0], [0], [1], [0, 0, 1, 1], [], []>} : vector<128x16xf32>, vector<16x256xf32>, vector<128x256xf32> -> vector<128x256xf32>
    %cst_87 = arith.constant dense<0.000000e+00> : vector<16x256xf32>
    %129 = tpu.matmul %110, %114, %cst_87 {dimension_numbers = #tpu.dot_dimension_numbers<[1], [0], [0], [1], [0, 0, 1, 1], [], []>} : vector<16x128xf32>, vector<128x256xf32>, vector<16x256xf32> -> vector<16x256xf32>
    %cst_88 = arith.constant dense<0.000000e+00> : vector<128x256xf32>
    %130 = tpu.matmul %1, %129, %cst_88 {dimension_numbers = #tpu.dot_dimension_numbers<[1], [0], [0], [1], [0, 0, 1, 1], [], []>} : vector<128x16xf32>, vector<16x256xf32>, vector<128x256xf32> -> vector<128x256xf32>
    %131 = arith.addf %128, %130 : vector<128x256xf32>
    %cst_89 = arith.constant dense<0.000000e+00> : vector<128x256xf32>
    %132 = tpu.matmul %2, %116, %cst_89 {dimension_numbers = #tpu.dot_dimension_numbers<[1], [0], [0], [1], [0, 0, 1, 1], [], []>} : vector<128x128xf32>, vector<128x256xf32>, vector<128x256xf32> -> vector<128x256xf32>
    %133 = arith.addf %131, %132 : vector<128x256xf32>
    %134 = vector.broadcast %118 : vector<1x256xf32> to vector<128x256xf32>
    %135 = arith.addf %133, %134 : vector<128x256xf32>
    %cst_90 = arith.constant dense<0.000000e+00> : vector<256xf32>
    %136 = vector.multi_reduction <add>, %135, %cst_90 [0] : vector<128x256xf32> to vector<256xf32>
    %137 = vector.shape_cast %136 : vector<256xf32> to vector<1x256xf32>
    %cst_91 = arith.constant 1.280000e+02 : f32
    %138 = vector.broadcast %cst_91 : f32 to vector<1x256xf32>
    %139 = arith.divf %137, %138 : vector<1x256xf32>
    %140 = arith.mulf %135, %135 : vector<128x256xf32>
    %cst_92 = arith.constant dense<0.000000e+00> : vector<256xf32>
    %141 = vector.multi_reduction <add>, %140, %cst_92 [0] : vector<128x256xf32> to vector<256xf32>
    %142 = vector.shape_cast %141 : vector<256xf32> to vector<1x256xf32>
    %cst_93 = arith.constant 1.280000e+02 : f32
    %143 = vector.broadcast %cst_93 : f32 to vector<1x256xf32>
    %144 = arith.divf %142, %143 : vector<1x256xf32>
    %145 = arith.mulf %139, %139 : vector<1x256xf32>
    %146 = arith.subf %144, %145 : vector<1x256xf32>
    %cst_94 = arith.constant 0.000000e+00 : f32
    %147 = vector.broadcast %cst_94 : f32 to vector<1x256xf32>
    %148 = arith.maximumf %146, %147 : vector<1x256xf32>
    %149 = vector.broadcast %139 : vector<1x256xf32> to vector<128x256xf32>
    %150 = arith.subf %135, %149 : vector<128x256xf32>
    %cst_95 = arith.constant 9.99999974E-6 : f32
    %151 = vector.broadcast %cst_95 : f32 to vector<1x256xf32>
    %152 = arith.addf %148, %151 : vector<1x256xf32>
    %153 = math.rsqrt %152 : vector<1x256xf32>
    %154 = vector.broadcast %153 : vector<1x256xf32> to vector<128x256xf32>
    %155 = arith.mulf %150, %154 : vector<128x256xf32>
    %156 = vector.broadcast %120 : vector<1x256xf32> to vector<128x256xf32>
    %157 = arith.mulf %155, %156 : vector<128x256xf32>
    %158 = vector.broadcast %122 : vector<1x256xf32> to vector<128x256xf32>
    %159 = arith.addf %157, %158 : vector<128x256xf32>
    %160 = vector.extract_strided_slice %159 {offsets = [0, 0], sizes = [128, 128], strides = [1, 1]} : vector<128x256xf32> to vector<128x128xf32>
    %cst_96 = arith.constant 5.000000e-01 : f32
    %161 = vector.broadcast %cst_96 : f32 to vector<128x128xf32>
    %162 = arith.mulf %161, %160 : vector<128x128xf32>
    %163 = math.tanh %162 : vector<128x128xf32>
    %cst_97 = arith.constant 1.000000e+00 : f32
    %164 = vector.broadcast %cst_97 : f32 to vector<128x128xf32>
    %165 = arith.addf %163, %164 : vector<128x128xf32>
    %cst_98 = arith.constant 5.000000e-01 : f32
    %166 = vector.broadcast %cst_98 : f32 to vector<128x128xf32>
    %167 = arith.mulf %166, %165 : vector<128x128xf32>
    %168 = vector.extract_strided_slice %159 {offsets = [0, 128], sizes = [128, 128], strides = [1, 1]} : vector<128x256xf32> to vector<128x128xf32>
    %cst_99 = arith.constant 0.000000e+00 : f32
    %169 = vector.broadcast %cst_99 : f32 to vector<128x128xf32>
    %170 = arith.maximumf %168, %169 : vector<128x128xf32>
    %171 = math.absf %168 : vector<128x128xf32>
    %cst_100 = arith.constant 0.000000e+00 : f32
    %172 = vector.broadcast %cst_100 : f32 to vector<128x128xf32>
    %173 = arith.subf %172, %171 : vector<128x128xf32>
    %174 = math.exp %173 : vector<128x128xf32>
    %175 = math.log1p %174 : vector<128x128xf32>
    %176 = arith.addf %170, %175 : vector<128x128xf32>
    %177 = arith.mulf %167, %176 : vector<128x128xf32>
    %cst_101 = arith.constant dense<0.000000e+00> : vector<16x128xf32>
    %178 = tpu.matmul %3, %177, %cst_101 {dimension_numbers = #tpu.dot_dimension_numbers<[1], [0], [0], [1], [0, 0, 1, 1], [], []>} : vector<16x128xf32>, vector<128x128xf32>, vector<16x128xf32> -> vector<16x128xf32>
    %cst_102 = arith.constant dense<0.000000e+00> : vector<128xf32>
    %179 = vector.multi_reduction <add>, %178, %cst_102 [0] : vector<16x128xf32> to vector<128xf32>
    %180 = vector.shape_cast %179 : vector<128xf32> to vector<1x128xf32>
    %cst_103 = arith.constant 1.600000e+01 : f32
    %181 = vector.broadcast %cst_103 : f32 to vector<1x128xf32>
    %182 = arith.divf %180, %181 : vector<1x128xf32>
    %183 = arith.mulf %178, %178 : vector<16x128xf32>
    %cst_104 = arith.constant dense<0.000000e+00> : vector<128xf32>
    %184 = vector.multi_reduction <add>, %183, %cst_104 [0] : vector<16x128xf32> to vector<128xf32>
    %185 = vector.shape_cast %184 : vector<128xf32> to vector<1x128xf32>
    %cst_105 = arith.constant 1.600000e+01 : f32
    %186 = vector.broadcast %cst_105 : f32 to vector<1x128xf32>
    %187 = arith.divf %185, %186 : vector<1x128xf32>
    %188 = arith.mulf %182, %182 : vector<1x128xf32>
    %189 = arith.subf %187, %188 : vector<1x128xf32>
    %cst_106 = arith.constant 0.000000e+00 : f32
    %190 = vector.broadcast %cst_106 : f32 to vector<1x128xf32>
    %191 = arith.maximumf %189, %190 : vector<1x128xf32>
    %192 = vector.broadcast %182 : vector<1x128xf32> to vector<16x128xf32>
    %193 = arith.subf %178, %192 : vector<16x128xf32>
    %cst_107 = arith.constant 9.99999974E-6 : f32
    %194 = vector.broadcast %cst_107 : f32 to vector<1x128xf32>
    %195 = arith.addf %191, %194 : vector<1x128xf32>
    %196 = math.rsqrt %195 : vector<1x128xf32>
    %197 = vector.broadcast %196 : vector<1x128xf32> to vector<16x128xf32>
    %198 = arith.mulf %193, %197 : vector<16x128xf32>
    %199 = vector.broadcast %124 : vector<1x128xf32> to vector<16x128xf32>
    %200 = arith.mulf %198, %199 : vector<16x128xf32>
    %201 = vector.broadcast %126 : vector<1x128xf32> to vector<16x128xf32>
    %202 = arith.addf %200, %201 : vector<16x128xf32>
    %203 = arith.addf %110, %202 : vector<16x128xf32>
    %cst_108 = arith.constant 0.000000e+00 : f32
    %204 = vector.broadcast %cst_108 : f32 to vector<16x128xf32>
    %205 = arith.maximumf %203, %204 : vector<16x128xf32>
    %206 = math.absf %203 : vector<16x128xf32>
    %cst_109 = arith.constant 0.000000e+00 : f32
    %207 = vector.broadcast %cst_109 : f32 to vector<16x128xf32>
    %208 = arith.subf %207, %206 : vector<16x128xf32>
    %209 = math.exp %208 : vector<16x128xf32>
    %210 = math.log1p %209 : vector<16x128xf32>
    %211 = arith.addf %205, %210 : vector<16x128xf32>
    %212 = arith.addf %211, %110 : vector<16x128xf32>
    %cst_110 = arith.constant 0.000000e+00 : f32
    %213 = vector.broadcast %cst_110 : f32 to vector<16x128xf32>
    %214 = arith.maximumf %212, %213 : vector<16x128xf32>
    %215 = math.absf %212 : vector<16x128xf32>
    %cst_111 = arith.constant 0.000000e+00 : f32
    %216 = vector.broadcast %cst_111 : f32 to vector<16x128xf32>
    %217 = arith.subf %216, %215 : vector<16x128xf32>
    %218 = math.exp %217 : vector<16x128xf32>
    %219 = math.log1p %218 : vector<16x128xf32>
    %220 = arith.addf %214, %219 : vector<16x128xf32>
    %c0_112 = arith.constant 0 : index
    %c0_113 = arith.constant 0 : index
    %221 = vector.load %arg5[%c0_112, %c0_113] : memref<8x16xf32, #tpu.memory_space<vmem>>, vector<8x16xf32>
    %cst_114 = arith.constant dense<0.000000e+00> : vector<8x128xf32>
    %222 = tpu.matmul %221, %220, %cst_114 {dimension_numbers = #tpu.dot_dimension_numbers<[1], [0], [0], [1], [0, 0, 1, 1], [], []>} : vector<8x16xf32>, vector<16x128xf32>, vector<8x128xf32> -> vector<8x128xf32>
    %cst_115 = arith.constant 0.000000e+00 : f32
    %223 = vector.broadcast %cst_115 : f32 to vector<8x128xf32>
    %224 = arith.maximumf %222, %223 : vector<8x128xf32>
    %225 = math.absf %222 : vector<8x128xf32>
    %cst_116 = arith.constant 0.000000e+00 : f32
    %226 = vector.broadcast %cst_116 : f32 to vector<8x128xf32>
    %227 = arith.subf %226, %225 : vector<8x128xf32>
    %228 = math.exp %227 : vector<8x128xf32>
    %229 = math.log1p %228 : vector<8x128xf32>
    %230 = arith.addf %224, %229 : vector<8x128xf32>
    %c0_117 = arith.constant 0 : index
    %c0_118 = arith.constant 0 : index
    %231 = vector.load %arg24[%c0_117, %c0_118] : memref<128x128xf32, #tpu.memory_space<vmem>>, vector<128x128xf32>
    %cst_119 = arith.constant dense<0.000000e+00> : vector<8x128xf32>
    %232 = tpu.matmul %230, %231, %cst_119 {dimension_numbers = #tpu.dot_dimension_numbers<[1], [0], [0], [1], [0, 0, 1, 1], [], []>} : vector<8x128xf32>, vector<128x128xf32>, vector<8x128xf32> -> vector<8x128xf32>
    %c0_120 = arith.constant 0 : index
    %c0_121 = arith.constant 0 : index
    %233 = vector.load %arg25[%c0_120, %c0_121] : memref<1x128xf32, #tpu.memory_space<vmem>>, vector<1x128xf32>
    %234 = vector.broadcast %233 : vector<1x128xf32> to vector<8x128xf32>
    %235 = arith.addf %232, %234 : vector<8x128xf32>
    %cst_122 = arith.constant 0.000000e+00 : f32
    %236 = vector.broadcast %cst_122 : f32 to vector<8x128xf32>
    %237 = arith.maximumf %235, %236 : vector<8x128xf32>
    %238 = math.absf %235 : vector<8x128xf32>
    %cst_123 = arith.constant 0.000000e+00 : f32
    %239 = vector.broadcast %cst_123 : f32 to vector<8x128xf32>
    %240 = arith.subf %239, %238 : vector<8x128xf32>
    %241 = math.exp %240 : vector<8x128xf32>
    %242 = math.log1p %241 : vector<8x128xf32>
    %243 = arith.addf %237, %242 : vector<8x128xf32>
    %c0_124 = arith.constant 0 : index
    %c0_125 = arith.constant 0 : index
    %244 = vector.load %arg26[%c0_124, %c0_125] : memref<128x128xf32, #tpu.memory_space<vmem>>, vector<128x128xf32>
    %cst_126 = arith.constant dense<0.000000e+00> : vector<8x128xf32>
    %245 = tpu.matmul %243, %244, %cst_126 {dimension_numbers = #tpu.dot_dimension_numbers<[1], [0], [0], [1], [0, 0, 1, 1], [], []>} : vector<8x128xf32>, vector<128x128xf32>, vector<8x128xf32> -> vector<8x128xf32>
    %c0_127 = arith.constant 0 : index
    %c0_128 = arith.constant 0 : index
    %246 = vector.load %arg27[%c0_127, %c0_128] : memref<1x128xf32, #tpu.memory_space<vmem>>, vector<1x128xf32>
    %247 = vector.broadcast %246 : vector<1x128xf32> to vector<8x128xf32>
    %248 = arith.addf %245, %247 : vector<8x128xf32>
    %c0_129 = arith.constant 0 : index
    %c0_130 = arith.constant 0 : index
    %249 = vector.load %arg28[%c0_129, %c0_130] : memref<8x128xf32, #tpu.memory_space<vmem>>, vector<8x128xf32>
    tpu.vector_store %arg28[%c0_129, %c0_130], %248 {strides = array<i32>} : memref<8x128xf32, #tpu.memory_space<vmem>>, vector<8x128xf32>,
    return
  }
}

</mosaic_0001>

<llo_original>
// kernel: tpu_custom_call.1
$region0: #{tpu_custom_call.1}
  #allocation0 [shape = 'u32[]', space=smem, size = 0x4, offset = 0x4, fixed_abs, tag = 'smem constant byte address 0x4 - core index']
  #allocation1 [shape = 'u32[72,128]{1,0:T(1,128)}', space=vmem, size = 0x9000, scoped, tag = 'internal scratch']
  %s0 = inlined_call_operand.vmem [shape: f32[16,128], index: 0, kind: input, shape index: {}]
  %s1 = inlined_call_operand.hbm [shape: f32[128,128], index: 1, kind: input, shape index: {}]
  %s2 = inlined_call_operand.vmem [shape: f32[128,16], index: 2, kind: input, shape index: {}]
  %s3 = inlined_call_operand.vmem [shape: f32[128,16], index: 3, kind: input, shape index: {}]
  %s4 = inlined_call_operand.hbm [shape: f32[16,128], index: 4, kind: input, shape index: {}]
  %s5 = inlined_call_operand.hbm [shape: f32[8,16], index: 5, kind: input, shape index: {}]
  %s6 = inlined_call_operand.hbm [shape: f32[128,128], index: 6, kind: input, shape index: {}]
  %s7 = inlined_call_operand.hbm [shape: f32[1,128], index: 7, kind: input, shape index: {}]
  %s8 = inlined_call_operand.hbm [shape: f32[3,128,256], index: 8, kind: input, shape index: {}]
  %s9 = inlined_call_operand.hbm [shape: f32[3,128,256], index: 9, kind: input, shape index: {}]
  %s10 = inlined_call_operand.hbm [shape: f32[3,128,256], index: 10, kind: input, shape index: {}]
  %s11 = inlined_call_operand.vmem [shape: f32[3,1,256], index: 11, kind: input, shape index: {}]
  %s12 = inlined_call_operand.hbm [shape: f32[3,1,256], index: 12, kind: input, shape index: {}]
  %s13 = inlined_call_operand.hbm [shape: f32[3,1,256], index: 13, kind: input, shape index: {}]
  %s14 = inlined_call_operand.vmem [shape: f32[3,1,128], index: 14, kind: input, shape index: {}]
  %s15 = inlined_call_operand.hbm [shape: f32[3,1,128], index: 15, kind: input, shape index: {}]
  %s16 = inlined_call_operand.vmem [shape: f32[1,128,256], index: 16, kind: input, shape index: {}]
  %s17 = inlined_call_operand.hbm [shape: f32[1,128,256], index: 17, kind: input, shape index: {}]
  %s18 = inlined_call_operand.hbm [shape: f32[1,128,256], index: 18, kind: input, shape index: {}]
  %s19 = inlined_call_operand.vmem [shape: f32[1,1,256], index: 19, kind: input, shape index: {}]
  %s20 = inlined_call_operand.vmem [shape: f32[1,1,256], index: 20, kind: input, shape index: {}]
  %s21 = inlined_call_operand.vmem [shape: f32[1,1,256], index: 21, kind: input, shape index: {}]
  %s22 = inlined_call_operand.vmem [shape: f32[1,1,128], index: 22, kind: input, shape index: {}]
  %s23 = inlined_call_operand.vmem [shape: f32[1,1,128], index: 23, kind: input, shape index: {}]
  %s24 = inlined_call_operand.hbm [shape: f32[128,128], index: 24, kind: input, shape index: {}]
  %s25 = inlined_call_operand.vmem [shape: f32[1,128], index: 25, kind: input, shape index: {}]
  %s26 = inlined_call_operand.hbm [shape: f32[128,128], index: 26, kind: input, shape index: {}]
  %s27 = inlined_call_operand.vmem [shape: f32[1,128], index: 27, kind: input, shape index: {}]
  %s28 = inlined_call_operand.hbm [shape: f32[8,128], index: 28, kind: output, shape index: {}]
  %s29 = sld [smem:[#allocation0]]
  $region182: #{tpu_custom_call.1} parent=0
    _
  %s31 = ssub.s32 1, %s29
  %s32 = scalar_select 0, %s31, %s29
  $region1: #{tpu_custom_call.1} parent=0
    #allocation2 [shape = 'u8[65536]{0}', space=vmem, size = 0x10000, scoped, tag = 'input window, operand 1, single buffered']
    #allocation3 [shape = 's32[1]{0}', space=sflag, size = 0x4, scoped, tag = 'scoped memory for tpu_custom_call.1']
    #allocation4 [shape = 's32[1]{0}', space=sflag, size = 0x4, scoped, tag = 'scoped memory for tpu_custom_call.1']
    #allocation5 [shape = 'u8[8192]{0}', space=vmem, size = 0x2000, scoped, tag = 'input window, operand 4, single buffered']
    #allocation6 [shape = 's32[1]{0}', space=sflag, size = 0x4, scoped, tag = 'scoped memory for tpu_custom_call.1']
    #allocation7 [shape = 'u8[4096]{0}', space=vmem, size = 0x1000, scoped, tag = 'input window, operand 5, single buffered']
    #allocation8 [shape = 'u8[65536]{0}', space=vmem, size = 0x10000, scoped, tag = 'input window, operand 6, single buffered']
    #allocation9 [shape = 's32[1]{0}', space=sflag, size = 0x4, scoped, tag = 'scoped memory for tpu_custom_call.1']
    #allocation10 [shape = 'u8[512]{0}', space=vmem, size = 0x400, scoped, tag = 'input window, operand 7, single buffered']
    #allocation11 [shape = 'u8[393216]{0}', space=vmem, size = 0x60000, scoped, tag = 'input window, operand 8, single buffered']
    #allocation12 [shape = 's32[1]{0}', space=sflag, size = 0x4, scoped, tag = 'scoped memory for tpu_custom_call.1']
    #allocation13 [shape = 'u8[393216]{0}', space=vmem, size = 0x60000, scoped, tag = 'input window, operand 9, single buffered']
    #allocation14 [shape = 'u8[393216]{0}', space=vmem, size = 0x60000, scoped, tag = 'input window, operand 10, single buffered']
    #allocation15 [shape = 's32[1]{0}', space=sflag, size = 0x4, scoped, tag = 'scoped memory for tpu_custom_call.1']
    #allocation16 [shape = 'u8[3072]{0}', space=vmem, size = 0xc00, scoped, tag = 'input window, operand 12, single buffered']
    #allocation17 [shape = 'u8[3072]{0}', space=vmem, size = 0xc00, scoped, tag = 'input window, operand 13, single buffered']
    #allocation18 [shape = 's32[1]{0}', space=sflag, size = 0x4, scoped, tag = 'scoped memory for tpu_custom_call.1']
    #allocation19 [shape = 'u8[1536]{0}', space=vmem, size = 0x800, scoped, tag = 'input window, operand 15, single buffered']
    #allocation20 [shape = 'u8[131072]{0}', space=vmem, size = 0x20000, scoped, tag = 'input window, operand 17, single buffered']
    #allocation21 [shape = 's32[1]{0}', space=sflag, size = 0x4, scoped, tag = 'scoped memory for tpu_custom_call.1']
    #allocation22 [shape = 'u8[131072]{0}', space=vmem, size = 0x20000, scoped, tag = 'input window, operand 18, single buffered']
    #allocation23 [shape = 'u8[65536]{0}', space=vmem, size = 0x10000, scoped, tag = 'input window, operand 24, single buffered']
    #allocation24 [shape = 's32[1]{0}', space=sflag, size = 0x4, scoped, tag = 'scoped memory for tpu_custom_call.1']
    #allocation25 [shape = 'u8[65536]{0}', space=vmem, size = 0x10000, scoped, tag = 'input window, operand 26, single buffered']
    #allocation26 [shape = 'u8[4096]{0}', space=vmem, size = 0x1000, scoped, tag = 'output window, operand 0, single buffered']
    %33 = vsyncpa [#allocation3], 0
    %34 = vsyncpa [#allocation6], 0
    %35 = vsyncpa [#allocation9], 0
    %36 = vsyncpa [#allocation12], 0
    %37 = vsyncpa [#allocation15], 0
    %38 = vsyncpa [#allocation18], 0
    %39 = vsyncpa [#allocation21], 0
    %40 = vsyncpa [#allocation24], 0
    %41 = vsyncpa [#allocation4], 0
    // Predicated region
    $region2: #{tpu_custom_call.1} parent=1 // pred_check
      _
    $region3: #{tpu_custom_call.1} parent=1 // pred_check_branch
      %43 = sbr.rel (0) target = $region5
    $region4: #{tpu_custom_call.1} parent=1 // pred_region
      _
    $region5: #{tpu_custom_call.1} parent=1 // pred_fallthru
      _
    // Predicated region
    $region6: #{tpu_custom_call.1} parent=1 // pred_check
      _
    $region7: #{tpu_custom_call.1} parent=1 // pred_check_branch
      %45 = sbr.rel (0) target = $region9
    $region8: #{tpu_custom_call.1} parent=1 // pred_region
      %47 = vsyncadd [#allocation3], 0
      %s48 = sshll.u32 %s1, 4
      %s49 = int_to_ptr.hbm [resolvable:$true] %s48
      %s50 = sshll.u32 [#allocation2], 4
      %s51 = int_to_ptr.vmem [resolvable:$true] %s50
      %56 = dma.hbm_to_vmem [thread:$0]  %s49, 2048, %s51, [#allocation3], 128, 128, 8
    $region9: #{tpu_custom_call.1} parent=1 // pred_fallthru
      _
    // Predicated region
    $region10: #{tpu_custom_call.1} parent=1 // pred_check
      _
    $region11: #{tpu_custom_call.1} parent=1 // pred_check_branch
      %58 = sbr.rel (0) target = $region13
    $region12: #{tpu_custom_call.1} parent=1 // pred_region
      _
    $region13: #{tpu_custom_call.1} parent=1 // pred_fallthru
      _
    // Predicated region
    $region14: #{tpu_custom_call.1} parent=1 // pred_check
      _
    $region15: #{tpu_custom_call.1} parent=1 // pred_check_branch
      %60 = sbr.rel (0) target = $region17
    $region16: #{tpu_custom_call.1} parent=1 // pred_region
      _
    $region17: #{tpu_custom_call.1} parent=1 // pred_fallthru
      _
    // Predicated region
    $region18: #{tpu_custom_call.1} parent=1 // pred_check
      _
    $region19: #{tpu_custom_call.1} parent=1 // pred_check_branch
      %62 = sbr.rel (0) target = $region21
    $region20: #{tpu_custom_call.1} parent=1 // pred_region
      %64 = vsyncadd [#allocation6], 0
      %s65 = sshll.u32 %s4, 4
      %s66 = int_to_ptr.hbm [resolvable:$true] %s65
      %s67 = sshll.u32 [#allocation5], 4
      %s68 = int_to_ptr.vmem [resolvable:$true] %s67
      %73 = dma.hbm_to_vmem [thread:$0]  %s66, 256, %s68, [#allocation6], 128, 128, 8
    $region21: #{tpu_custom_call.1} parent=1 // pred_fallthru
      _
    // Predicated region
    $region22: #{tpu_custom_call.1} parent=1 // pred_check
      _
    $region23: #{tpu_custom_call.1} parent=1 // pred_check_branch
      %75 = sbr.rel (0) target = $region25
    $region24: #{tpu_custom_call.1} parent=1 // pred_region
      %77 = vsyncadd [#allocation6], 0
      %s79 = sshll.u32 %s5, 4
      %s80 = int_to_ptr.hbm [resolvable:$true] %s79
      %s81 = sshll.u32 [#allocation7], 4
      %s82 = int_to_ptr.vmem [resolvable:$true] %s81
      %84 = dma.hbm_to_vmem [thread:$0]  %s80, 128, %s82, [#allocation6]
    $region25: #{tpu_custom_call.1} parent=1 // pred_fallthru
      _
    // Predicated region
    $region26: #{tpu_custom_call.1} parent=1 // pred_check
      _
    $region27: #{tpu_custom_call.1} parent=1 // pred_check_branch
      %86 = sbr.rel (0) target = $region29
    $region28: #{tpu_custom_call.1} parent=1 // pred_region
      %88 = vsyncadd [#allocation9], 0
      %s89 = sshll.u32 %s6, 4
      %s90 = int_to_ptr.hbm [resolvable:$true] %s89
      %s91 = sshll.u32 [#allocation8], 4
      %s92 = int_to_ptr.vmem [resolvable:$true] %s91
      %97 = dma.hbm_to_vmem [thread:$0]  %s90, 2048, %s92, [#allocation9], 128, 128, 8
    $region29: #{tpu_custom_call.1} parent=1 // pred_fallthru
      _
    // Predicated region
    $region30: #{tpu_custom_call.1} parent=1 // pred_check
      _
    $region31: #{tpu_custom_call.1} parent=1 // pred_check_branch
      %99 = sbr.rel (0) target = $region33
    $region32: #{tpu_custom_call.1} parent=1 // pred_region
      %101 = vsyncadd [#allocation9], 0
      %s103 = sshll.u32 %s7, 4
      %s104 = int_to_ptr.hbm [resolvable:$true] %s103
      %s105 = sshll.u32 [#allocation10], 4
      %s106 = int_to_ptr.vmem [resolvable:$true] %s105
      %108 = dma.hbm_to_vmem [thread:$0]  %s104, 16, %s106, [#allocation9]
    $region33: #{tpu_custom_call.1} parent=1 // pred_fallthru
      _
    // Predicated region
    $region34: #{tpu_custom_call.1} parent=1 // pred_check
      _
    $region35: #{tpu_custom_call.1} parent=1 // pred_check_branch
      %110 = sbr.rel (0) target = $region37
    $region36: #{tpu_custom_call.1} parent=1 // pred_region
      %112 = vsyncadd [#allocation12], 0
      %s113 = sshll.u32 %s8, 4
      %s114 = int_to_ptr.hbm [resolvable:$true] %s113
      %s115 = sshll.u32 [#allocation11], 4
      %s116 = int_to_ptr.vmem [resolvable:$true] %s115
      %121 = dma.hbm_to_vmem [thread:$0]  %s114, 12288, %s116, [#allocation12], 256, 256, 16
    $region37: #{tpu_custom_call.1} parent=1 // pred_fallthru
      _
    // Predicated region
    $region38: #{tpu_custom_call.1} parent=1 // pred_check
      _
    $region39: #{tpu_custom_call.1} parent=1 // pred_check_branch
      %123 = sbr.rel (0) target = $region41
    $region40: #{tpu_custom_call.1} parent=1 // pred_region
      %125 = vsyncadd [#allocation12], 0
      %s126 = sshll.u32 %s9, 4
      %s127 = int_to_ptr.hbm [resolvable:$true] %s126
      %s128 = sshll.u32 [#allocation13], 4
      %s129 = int_to_ptr.vmem [resolvable:$true] %s128
      %134 = dma.hbm_to_vmem [thread:$0]  %s127, 12288, %s129, [#allocation12], 256, 256, 16
    $region41: #{tpu_custom_call.1} parent=1 // pred_fallthru
      _
    // Predicated region
    $region42: #{tpu_custom_call.1} parent=1 // pred_check
      _
    $region43: #{tpu_custom_call.1} parent=1 // pred_check_branch
      %136 = sbr.rel (0) target = $region45
    $region44: #{tpu_custom_call.1} parent=1 // pred_region
      %138 = vsyncadd [#allocation15], 0
      %s139 = sshll.u32 %s10, 4
      %s140 = int_to_ptr.hbm [resolvable:$true] %s139
      %s141 = sshll.u32 [#allocation14], 4
      %s142 = int_to_ptr.vmem [resolvable:$true] %s141
      %147 = dma.hbm_to_vmem [thread:$0]  %s140, 12288, %s142, [#allocation15], 256, 256, 16
    $region45: #{tpu_custom_call.1} parent=1 // pred_fallthru
      _
    // Predicated region
    $region46: #{tpu_custom_call.1} parent=1 // pred_check
      _
    $region47: #{tpu_custom_call.1} parent=1 // pred_check_branch
      %149 = sbr.rel (0) target = $region49
    $region48: #{tpu_custom_call.1} parent=1 // pred_region
      _
    $region49: #{tpu_custom_call.1} parent=1 // pred_fallthru
      _
    // Predicated region
    $region50: #{tpu_custom_call.1} parent=1 // pred_check
      _
    $region51: #{tpu_custom_call.1} parent=1 // pred_check_branch
      %151 = sbr.rel (0) target = $region53
    $region52: #{tpu_custom_call.1} parent=1 // pred_region
      %153 = vsyncadd [#allocation15], 0
      %s154 = sshll.u32 %s12, 4
      %s155 = int_to_ptr.hbm [resolvable:$true] %s154
      %s156 = sshll.u32 [#allocation16], 4
      %s157 = int_to_ptr.vmem [resolvable:$true] %s156
      %162 = dma.hbm_to_vmem [thread:$0]  %s155, 96, %s157, [#allocation15], 32, 32, 2
    $region53: #{tpu_custom_call.1} parent=1 // pred_fallthru
      _
    // Predicated region
    $region54: #{tpu_custom_call.1} parent=1 // pred_check
      _
    $region55: #{tpu_custom_call.1} parent=1 // pred_check_branch
      %164 = sbr.rel (0) target = $region57
    $region56: #{tpu_custom_call.1} parent=1 // pred_region
      %166 = vsyncadd [#allocation18], 0
      %s167 = sshll.u32 %s13, 4
      %s168 = int_to_ptr.hbm [resolvable:$true] %s167
      %s169 = sshll.u32 [#allocation17], 4
      %s170 = int_to_ptr.vmem [resolvable:$true] %s169
      %175 = dma.hbm_to_vmem [thread:$0]  %s168, 96, %s170, [#allocation18], 32, 32, 2
    $region57: #{tpu_custom_call.1} parent=1 // pred_fallthru
      _
    // Predicated region
    $region58: #{tpu_custom_call.1} parent=1 // pred_check
      _
    $region59: #{tpu_custom_call.1} parent=1 // pred_check_branch
      %177 = sbr.rel (0) target = $region61
    $region60: #{tpu_custom_call.1} parent=1 // pred_region
      _
    $region61: #{tpu_custom_call.1} parent=1 // pred_fallthru
      _
    // Predicated region
    $region62: #{tpu_custom_call.1} parent=1 // pred_check
      _
    $region63: #{tpu_custom_call.1} parent=1 // pred_check_branch
      %179 = sbr.rel (0) target = $region65
    $region64: #{tpu_custom_call.1} parent=1 // pred_region
      %181 = vsyncadd [#allocation18], 0
      %s182 = sshll.u32 %s15, 4
      %s183 = int_to_ptr.hbm [resolvable:$true] %s182
      %s184 = sshll.u32 [#allocation19], 4
      %s185 = int_to_ptr.vmem [resolvable:$true] %s184
      %190 = dma.hbm_to_vmem [thread:$0]  %s183, 48, %s185, [#allocation18], 16, 16, 1
    $region65: #{tpu_custom_call.1} parent=1 // pred_fallthru
      _
    // Predicated region
    $region66: #{tpu_custom_call.1} parent=1 // pred_check
      _
    $region67: #{tpu_custom_call.1} parent=1 // pred_check_branch
      %192 = sbr.rel (0) target = $region69
    $region68: #{tpu_custom_call.1} parent=1 // pred_region
      _
    $region69: #{tpu_custom_call.1} parent=1 // pred_fallthru
      _
    // Predicated region
    $region70: #{tpu_custom_call.1} parent=1 // pred_check
      _
    $region71: #{tpu_custom_call.1} parent=1 // pred_check_branch
      %194 = sbr.rel (0) target = $region73
    $region72: #{tpu_custom_call.1} parent=1 // pred_region
      %196 = vsyncadd [#allocation21], 0
      %s197 = sshll.u32 %s17, 4
      %s198 = int_to_ptr.hbm [resolvable:$true] %s197
      %s199 = sshll.u32 [#allocation20], 4
      %s200 = int_to_ptr.vmem [resolvable:$true] %s199
      %205 = dma.hbm_to_vmem [thread:$0]  %s198, 4096, %s200, [#allocation21], 256, 256, 16
    $region73: #{tpu_custom_call.1} parent=1 // pred_fallthru
      _
    // Predicated region
    $region74: #{tpu_custom_call.1} parent=1 // pred_check
      _
    $region75: #{tpu_custom_call.1} parent=1 // pred_check_branch
      %207 = sbr.rel (0) target = $region77
    $region76: #{tpu_custom_call.1} parent=1 // pred_region
      %209 = vsyncadd [#allocation21], 0
      %s210 = sshll.u32 %s18, 4
      %s211 = int_to_ptr.hbm [resolvable:$true] %s210
      %s212 = sshll.u32 [#allocation22], 4
      %s213 = int_to_ptr.vmem [resolvable:$true] %s212
      %218 = dma.hbm_to_vmem [thread:$0]  %s211, 4096, %s213, [#allocation21], 256, 256, 16
    $region77: #{tpu_custom_call.1} parent=1 // pred_fallthru
      _
    // Predicated region
    $region78: #{tpu_custom_call.1} parent=1 // pred_check
      _
    $region79: #{tpu_custom_call.1} parent=1 // pred_check_branch
      %220 = sbr.rel (0) target = $region81
    $region80: #{tpu_custom_call.1} parent=1 // pred_region
      _
    $region81: #{tpu_custom_call.1} parent=1 // pred_fallthru
      _
    // Predicated region
    $region82: #{tpu_custom_call.1} parent=1 // pred_check
      _
    $region83: #{tpu_custom_call.1} parent=1 // pred_check_branch
      %222 = sbr.rel (0) target = $region85
    $region84: #{tpu_custom_call.1} parent=1 // pred_region
      _
    $region85: #{tpu_custom_call.1} parent=1 // pred_fallthru
      _
    // Predicated region
    $region86: #{tpu_custom_call.1} parent=1 // pred_check
      _
    $region87: #{tpu_custom_call.1} parent=1 // pred_check_branch
      %224 = sbr.rel (0) target = $region89
    $region88: #{tpu_custom_call.1} parent=1 // pred_region
      _
    $region89: #{tpu_custom_call.1} parent=1 // pred_fallthru
      _
    // Predicated region
    $region90: #{tpu_custom_call.1} parent=1 // pred_check
      _
    $region91: #{tpu_custom_call.1} parent=1 // pred_check_branch
      %226 = sbr.rel (0) target = $region93
    $region92: #{tpu_custom_call.1} parent=1 // pred_region
      _
    $region93: #{tpu_custom_call.1} parent=1 // pred_fallthru
      _
    // Predicated region
    $region94: #{tpu_custom_call.1} parent=1 // pred_check
      _
    $region95: #{tpu_custom_call.1} parent=1 // pred_check_branch
      %228 = sbr.rel (0) target = $region97
    $region96: #{tpu_custom_call.1} parent=1 // pred_region
      _
    $region97: #{tpu_custom_call.1} parent=1 // pred_fallthru
      _
    // Predicated region
    $region98: #{tpu_custom_call.1} parent=1 // pred_check
      _
    $region99: #{tpu_custom_call.1} parent=1 // pred_check_branch
      %230 = sbr.rel (0) target = $region101
    $region100: #{tpu_custom_call.1} parent=1 // pred_region
      %232 = vsyncadd [#allocation24], 0
      %s233 = sshll.u32 %s24, 4
      %s234 = int_to_ptr.hbm [resolvable:$true] %s233
      %s235 = sshll.u32 [#allocation23], 4
      %s236 = int_to_ptr.vmem [resolvable:$true] %s235
      %241 = dma.hbm_to_vmem [thread:$0]  %s234, 2048, %s236, [#allocation24], 128, 128, 8
    $region101: #{tpu_custom_call.1} parent=1 // pred_fallthru
      _
    // Predicated region
    $region102: #{tpu_custom_call.1} parent=1 // pred_check
      _
    $region103: #{tpu_custom_call.1} parent=1 // pred_check_branch
      %243 = sbr.rel (0) target = $region105
    $region104: #{tpu_custom_call.1} parent=1 // pred_region
      _
    $region105: #{tpu_custom_call.1} parent=1 // pred_fallthru
      _
    // Predicated region
    $region106: #{tpu_custom_call.1} parent=1 // pred_check
      _
    $region107: #{tpu_custom_call.1} parent=1 // pred_check_branch
      %245 = sbr.rel (0) target = $region109
    $region108: #{tpu_custom_call.1} parent=1 // pred_region
      %247 = vsyncadd [#allocation24], 0
      %s248 = sshll.u32 %s26, 4
      %s249 = int_to_ptr.hbm [resolvable:$true] %s248
      %s250 = sshll.u32 [#allocation25], 4
      %s251 = int_to_ptr.vmem [resolvable:$true] %s250
      %256 = dma.hbm_to_vmem [thread:$0]  %s249, 2048, %s251, [#allocation24], 128, 128, 8
    $region109: #{tpu_custom_call.1} parent=1 // pred_fallthru
      _
    // Predicated region
    $region110: #{tpu_custom_call.1} parent=1 // pred_check
      _
    $region111: #{tpu_custom_call.1} parent=1 // pred_check_branch
      %258 = sbr.rel (0) target = $region113
    $region112: #{tpu_custom_call.1} parent=1 // pred_region
      _
    $region113: #{tpu_custom_call.1} parent=1 // pred_fallthru
      _
    // Predicated region
    $region114: #{tpu_custom_call.1} parent=1 // pred_check
      _
    $region115: #{tpu_custom_call.1} parent=1 // pred_check_branch
      %260 = sbr.rel (0) target = $region117
    $region116: #{tpu_custom_call.1} parent=1 // pred_region
      %262 = dma.done [#allocation3], 2048
    $region117: #{tpu_custom_call.1} parent=1 // pred_fallthru
      _
    // Predicated region
    $region118: #{tpu_custom_call.1} parent=1 // pred_check
      _
    $region119: #{tpu_custom_call.1} parent=1 // pred_check_branch
      %264 = sbr.rel (0) target = $region121
    $region120: #{tpu_custom_call.1} parent=1 // pred_region
      %266 = dma.done [#allocation6], 256
    $region121: #{tpu_custom_call.1} parent=1 // pred_fallthru
      _
    // Predicated region
    $region122: #{tpu_custom_call.1} parent=1 // pred_check
      _
    $region123: #{tpu_custom_call.1} parent=1 // pred_check_branch
      %268 = sbr.rel (0) target = $region125
    $region124: #{tpu_custom_call.1} parent=1 // pred_region
      %270 = dma.done [#allocation6], 128
    $region125: #{tpu_custom_call.1} parent=1 // pred_fallthru
      _
    // Predicated region
    $region126: #{tpu_custom_call.1} parent=1 // pred_check
      _
    $region127: #{tpu_custom_call.1} parent=1 // pred_check_branch
      %272 = sbr.rel (0) target = $region129
    $region128: #{tpu_custom_call.1} parent=1 // pred_region
      %274 = dma.done [#allocation9], 2048
    $region129: #{tpu_custom_call.1} parent=1 // pred_fallthru
      _
    // Predicated region
    $region130: #{tpu_custom_call.1} parent=1 // pred_check
      _
    $region131: #{tpu_custom_call.1} parent=1 // pred_check_branch
      %276 = sbr.rel (0) target = $region133
    $region132: #{tpu_custom_call.1} parent=1 // pred_region
      %278 = dma.done [#allocation9], 16
    $region133: #{tpu_custom_call.1} parent=1 // pred_fallthru
      _
    // Predicated region
    $region134: #{tpu_custom_call.1} parent=1 // pred_check
      _
    $region135: #{tpu_custom_call.1} parent=1 // pred_check_branch
      %280 = sbr.rel (0) target = $region137
    $region136: #{tpu_custom_call.1} parent=1 // pred_region
      %282 = dma.done [#allocation12], 12288
    $region137: #{tpu_custom_call.1} parent=1 // pred_fallthru
      _
    // Predicated region
    $region138: #{tpu_custom_call.1} parent=1 // pred_check
      _
    $region139: #{tpu_custom_call.1} parent=1 // pred_check_branch
      %284 = sbr.rel (0) target = $region141
    $region140: #{tpu_custom_call.1} parent=1 // pred_region
      %286 = dma.done [#allocation12], 12288
    $region141: #{tpu_custom_call.1} parent=1 // pred_fallthru
      _
    // Predicated region
    $region142: #{tpu_custom_call.1} parent=1 // pred_check
      _
    $region143: #{tpu_custom_call.1} parent=1 // pred_check_branch
      %288 = sbr.rel (0) target = $region145
    $region144: #{tpu_custom_call.1} parent=1 // pred_region
      %290 = dma.done [#allocation15], 12288
    $region145: #{tpu_custom_call.1} parent=1 // pred_fallthru
      _
    // Predicated region
    $region146: #{tpu_custom_call.1} parent=1 // pred_check
      _
    $region147: #{tpu_custom_call.1} parent=1 // pred_check_branch
      %292 = sbr.rel (0) target = $region149
    $region148: #{tpu_custom_call.1} parent=1 // pred_region
      %294 = dma.done [#allocation15], 96
    $region149: #{tpu_custom_call.1} parent=1 // pred_fallthru
      _
    // Predicated region
    $region150: #{tpu_custom_call.1} parent=1 // pred_check
      _
    $region151: #{tpu_custom_call.1} parent=1 // pred_check_branch
      %296 = sbr.rel (0) target = $region153
    $region152: #{tpu_custom_call.1} parent=1 // pred_region
      %298 = dma.done [#allocation18], 96
    $region153: #{tpu_custom_call.1} parent=1 // pred_fallthru
      _
    // Predicated region
    $region154: #{tpu_custom_call.1} parent=1 // pred_check
      _
    $region155: #{tpu_custom_call.1} parent=1 // pred_check_branch
      %300 = sbr.rel (0) target = $region157
    $region156: #{tpu_custom_call.1} parent=1 // pred_region
      %302 = dma.done [#allocation18], 48
    $region157: #{tpu_custom_call.1} parent=1 // pred_fallthru
      _
    // Predicated region
    $region158: #{tpu_custom_call.1} parent=1 // pred_check
      _
    $region159: #{tpu_custom_call.1} parent=1 // pred_check_branch
      %304 = sbr.rel (0) target = $region161
    $region160: #{tpu_custom_call.1} parent=1 // pred_region
      %306 = dma.done [#allocation21], 4096
    $region161: #{tpu_custom_call.1} parent=1 // pred_fallthru
      _
    // Predicated region
    $region162: #{tpu_custom_call.1} parent=1 // pred_check
      _
    $region163: #{tpu_custom_call.1} parent=1 // pred_check_branch
      %308 = sbr.rel (0) target = $region165
    $region164: #{tpu_custom_call.1} parent=1 // pred_region
      %310 = dma.done [#allocation21], 4096
    $region165: #{tpu_custom_call.1} parent=1 // pred_fallthru
      _
    // Predicated region
    $region166: #{tpu_custom_call.1} parent=1 // pred_check
      _
    $region167: #{tpu_custom_call.1} parent=1 // pred_check_branch
      %312 = sbr.rel (0) target = $region169
    $region168: #{tpu_custom_call.1} parent=1 // pred_region
      %314 = dma.done [#allocation24], 2048
    $region169: #{tpu_custom_call.1} parent=1 // pred_fallthru
      _
    // Predicated region
    $region170: #{tpu_custom_call.1} parent=1 // pred_check
      _
    $region171: #{tpu_custom_call.1} parent=1 // pred_check_branch
      %316 = sbr.rel (0) target = $region173
    $region172: #{tpu_custom_call.1} parent=1 // pred_region
      %318 = dma.done [#allocation24], 2048
    $region173: #{tpu_custom_call.1} parent=1 // pred_fallthru
      _
    %v319 = vld [vmem:[%s3] sm:$0xff]
    %v320 = vld [vmem:[%s3 + $0x8] sm:$0xff]
    %v321 = vld [vmem:[%s3 + $0x10] sm:$0xff]
    %v322 = vld [vmem:[%s3 + $0x18] sm:$0xff]
    %v323 = vld [vmem:[%s3 + $0x20] sm:$0xff]
    %v324 = vld [vmem:[%s3 + $0x28] sm:$0xff]
    %v325 = vld [vmem:[%s3 + $0x30] sm:$0xff]
    %v326 = vld [vmem:[%s3 + $0x38] sm:$0xff]
    %v327 = vld [vmem:[%s3 + $0x40] sm:$0xff]
    %v328 = vld [vmem:[%s3 + $0x48] sm:$0xff]
    %v329 = vld [vmem:[%s3 + $0x50] sm:$0xff]
    %v330 = vld [vmem:[%s3 + $0x58] sm:$0xff]
    %v331 = vld [vmem:[%s3 + $0x60] sm:$0xff]
    %v332 = vld [vmem:[%s3 + $0x68] sm:$0xff]
    %v333 = vld [vmem:[%s3 + $0x70] sm:$0xff]
    %v334 = vld [vmem:[%s3 + $0x78] sm:$0xff]
    %v335 = vld [vmem:[%s2] sm:$0xff]
    %v336 = vld [vmem:[%s2 + $0x8] sm:$0xff]
    %v337 = vld [vmem:[%s2 + $0x10] sm:$0xff]
    %v338 = vld [vmem:[%s2 + $0x18] sm:$0xff]
    %v339 = vld [vmem:[%s2 + $0x20] sm:$0xff]
    %v340 = vld [vmem:[%s2 + $0x28] sm:$0xff]
    %v341 = vld [vmem:[%s2 + $0x30] sm:$0xff]
    %v342 = vld [vmem:[%s2 + $0x38] sm:$0xff]
    %v343 = vld [vmem:[%s2 + $0x40] sm:$0xff]
    %v344 = vld [vmem:[%s2 + $0x48] sm:$0xff]
    %v345 = vld [vmem:[%s2 + $0x50] sm:$0xff]
    %v346 = vld [vmem:[%s2 + $0x58] sm:$0xff]
    %v347 = vld [vmem:[%s2 + $0x60] sm:$0xff]
    %v348 = vld [vmem:[%s2 + $0x68] sm:$0xff]
    %v349 = vld [vmem:[%s2 + $0x70] sm:$0xff]
    %v350 = vld [vmem:[%s2 + $0x78] sm:$0xff]
    %v351 = vld [vmem:[#allocation2] sm:$0xff]
    %v352 = vld [vmem:[#allocation2 + $0x8] sm:$0xff]
    %v353 = vld [vmem:[#allocation2 + $0x10] sm:$0xff]
    %v354 = vld [vmem:[#allocation2 + $0x18] sm:$0xff]
    %v355 = vld [vmem:[#allocation2 + $0x20] sm:$0xff]
    %v356 = vld [vmem:[#allocation2 + $0x28] sm:$0xff]
    %v357 = vld [vmem:[#allocation2 + $0x30] sm:$0xff]
    %v358 = vld [vmem:[#allocation2 + $0x38] sm:$0xff]
    %v359 = vld [vmem:[#allocation2 + $0x40] sm:$0xff]
    %v360 = vld [vmem:[#allocation2 + $0x48] sm:$0xff]
    %v361 = vld [vmem:[#allocation2 + $0x50] sm:$0xff]
    %v362 = vld [vmem:[#allocation2 + $0x58] sm:$0xff]
    %v363 = vld [vmem:[#allocation2 + $0x60] sm:$0xff]
    %v364 = vld [vmem:[#allocation2 + $0x68] sm:$0xff]
    %v365 = vld [vmem:[#allocation2 + $0x70] sm:$0xff]
    %v366 = vld [vmem:[#allocation2 + $0x78] sm:$0xff]
    %v367 = vld [vmem:[#allocation5] sm:$0xff]
    %v368 = vld [vmem:[#allocation5 + $0x8] sm:$0xff]
    %v369 = vld [vmem:[%s0] sm:$0xff]
    %v370 = vld [vmem:[%s0 + $0x8] sm:$0xff]
    %v371 = vld [vmem:[#allocation8] sm:$0xff]
    %v372 = vld [vmem:[#allocation8 + $0x8] sm:$0xff]
    %v373 = vld [vmem:[#allocation8 + $0x10] sm:$0xff]
    %v374 = vld [vmem:[#allocation8 + $0x18] sm:$0xff]
    %v375 = vld [vmem:[#allocation8 + $0x20] sm:$0xff]
    %v376 = vld [vmem:[#allocation8 + $0x28] sm:$0xff]
    %v377 = vld [vmem:[#allocation8 + $0x30] sm:$0xff]
    %v378 = vld [vmem:[#allocation8 + $0x38] sm:$0xff]
    %v379 = vld [vmem:[#allocation8 + $0x40] sm:$0xff]
    %v380 = vld [vmem:[#allocation8 + $0x48] sm:$0xff]
    %v381 = vld [vmem:[#allocation8 + $0x50] sm:$0xff]
    %v382 = vld [vmem:[#allocation8 + $0x58] sm:$0xff]
    %v383 = vld [vmem:[#allocation8 + $0x60] sm:$0xff]
    %v384 = vld [vmem:[#allocation8 + $0x68] sm:$0xff]
    %v385 = vld [vmem:[#allocation8 + $0x70] sm:$0xff]
    %v386 = vld [vmem:[#allocation8 + $0x78] sm:$0xff]
    %v387 = vld [vmem:[#allocation10] sm:$0x1]
    %v389 = vperm.slane %v387, 0
    %391 = vmatpush.msra.mxu0 %v386
    %392 = vmatpush.msra.mxu0 %v385
    %393 = vmatpush.msra.mxu0 %v384
    %394 = vmatpush.msra.mxu0 %v383
    %395 = vmatpush.msra.mxu0 %v382
    %396 = vmatpush.msra.mxu0 %v381
    %397 = vmatpush.msra.mxu0 %v380
    %398 = vmatpush.msra.mxu0 %v379
    %399 = vmatpush.msra.mxu0 %v378
    %400 = vmatpush.msra.mxu0 %v377
    %401 = vmatpush.msra.mxu0 %v376
    %402 = vmatpush.msra.mxu0 %v375
    %403 = vmatpush.msra.mxu0 %v374
    %404 = vmatpush.msra.mxu0 %v373
    %405 = vmatpush.msra.mxu0 %v372
    %406 = vmatpush.msra.mxu0 %v371
    %407 = vmatmul.f32.gmra.mxu0 %v369
    %v408 = vpop.f32.mrf.mxu0
    %v409 = vadd.f32 %v389, %v408
    %410 = vmatmul.f32.gmra.mxu0 %v370
    %v411 = vpop.f32.mrf.mxu0
    %v412 = vadd.f32 %v389, %v411
    %413 = vdwg.mxu0
    %s414 = scalar_lea.vmem [#allocation11], 512
    %v415 = vld [vmem:[%s414] sm:$0xff]
    %v416 = vld [vmem:[%s414 + $0x8] sm:$0xff]
    %v417 = vld [vmem:[%s414 + $0x10] sm:$0xff]
    %v418 = vld [vmem:[%s414 + $0x18] sm:$0xff]
    %v419 = vld [vmem:[%s414 + $0x20] sm:$0xff]
    %v420 = vld [vmem:[%s414 + $0x28] sm:$0xff]
    %v421 = vld [vmem:[%s414 + $0x30] sm:$0xff]
    %v422 = vld [vmem:[%s414 + $0x38] sm:$0xff]
    %v423 = vld [vmem:[%s414 + $0x40] sm:$0xff]
    %v424 = vld [vmem:[%s414 + $0x48] sm:$0xff]
    %v425 = vld [vmem:[%s414 + $0x50] sm:$0xff]
    %v426 = vld [vmem:[%s414 + $0x58] sm:$0xff]
    %v427 = vld [vmem:[%s414 + $0x60] sm:$0xff]
    %v428 = vld [vmem:[%s414 + $0x68] sm:$0xff]
    %v429 = vld [vmem:[%s414 + $0x70] sm:$0xff]
    %v430 = vld [vmem:[%s414 + $0x78] sm:$0xff]
    %v431 = vld [vmem:[%s414 + $0x80] sm:$0xff]
    %v432 = vld [vmem:[%s414 + $0x88] sm:$0xff]
    %v433 = vld [vmem:[%s414 + $0x90] sm:$0xff]
    %v434 = vld [vmem:[%s414 + $0x98] sm:$0xff]
    %v435 = vld [vmem:[%s414 + $0xa0] sm:$0xff]
    %v436 = vld [vmem:[%s414 + $0xa8] sm:$0xff]
    %v437 = vld [vmem:[%s414 + $0xb0] sm:$0xff]
    %v438 = vld [vmem:[%s414 + $0xb8] sm:$0xff]
    %v439 = vld [vmem:[%s414 + $0xc0] sm:$0xff]
    %v440 = vld [vmem:[%s414 + $0xc8] sm:$0xff]
    %v441 = vld [vmem:[%s414 + $0xd0] sm:$0xff]
    %v442 = vld [vmem:[%s414 + $0xd8] sm:$0xff]
    %v443 = vld [vmem:[%s414 + $0xe0] sm:$0xff]
    %v444 = vld [vmem:[%s414 + $0xe8] sm:$0xff]
    %v445 = vld [vmem:[%s414 + $0xf0] sm:$0xff]
    %v446 = vld [vmem:[%s414 + $0xf8] sm:$0xff]
    %s447 = scalar_lea.vmem [#allocation13], 512
    %v448 = vld [vmem:[%s447] sm:$0xff]
    %v449 = vld [vmem:[%s447 + $0x8] sm:$0xff]
    %v450 = vld [vmem:[%s447 + $0x10] sm:$0xff]
    %v451 = vld [vmem:[%s447 + $0x18] sm:$0xff]
    %v452 = vld [vmem:[%s447 + $0x20] sm:$0xff]
    %v453 = vld [vmem:[%s447 + $0x28] sm:$0xff]
    %v454 = vld [vmem:[%s447 + $0x30] sm:$0xff]
    %v455 = vld [vmem:[%s447 + $0x38] sm:$0xff]
    %v456 = vld [vmem:[%s447 + $0x40] sm:$0xff]
    %v457 = vld [vmem:[%s447 + $0x48] sm:$0xff]
    %v458 = vld [vmem:[%s447 + $0x50] sm:$0xff]
    %v459 = vld [vmem:[%s447 + $0x58] sm:$0xff]
    %v460 = vld [vmem:[%s447 + $0x60] sm:$0xff]
    %v461 = vld [vmem:[%s447 + $0x68] sm:$0xff]
    %v462 = vld [vmem:[%s447 + $0x70] sm:$0xff]
    %v463 = vld [vmem:[%s447 + $0x78] sm:$0xff]
    %v464 = vld [vmem:[%s447 + $0x80] sm:$0xff]
    %v465 = vld [vmem:[%s447 + $0x88] sm:$0xff]
    %v466 = vld [vmem:[%s447 + $0x90] sm:$0xff]
    %v467 = vld [vmem:[%s447 + $0x98] sm:$0xff]
    %v468 = vld [vmem:[%s447 + $0xa0] sm:$0xff]
    %v469 = vld [vmem:[%s447 + $0xa8] sm:$0xff]
    %v470 = vld [vmem:[%s447 + $0xb0] sm:$0xff]
    %v471 = vld [vmem:[%s447 + $0xb8] sm:$0xff]
    %v472 = vld [vmem:[%s447 + $0xc0] sm:$0xff]
    %v473 = vld [vmem:[%s447 + $0xc8] sm:$0xff]
    %v474 = vld [vmem:[%s447 + $0xd0] sm:$0xff]
    %v475 = vld [vmem:[%s447 + $0xd8] sm:$0xff]
    %v476 = vld [vmem:[%s447 + $0xe0] sm:$0xff]
    %v477 = vld [vmem:[%s447 + $0xe8] sm:$0xff]
    %v478 = vld [vmem:[%s447 + $0xf0] sm:$0xff]
    %v479 = vld [vmem:[%s447 + $0xf8] sm:$0xff]
    %s480 = scalar_lea.vmem [#allocation14], 512
    %v481 = vld [vmem:[%s480] sm:$0xff]
    %v482 = vld [vmem:[%s480 + $0x8] sm:$0xff]
    %v483 = vld [vmem:[%s480 + $0x10] sm:$0xff]
    %v484 = vld [vmem:[%s480 + $0x18] sm:$0xff]
    %v485 = vld [vmem:[%s480 + $0x20] sm:$0xff]
    %v486 = vld [vmem:[%s480 + $0x28] sm:$0xff]
    %v487 = vld [vmem:[%s480 + $0x30] sm:$0xff]
    %v488 = vld [vmem:[%s480 + $0x38] sm:$0xff]
    %v489 = vld [vmem:[%s480 + $0x40] sm:$0xff]
    %v490 = vld [vmem:[%s480 + $0x48] sm:$0xff]
    %v491 = vld [vmem:[%s480 + $0x50] sm:$0xff]
    %v492 = vld [vmem:[%s480 + $0x58] sm:$0xff]
    %v493 = vld [vmem:[%s480 + $0x60] sm:$0xff]
    %v494 = vld [vmem:[%s480 + $0x68] sm:$0xff]
    %v495 = vld [vmem:[%s480 + $0x70] sm:$0xff]
    %v496 = vld [vmem:[%s480 + $0x78] sm:$0xff]
    %v497 = vld [vmem:[%s480 + $0x80] sm:$0xff]
    %v498 = vld [vmem:[%s480 + $0x88] sm:$0xff]
    %v499 = vld [vmem:[%s480 + $0x90] sm:$0xff]
    %v500 = vld [vmem:[%s480 + $0x98] sm:$0xff]
    %v501 = vld [vmem:[%s480 + $0xa0] sm:$0xff]
    %v502 = vld [vmem:[%s480 + $0xa8] sm:$0xff]
    %v503 = vld [vmem:[%s480 + $0xb0] sm:$0xff]
    %v504 = vld [vmem:[%s480 + $0xb8] sm:$0xff]
    %v505 = vld [vmem:[%s480 + $0xc0] sm:$0xff]
    %v506 = vld [vmem:[%s480 + $0xc8] sm:$0xff]
    %v507 = vld [vmem:[%s480 + $0xd0] sm:$0xff]
    %v508 = vld [vmem:[%s480 + $0xd8] sm:$0xff]
    %v509 = vld [vmem:[%s480 + $0xe0] sm:$0xff]
    %v510 = vld [vmem:[%s480 + $0xe8] sm:$0xff]
    %v511 = vld [vmem:[%s480 + $0xf0] sm:$0xff]
    %v512 = vld [vmem:[%s480 + $0xf8] sm:$0xff]
    %s513 = scalar_lea.vmem %s11, 4
    %v514 = vld [vmem:[%s513] sm:$0x3]
    %s515 = scalar_lea.vmem [#allocation16], 4
    %v516 = vld [vmem:[%s515] sm:$0x3]
    %s517 = scalar_lea.vmem [#allocation17], 4
    %v518 = vld [vmem:[%s517] sm:$0x3]
    %s519 = scalar_lea.vmem %s14, 2
    %v520 = vld [vmem:[%s519] sm:$0x1]
    %s521 = scalar_lea.vmem [#allocation19], 2
    %v522 = vld [vmem:[%s521] sm:$0x1]
    %523 = vmatpush.msra.mxu0 %v445
    %524 = vmatpush.msra.mxu0 %v443
    %525 = vmatpush.msra.mxu0 %v441
    %526 = vmatpush.msra.mxu0 %v439
    %527 = vmatpush.msra.mxu0 %v437
    %528 = vmatpush.msra.mxu0 %v435
    %529 = vmatpush.msra.mxu0 %v433
    %530 = vmatpush.msra.mxu0 %v431
    %531 = vmatpush.msra.mxu0 %v429
    %532 = vmatpush.msra.mxu0 %v427
    %533 = vmatpush.msra.mxu0 %v425
    %534 = vmatpush.msra.mxu0 %v423
    %535 = vmatpush.msra.mxu0 %v421
    %536 = vmatpush.msra.mxu0 %v419
    %537 = vmatpush.msra.mxu0 %v417
    %538 = vmatpush.msra.mxu0 %v415
    %539 = vmatmul.f32.gmra.mxu0 %v409
    %v540 = vpop.f32.mrf.mxu0
    %v541 = vadd.f32 0.0, %v540
    %542 = vmatmul.f32.gmra.mxu0 %v412
    %v543 = vpop.f32.mrf.mxu0
    %v544 = vadd.f32 0.0, %v543
    %545 = vdwg.mxu0
    %546 = vmatpush.msra.mxu0 %v446
    %547 = vmatpush.msra.mxu0 %v444
    %548 = vmatpush.msra.mxu0 %v442
    %549 = vmatpush.msra.mxu0 %v440
    %550 = vmatpush.msra.mxu0 %v438
    %551 = vmatpush.msra.mxu0 %v436
    %552 = vmatpush.msra.mxu0 %v434
    %553 = vmatpush.msra.mxu0 %v432
    %554 = vmatpush.msra.mxu0 %v430
    %555 = vmatpush.msra.mxu0 %v428
    %556 = vmatpush.msra.mxu0 %v426
    %557 = vmatpush.msra.mxu0 %v424
    %558 = vmatpush.msra.mxu0 %v422
    %559 = vmatpush.msra.mxu0 %v420
    %560 = vmatpush.msra.mxu0 %v418
    %561 = vmatpush.msra.mxu0 %v416
    %562 = vmatmul.f32.gmra.mxu0 %v409
    %v563 = vpop.f32.mrf.mxu0
    %v564 = vadd.f32 0.0, %v563
    %565 = vmatmul.f32.gmra.mxu0 %v412
    %v566 = vpop.f32.mrf.mxu0
    %v567 = vadd.f32 0.0, %v566
    %568 = vdwg.mxu0
    %569 = vmatpush.msra.mxu0 %v478
    %570 = vmatpush.msra.mxu0 %v476
    %571 = vmatpush.msra.mxu0 %v474
    %572 = vmatpush.msra.mxu0 %v472
    %573 = vmatpush.msra.mxu0 %v470
    %574 = vmatpush.msra.mxu0 %v468
    %575 = vmatpush.msra.mxu0 %v466
    %576 = vmatpush.msra.mxu0 %v464
    %577 = vmatpush.msra.mxu0 %v462
    %578 = vmatpush.msra.mxu0 %v460
    %579 = vmatpush.msra.mxu0 %v458
    %580 = vmatpush.msra.mxu0 %v456
    %581 = vmatpush.msra.mxu0 %v454
    %582 = vmatpush.msra.mxu0 %v452
    %583 = vmatpush.msra.mxu0 %v450
    %584 = vmatpush.msra.mxu0 %v448
    %585 = vmatmul.f32.gmra.mxu0 %v409
    %v586 = vpop.f32.mrf.mxu0
    %v587 = vadd.f32 0.0, %v586
    %588 = vmatmul.f32.gmra.mxu0 %v412
    %v589 = vpop.f32.mrf.mxu0
    %v590 = vadd.f32 0.0, %v589
    %591 = vdwg.mxu0
    %592 = vmatpush.msra.mxu0 %v479
    %593 = vmatpush.msra.mxu0 %v477
    %594 = vmatpush.msra.mxu0 %v475
    %595 = vmatpush.msra.mxu0 %v473
    %596 = vmatpush.msra.mxu0 %v471
    %597 = vmatpush.msra.mxu0 %v469
    %598 = vmatpush.msra.mxu0 %v467
    %599 = vmatpush.msra.mxu0 %v465
    %600 = vmatpush.msra.mxu0 %v463
    %601 = vmatpush.msra.mxu0 %v461
    %602 = vmatpush.msra.mxu0 %v459
    %603 = vmatpush.msra.mxu0 %v457
    %604 = vmatpush.msra.mxu0 %v455
    %605 = vmatpush.msra.mxu0 %v453
    %606 = vmatpush.msra.mxu0 %v451
    %607 = vmatpush.msra.mxu0 %v449
    %608 = vmatmul.f32.gmra.mxu0 %v409
    %v609 = vpop.f32.mrf.mxu0
    %v610 = vadd.f32 0.0, %v609
    %611 = vmatmul.f32.gmra.mxu0 %v412
    %v612 = vpop.f32.mrf.mxu0
    %v613 = vadd.f32 0.0, %v612
    %614 = vdwg.mxu0
    %vm615 = vcmask 130048
    %v617 = vsel %vm615, %v335, 0
    %v620 = vsel %vm615, %v336, 0
    %v623 = vsel %vm615, %v337, 0
    %v626 = vsel %vm615, %v338, 0
    %v629 = vsel %vm615, %v339, 0
    %v632 = vsel %vm615, %v340, 0
    %v635 = vsel %vm615, %v341, 0
    %v638 = vsel %vm615, %v342, 0
    %v641 = vsel %vm615, %v343, 0
    %v644 = vsel %vm615, %v344, 0
    %v647 = vsel %vm615, %v345, 0
    %v650 = vsel %vm615, %v346, 0
    %v653 = vsel %vm615, %v347, 0
    %v656 = vsel %vm615, %v348, 0
    %v659 = vsel %vm615, %v349, 0
    %v662 = vsel %vm615, %v350, 0
    %664 = vmatpush.msra.mxu0 0.0
    %665 = vmatpush.msra.mxu0 0.0
    %666 = vmatpush.msra.mxu0 0.0
    %667 = vmatpush.msra.mxu0 0.0
    %668 = vmatpush.msra.mxu0 0.0
    %669 = vmatpush.msra.mxu0 0.0
    %670 = vmatpush.msra.mxu0 0.0
    %671 = vmatpush.msra.mxu0 0.0
    %672 = vmatpush.msra.mxu0 0.0
    %673 = vmatpush.msra.mxu0 0.0
    %674 = vmatpush.msra.mxu0 0.0
    %675 = vmatpush.msra.mxu0 0.0
    %676 = vmatpush.msra.mxu0 0.0
    %677 = vmatpush.msra.mxu0 0.0
    %678 = vmatpush.msra.mxu0 %v590
    %679 = vmatpush.msra.mxu0 %v587
    %680 = vmatmul.f32.gmra.mxu0 %v617
    %v681 = vpop.f32.mrf.mxu0
    %v682 = vadd.f32 0.0, %v681
    %683 = vmatmul.f32.gmra.mxu0 %v620
    %v684 = vpop.f32.mrf.mxu0
    %v685 = vadd.f32 0.0, %v684
    %686 = vmatmul.f32.gmra.mxu0 %v623
    %v687 = vpop.f32.mrf.mxu0
    %v688 = vadd.f32 0.0, %v687
    %689 = vmatmul.f32.gmra.mxu0 %v626
    %v690 = vpop.f32.mrf.mxu0
    %v691 = vadd.f32 0.0, %v690
    %692 = vmatmul.f32.gmra.mxu0 %v629
    %v693 = vpop.f32.mrf.mxu0
    %v694 = vadd.f32 0.0, %v693
    %695 = vmatmul.f32.gmra.mxu0 %v632
    %v696 = vpop.f32.mrf.mxu0
    %v697 = vadd.f32 0.0, %v696
    %698 = vmatmul.f32.gmra.mxu0 %v635
    %v699 = vpop.f32.mrf.mxu0
    %v700 = vadd.f32 0.0, %v699
    %701 = vmatmul.f32.gmra.mxu0 %v638
    %v702 = vpop.f32.mrf.mxu0
    %v703 = vadd.f32 0.0, %v702
    %704 = vmatmul.f32.gmra.mxu0 %v641
    %v705 = vpop.f32.mrf.mxu0
    %v706 = vadd.f32 0.0, %v705
    %707 = vmatmul.f32.gmra.mxu0 %v644
    %v708 = vpop.f32.mrf.mxu0
    %v709 = vadd.f32 0.0, %v708
    %710 = vmatmul.f32.gmra.mxu0 %v647
    %v711 = vpop.f32.mrf.mxu0
    %v712 = vadd.f32 0.0, %v711
    %713 = vmatmul.f32.gmra.mxu0 %v650
    %v714 = vpop.f32.mrf.mxu0
    %v715 = vadd.f32 0.0, %v714
    %716 = vmatmul.f32.gmra.mxu0 %v653
    %v717 = vpop.f32.mrf.mxu0
    %v718 = vadd.f32 0.0, %v717
    %719 = vmatmul.f32.gmra.mxu0 %v656
    %v720 = vpop.f32.mrf.mxu0
    %v721 = vadd.f32 0.0, %v720
    %722 = vmatmul.f32.gmra.mxu0 %v659
    %v723 = vpop.f32.mrf.mxu0
    %v724 = vadd.f32 0.0, %v723
    %725 = vmatmul.f32.gmra.mxu0 %v662
    %v726 = vpop.f32.mrf.mxu0
    %v727 = vadd.f32 0.0, %v726
    %728 = vdwg.mxu0
    %729 = vmatpush.msra.mxu0 0.0
    %730 = vmatpush.msra.mxu0 0.0
    %731 = vmatpush.msra.mxu0 0.0
    %732 = vmatpush.msra.mxu0 0.0
    %733 = vmatpush.msra.mxu0 0.0
    %734 = vmatpush.msra.mxu0 0.0
    %735 = vmatpush.msra.mxu0 0.0
    %736 = vmatpush.msra.mxu0 0.0
    %737 = vmatpush.msra.mxu0 0.0
    %738 = vmatpush.msra.mxu0 0.0
    %739 = vmatpush.msra.mxu0 0.0
    %740 = vmatpush.msra.mxu0 0.0
    %741 = vmatpush.msra.mxu0 0.0
    %742 = vmatpush.msra.mxu0 0.0
    %743 = vmatpush.msra.mxu0 %v613
    %744 = vmatpush.msra.mxu0 %v610
    %745 = vmatmul.f32.gmra.mxu0 %v617
    %v746 = vpop.f32.mrf.mxu0
    %v747 = vadd.f32 0.0, %v746
    %748 = vmatmul.f32.gmra.mxu0 %v620
    %v749 = vpop.f32.mrf.mxu0
    %v750 = vadd.f32 0.0, %v749
    %751 = vmatmul.f32.gmra.mxu0 %v623
    %v752 = vpop.f32.mrf.mxu0
    %v753 = vadd.f32 0.0, %v752
    %754 = vmatmul.f32.gmra.mxu0 %v626
    %v755 = vpop.f32.mrf.mxu0
    %v756 = vadd.f32 0.0, %v755
    %757 = vmatmul.f32.gmra.mxu0 %v629
    %v758 = vpop.f32.mrf.mxu0
    %v759 = vadd.f32 0.0, %v758
    %760 = vmatmul.f32.gmra.mxu0 %v632
    %v761 = vpop.f32.mrf.mxu0
    %v762 = vadd.f32 0.0, %v761
    %763 = vmatmul.f32.gmra.mxu0 %v635
    %v764 = vpop.f32.mrf.mxu0
    %v765 = vadd.f32 0.0, %v764
    %766 = vmatmul.f32.gmra.mxu0 %v638
    %v767 = vpop.f32.mrf.mxu0
    %v768 = vadd.f32 0.0, %v767
    %769 = vmatmul.f32.gmra.mxu0 %v641
    %v770 = vpop.f32.mrf.mxu0
    %v771 = vadd.f32 0.0, %v770
    %772 = vmatmul.f32.gmra.mxu0 %v644
    %v773 = vpop.f32.mrf.mxu0
    %v774 = vadd.f32 0.0, %v773
    %775 = vmatmul.f32.gmra.mxu0 %v647
    %v776 = vpop.f32.mrf.mxu0
    %v777 = vadd.f32 0.0, %v776
    %778 = vmatmul.f32.gmra.mxu0 %v650
    %v779 = vpop.f32.mrf.mxu0
    %v780 = vadd.f32 0.0, %v779
    %781 = vmatmul.f32.gmra.mxu0 %v653
    %v782 = vpop.f32.mrf.mxu0
    %v783 = vadd.f32 0.0, %v782
    %784 = vmatmul.f32.gmra.mxu0 %v656
    %v785 = vpop.f32.mrf.mxu0
    %v786 = vadd.f32 0.0, %v785
    %787 = vmatmul.f32.gmra.mxu0 %v659
    %v788 = vpop.f32.mrf.mxu0
    %v789 = vadd.f32 0.0, %v788
    %790 = vmatmul.f32.gmra.mxu0 %v662
    %v791 = vpop.f32.mrf.mxu0
    %v792 = vadd.f32 0.0, %v791
    %793 = vdwg.mxu0
    %v795 = vsel %vm615, %v319, 0
    %v798 = vsel %vm615, %v320, 0
    %v801 = vsel %vm615, %v321, 0
    %v804 = vsel %vm615, %v322, 0
    %v807 = vsel %vm615, %v323, 0
    %v810 = vsel %vm615, %v324, 0
    %v813 = vsel %vm615, %v325, 0
    %v816 = vsel %vm615, %v326, 0
    %v819 = vsel %vm615, %v327, 0
    %v822 = vsel %vm615, %v328, 0
    %v825 = vsel %vm615, %v329, 0
    %v828 = vsel %vm615, %v330, 0
    %v831 = vsel %vm615, %v331, 0
    %v834 = vsel %vm615, %v332, 0
    %v837 = vsel %vm615, %v333, 0
    %v840 = vsel %vm615, %v334, 0
    %842 = vmatpush.msra.mxu0 0.0
    %843 = vmatpush.msra.mxu0 0.0
    %844 = vmatpush.msra.mxu0 0.0
    %845 = vmatpush.msra.mxu0 0.0
    %846 = vmatpush.msra.mxu0 0.0
    %847 = vmatpush.msra.mxu0 0.0
    %848 = vmatpush.msra.mxu0 0.0
    %849 = vmatpush.msra.mxu0 0.0
    %850 = vmatpush.msra.mxu0 0.0
    %851 = vmatpush.msra.mxu0 0.0
    %852 = vmatpush.msra.mxu0 0.0
    %853 = vmatpush.msra.mxu0 0.0
    %854 = vmatpush.msra.mxu0 0.0
    %855 = vmatpush.msra.mxu0 0.0
    %856 = vmatpush.msra.mxu0 %v544
    %857 = vmatpush.msra.mxu0 %v541
    %858 = vmatmul.f32.gmra.mxu0 %v795
    %v859 = vpop.f32.mrf.mxu0
    %v860 = vadd.f32 %v682, %v859
    %861 = vmatmul.f32.gmra.mxu0 %v798
    %v862 = vpop.f32.mrf.mxu0
    %v863 = vadd.f32 %v685, %v862
    %864 = vmatmul.f32.gmra.mxu0 %v801
    %v865 = vpop.f32.mrf.mxu0
    %v866 = vadd.f32 %v688, %v865
    %867 = vmatmul.f32.gmra.mxu0 %v804
    %v868 = vpop.f32.mrf.mxu0
    %v869 = vadd.f32 %v691, %v868
    %870 = vmatmul.f32.gmra.mxu0 %v807
    %v871 = vpop.f32.mrf.mxu0
    %v872 = vadd.f32 %v694, %v871
    %873 = vmatmul.f32.gmra.mxu0 %v810
    %v874 = vpop.f32.mrf.mxu0
    %v875 = vadd.f32 %v697, %v874
    %876 = vmatmul.f32.gmra.mxu0 %v813
    %v877 = vpop.f32.mrf.mxu0
    %v878 = vadd.f32 %v700, %v877
    %879 = vmatmul.f32.gmra.mxu0 %v816
    %v880 = vpop.f32.mrf.mxu0
    %v881 = vadd.f32 %v703, %v880
    %882 = vmatmul.f32.gmra.mxu0 %v819
    %v883 = vpop.f32.mrf.mxu0
    %v884 = vadd.f32 %v706, %v883
    %885 = vmatmul.f32.gmra.mxu0 %v822
    %v886 = vpop.f32.mrf.mxu0
    %v887 = vadd.f32 %v709, %v886
    %888 = vmatmul.f32.gmra.mxu0 %v825
    %v889 = vpop.f32.mrf.mxu0
    %v890 = vadd.f32 %v712, %v889
    %891 = vmatmul.f32.gmra.mxu0 %v828
    %v892 = vpop.f32.mrf.mxu0
    %v893 = vadd.f32 %v715, %v892
    %894 = vmatmul.f32.gmra.mxu0 %v831
    %v895 = vpop.f32.mrf.mxu0
    %v896 = vadd.f32 %v718, %v895
    %897 = vmatmul.f32.gmra.mxu0 %v834
    %v898 = vpop.f32.mrf.mxu0
    %v899 = vadd.f32 %v721, %v898
    %900 = vmatmul.f32.gmra.mxu0 %v837
    %v901 = vpop.f32.mrf.mxu0
    %v902 = vadd.f32 %v724, %v901
    %903 = vmatmul.f32.gmra.mxu0 %v840
    %v904 = vpop.f32.mrf.mxu0
    %v905 = vadd.f32 %v727, %v904
    %906 = vdwg.mxu0
    %907 = vmatpush.msra.mxu0 0.0
    %908 = vmatpush.msra.mxu0 0.0
    %909 = vmatpush.msra.mxu0 0.0
    %910 = vmatpush.msra.mxu0 0.0
    %911 = vmatpush.msra.mxu0 0.0
    %912 = vmatpush.msra.mxu0 0.0
    %913 = vmatpush.msra.mxu0 0.0
    %914 = vmatpush.msra.mxu0 0.0
    %915 = vmatpush.msra.mxu0 0.0
    %916 = vmatpush.msra.mxu0 0.0
    %917 = vmatpush.msra.mxu0 0.0
    %918 = vmatpush.msra.mxu0 0.0
    %919 = vmatpush.msra.mxu0 0.0
    %920 = vmatpush.msra.mxu0 0.0
    %921 = vmatpush.msra.mxu0 %v567
    %922 = vmatpush.msra.mxu0 %v564
    %923 = vmatmul.f32.gmra.mxu0 %v795
    %v924 = vpop.f32.mrf.mxu0
    %v925 = vadd.f32 %v747, %v924
    %926 = vmatmul.f32.gmra.mxu0 %v798
    %v927 = vpop.f32.mrf.mxu0
    %v928 = vadd.f32 %v750, %v927
    %929 = vmatmul.f32.gmra.mxu0 %v801
    %v930 = vpop.f32.mrf.mxu0
    %v931 = vadd.f32 %v753, %v930
    %932 = vmatmul.f32.gmra.mxu0 %v804
    %v933 = vpop.f32.mrf.mxu0
    %v934 = vadd.f32 %v756, %v933
    %935 = vmatmul.f32.gmra.mxu0 %v807
    %v936 = vpop.f32.mrf.mxu0
    %v937 = vadd.f32 %v759, %v936
    %938 = vmatmul.f32.gmra.mxu0 %v810
    %v939 = vpop.f32.mrf.mxu0
    %v940 = vadd.f32 %v762, %v939
    %941 = vmatmul.f32.gmra.mxu0 %v813
    %v942 = vpop.f32.mrf.mxu0
    %v943 = vadd.f32 %v765, %v942
    %944 = vmatmul.f32.gmra.mxu0 %v816
    %v945 = vpop.f32.mrf.mxu0
    %v946 = vadd.f32 %v768, %v945
    %947 = vmatmul.f32.gmra.mxu0 %v819
    %v948 = vpop.f32.mrf.mxu0
    %v949 = vadd.f32 %v771, %v948
    %950 = vmatmul.f32.gmra.mxu0 %v822
    %v951 = vpop.f32.mrf.mxu0
    %v952 = vadd.f32 %v774, %v951
    %953 = vmatmul.f32.gmra.mxu0 %v825
    %v954 = vpop.f32.mrf.mxu0
    %v955 = vadd.f32 %v777, %v954
    %956 = vmatmul.f32.gmra.mxu0 %v828
    %v957 = vpop.f32.mrf.mxu0
    %v958 = vadd.f32 %v780, %v957
    %959 = vmatmul.f32.gmra.mxu0 %v831
    %v960 = vpop.f32.mrf.mxu0
    %v961 = vadd.f32 %v783, %v960
    %962 = vmatmul.f32.gmra.mxu0 %v834
    %v963 = vpop.f32.mrf.mxu0
    %v964 = vadd.f32 %v786, %v963
    %965 = vmatmul.f32.gmra.mxu0 %v837
    %v966 = vpop.f32.mrf.mxu0
    %v967 = vadd.f32 %v789, %v966
    %968 = vmatmul.f32.gmra.mxu0 %v840
    %v969 = vpop.f32.mrf.mxu0
    %v970 = vadd.f32 %v792, %v969
    %971 = vdwg.mxu0
    %972 = vmatpush.msra.mxu0 %v511
    %973 = vmatpush.msra.mxu0 %v509
    %974 = vmatpush.msra.mxu0 %v507
    %975 = vmatpush.msra.mxu0 %v505
    %976 = vmatpush.msra.mxu0 %v503
    %977 = vmatpush.msra.mxu0 %v501
    %978 = vmatpush.msra.mxu0 %v499
    %979 = vmatpush.msra.mxu0 %v497
    %980 = vmatpush.msra.mxu0 %v495
    %981 = vmatpush.msra.mxu0 %v493
    %982 = vmatpush.msra.mxu0 %v491
    %983 = vmatpush.msra.mxu0 %v489
    %984 = vmatpush.msra.mxu0 %v487
    %985 = vmatpush.msra.mxu0 %v485
    %986 = vmatpush.msra.mxu0 %v483
    %987 = vmatpush.msra.mxu0 %v481
    %988 = vmatmul.f32.gmra.mxu0 %v351
    %v989 = vpop.f32.mrf.mxu0
    %v990 = vadd.f32 0.0, %v989
    %991 = vmatmul.f32.gmra.mxu0 %v352
    %v992 = vpop.f32.mrf.mxu0
    %v993 = vadd.f32 0.0, %v992
    %994 = vmatmul.f32.gmra.mxu0 %v353
    %v995 = vpop.f32.mrf.mxu0
    %v996 = vadd.f32 0.0, %v995
    %997 = vmatmul.f32.gmra.mxu0 %v354
    %v998 = vpop.f32.mrf.mxu0
    %v999 = vadd.f32 0.0, %v998
    %1000 = vmatmul.f32.gmra.mxu0 %v355
    %v1001 = vpop.f32.mrf.mxu0
    %v1002 = vadd.f32 0.0, %v1001
    %1003 = vmatmul.f32.gmra.mxu0 %v356
    %v1004 = vpop.f32.mrf.mxu0
    %v1005 = vadd.f32 0.0, %v1004
    %1006 = vmatmul.f32.gmra.mxu0 %v357
    %v1007 = vpop.f32.mrf.mxu0
    %v1008 = vadd.f32 0.0, %v1007
    %1009 = vmatmul.f32.gmra.mxu0 %v358
    %v1010 = vpop.f32.mrf.mxu0
    %v1011 = vadd.f32 0.0, %v1010
    %1012 = vmatmul.f32.gmra.mxu0 %v359
    %v1013 = vpop.f32.mrf.mxu0
    %v1014 = vadd.f32 0.0, %v1013
    %1015 = vmatmul.f32.gmra.mxu0 %v360
    %v1016 = vpop.f32.mrf.mxu0
    %v1017 = vadd.f32 0.0, %v1016
    %1018 = vmatmul.f32.gmra.mxu0 %v361
    %v1019 = vpop.f32.mrf.mxu0
    %v1020 = vadd.f32 0.0, %v1019
    %1021 = vmatmul.f32.gmra.mxu0 %v362
    %v1022 = vpop.f32.mrf.mxu0
    %v1023 = vadd.f32 0.0, %v1022
    %1024 = vmatmul.f32.gmra.mxu0 %v363
    %v1025 = vpop.f32.mrf.mxu0
    %v1026 = vadd.f32 0.0, %v1025
    %1027 = vmatmul.f32.gmra.mxu0 %v364
    %v1028 = vpop.f32.mrf.mxu0
    %v1029 = vadd.f32 0.0, %v1028
    %1030 = vmatmul.f32.gmra.mxu0 %v365
    %v1031 = vpop.f32.mrf.mxu0
    %v1032 = vadd.f32 0.0, %v1031
    %1033 = vmatmul.f32.gmra.mxu0 %v366
    %v1034 = vpop.f32.mrf.mxu0
    %v1035 = vadd.f32 0.0, %v1034
    %1036 = vdwg.mxu0
    %1037 = vmatpush.msra.mxu0 %v512
    %1038 = vmatpush.msra.mxu0 %v510
    %1039 = vmatpush.msra.mxu0 %v508
    %1040 = vmatpush.msra.mxu0 %v506
    %1041 = vmatpush.msra.mxu0 %v504
    %1042 = vmatpush.msra.mxu0 %v502
    %1043 = vmatpush.msra.mxu0 %v500
    %1044 = vmatpush.msra.mxu0 %v498
    %1045 = vmatpush.msra.mxu0 %v496
    %1046 = vmatpush.msra.mxu0 %v494
    %1047 = vmatpush.msra.mxu0 %v492
    %1048 = vmatpush.msra.mxu0 %v490
    %1049 = vmatpush.msra.mxu0 %v488
    %1050 = vmatpush.msra.mxu0 %v486
    %1051 = vmatpush.msra.mxu0 %v484
    %1052 = vmatpush.msra.mxu0 %v482
    %1053 = vmatmul.f32.gmra.mxu0 %v351
    %v1054 = vpop.f32.mrf.mxu0
    %v1055 = vadd.f32 0.0, %v1054
    %1056 = vmatmul.f32.gmra.mxu0 %v352
    %v1057 = vpop.f32.mrf.mxu0
    %v1058 = vadd.f32 0.0, %v1057
    %1059 = vmatmul.f32.gmra.mxu0 %v353
    %v1060 = vpop.f32.mrf.mxu0
    %v1061 = vadd.f32 0.0, %v1060
    %1062 = vmatmul.f32.gmra.mxu0 %v354
    %v1063 = vpop.f32.mrf.mxu0
    %v1064 = vadd.f32 0.0, %v1063
    %1065 = vmatmul.f32.gmra.mxu0 %v355
    %v1066 = vpop.f32.mrf.mxu0
    %v1067 = vadd.f32 0.0, %v1066
    %1068 = vmatmul.f32.gmra.mxu0 %v356
    %v1069 = vpop.f32.mrf.mxu0
    %v1070 = vadd.f32 0.0, %v1069
    %1071 = vmatmul.f32.gmra.mxu0 %v357
    %v1072 = vpop.f32.mrf.mxu0
    %v1073 = vadd.f32 0.0, %v1072
    %1074 = vmatmul.f32.gmra.mxu0 %v358
    %v1075 = vpop.f32.mrf.mxu0
    %v1076 = vadd.f32 0.0, %v1075
    %1077 = vmatmul.f32.gmra.mxu0 %v359
    %v1078 = vpop.f32.mrf.mxu0
    %v1079 = vadd.f32 0.0, %v1078
    %1080 = vmatmul.f32.gmra.mxu0 %v360
    %v1081 = vpop.f32.mrf.mxu0
    %v1082 = vadd.f32 0.0, %v1081
    %1083 = vmatmul.f32.gmra.mxu0 %v361
    %v1084 = vpop.f32.mrf.mxu0
    %v1085 = vadd.f32 0.0, %v1084
    %1086 = vmatmul.f32.gmra.mxu0 %v362
    %v1087 = vpop.f32.mrf.mxu0
    %v1088 = vadd.f32 0.0, %v1087
    %1089 = vmatmul.f32.gmra.mxu0 %v363
    %v1090 = vpop.f32.mrf.mxu0
    %v1091 = vadd.f32 0.0, %v1090
    %1092 = vmatmul.f32.gmra.mxu0 %v364
    %v1093 = vpop.f32.mrf.mxu0
    %v1094 = vadd.f32 0.0, %v1093
    %1095 = vmatmul.f32.gmra.mxu0 %v365
    %v1096 = vpop.f32.mrf.mxu0
    %v1097 = vadd.f32 0.0, %v1096
    %1098 = vmatmul.f32.gmra.mxu0 %v366
    %v1099 = vpop.f32.mrf.mxu0
    %v1100 = vadd.f32 0.0, %v1099
    %1101 = vdwg.mxu0
    %v1102 = vadd.f32 %v860, %v990
    %v1103 = vadd.f32 %v925, %v1055
    %v1104 = vadd.f32 %v863, %v993
    %v1105 = vadd.f32 %v928, %v1058
    %v1106 = vadd.f32 %v866, %v996
    %v1107 = vadd.f32 %v931, %v1061
    %v1108 = vadd.f32 %v869, %v999
    %v1109 = vadd.f32 %v934, %v1064
    %v1110 = vadd.f32 %v872, %v1002
    %v1111 = vadd.f32 %v937, %v1067
    %v1112 = vadd.f32 %v875, %v1005
    %v1113 = vadd.f32 %v940, %v1070
    %v1114 = vadd.f32 %v878, %v1008
    %v1115 = vadd.f32 %v943, %v1073
    %v1116 = vadd.f32 %v881, %v1011
    %v1117 = vadd.f32 %v946, %v1076
    %v1118 = vadd.f32 %v884, %v1014
    %v1119 = vadd.f32 %v949, %v1079
    %v1120 = vadd.f32 %v887, %v1017
    %v1121 = vadd.f32 %v952, %v1082
    %v1122 = vadd.f32 %v890, %v1020
    %v1123 = vadd.f32 %v955, %v1085
    %v1124 = vadd.f32 %v893, %v1023
    %v1125 = vadd.f32 %v958, %v1088
    %v1126 = vadd.f32 %v896, %v1026
    %v1127 = vadd.f32 %v961, %v1091
    %v1128 = vadd.f32 %v899, %v1029
    %v1129 = vadd.f32 %v964, %v1094
    %v1130 = vadd.f32 %v902, %v1032
    %v1131 = vadd.f32 %v967, %v1097
    %v1132 = vadd.f32 %v905, %v1035
    %v1133 = vadd.f32 %v970, %v1100
    %v1135 = vperm.slane %v514, 0
    %v1136 = vperm.slane %v514, 1
    %v1139 = vadd.f32 %v1102, %v1135
    %v1140 = vadd.f32 %v1103, %v1136
    %v1141 = vadd.f32 %v1104, %v1135
    %v1142 = vadd.f32 %v1105, %v1136
    %v1143 = vadd.f32 %v1106, %v1135
    %v1144 = vadd.f32 %v1107, %v1136
    %v1145 = vadd.f32 %v1108, %v1135
    %v1146 = vadd.f32 %v1109, %v1136
    %v1147 = vadd.f32 %v1110, %v1135
    %v1148 = vadd.f32 %v1111, %v1136
    %v1149 = vadd.f32 %v1112, %v1135
    %v1150 = vadd.f32 %v1113, %v1136
    %v1151 = vadd.f32 %v1114, %v1135
    %v1152 = vadd.f32 %v1115, %v1136
    %v1153 = vadd.f32 %v1116, %v1135
    %v1154 = vadd.f32 %v1117, %v1136
    %v1155 = vadd.f32 %v1118, %v1135
    %v1156 = vadd.f32 %v1119, %v1136
    %v1157 = vadd.f32 %v1120, %v1135
    %v1158 = vadd.f32 %v1121, %v1136
    %v1159 = vadd.f32 %v1122, %v1135
    %v1160 = vadd.f32 %v1123, %v1136
    %v1161 = vadd.f32 %v1124, %v1135
    %v1162 = vadd.f32 %v1125, %v1136
    %v1163 = vadd.f32 %v1126, %v1135
    %v1164 = vadd.f32 %v1127, %v1136
    %v1165 = vadd.f32 %v1128, %v1135
    %v1166 = vadd.f32 %v1129, %v1136
    %v1167 = vadd.f32 %v1130, %v1135
    %v1168 = vadd.f32 %v1131, %v1136
    %v1169 = vadd.f32 %v1132, %v1135
    %v1170 = vadd.f32 %v1133, %v1136
    %v1171 = vadd.f32 %v1139, %v1141
    %v1172 = vadd.f32 %v1171, %v1143
    %v1173 = vadd.f32 %v1172, %v1145
    %v1174 = vadd.f32 %v1173, %v1147
    %v1175 = vadd.f32 %v1174, %v1149
    %v1176 = vadd.f32 %v1175, %v1151
    %v1177 = vadd.f32 %v1176, %v1153
    %v1178 = vadd.f32 %v1177, %v1155
    %v1179 = vadd.f32 %v1178, %v1157
    %v1180 = vadd.f32 %v1179, %v1159
    %v1181 = vadd.f32 %v1180, %v1161
    %v1182 = vadd.f32 %v1181, %v1163
    %v1183 = vadd.f32 %v1182, %v1165
    %v1184 = vadd.f32 %v1183, %v1167
    %v1185 = vadd.f32 %v1184, %v1169
    %v1186 = vrot.slane %v1185, 4
    %v1187 = vadd.f32 %v1185, %v1186
    %v1188 = vrot.slane %v1187, 2
    %v1189 = vadd.f32 %v1187, %v1188
    %v1190 = vrot.slane %v1189, 1
    %v1191 = vadd.f32 %v1189, %v1190
    %v1192 = vadd.f32 %v1140, %v1142
    %v1193 = vadd.f32 %v1192, %v1144
    %v1194 = vadd.f32 %v1193, %v1146
    %v1195 = vadd.f32 %v1194, %v1148
    %v1196 = vadd.f32 %v1195, %v1150
    %v1197 = vadd.f32 %v1196, %v1152
    %v1198 = vadd.f32 %v1197, %v1154
    %v1199 = vadd.f32 %v1198, %v1156
    %v1200 = vadd.f32 %v1199, %v1158
    %v1201 = vadd.f32 %v1200, %v1160
    %v1202 = vadd.f32 %v1201, %v1162
    %v1203 = vadd.f32 %v1202, %v1164
    %v1204 = vadd.f32 %v1203, %v1166
    %v1205 = vadd.f32 %v1204, %v1168
    %v1206 = vadd.f32 %v1205, %v1170
    %v1207 = vrot.slane %v1206, 4
    %v1208 = vadd.f32 %v1206, %v1207
    %v1209 = vrot.slane %v1208, 2
    %v1210 = vadd.f32 %v1208, %v1209
    %v1211 = vrot.slane %v1210, 1
    %v1212 = vadd.f32 %v1210, %v1211
    %v1213 = vrcp.pop 128.0
    %v1214 = vmul.f32 128.0, %v1213
    %v1215 = vsub.f32 1.0, %v1214
    %v1216 = vmul.f32 %v1213, %v1215
    %v1217 = vadd.f32 %v1213, %v1216
    %vm1218 = vweird.f32 %v1213
    %v1219 = vsel %vm1218, %v1213, %v1217
    %v1220 = vmul.f32 %v1191, %v1219
    %v1221 = vmul.f32 %v1212, %v1219
    %v1222 = vmul.f32 %v1139, %v1139
    %v1223 = vmul.f32 %v1140, %v1140
    %v1224 = vmul.f32 %v1141, %v1141
    %v1225 = vmul.f32 %v1142, %v1142
    %v1226 = vmul.f32 %v1143, %v1143
    %v1227 = vmul.f32 %v1144, %v1144
    %v1228 = vmul.f32 %v1145, %v1145
    %v1229 = vmul.f32 %v1146, %v1146
    %v1230 = vmul.f32 %v1147, %v1147
    %v1231 = vmul.f32 %v1148, %v1148
    %v1232 = vmul.f32 %v1149, %v1149
    %v1233 = vmul.f32 %v1150, %v1150
    %v1234 = vmul.f32 %v1151, %v1151
    %v1235 = vmul.f32 %v1152, %v1152
    %v1236 = vmul.f32 %v1153, %v1153
    %v1237 = vmul.f32 %v1154, %v1154
    %v1238 = vmul.f32 %v1155, %v1155
    %v1239 = vmul.f32 %v1156, %v1156
    %v1240 = vmul.f32 %v1157, %v1157
    %v1241 = vmul.f32 %v1158, %v1158
    %v1242 = vmul.f32 %v1159, %v1159
    %v1243 = vmul.f32 %v1160, %v1160
    %v1244 = vmul.f32 %v1161, %v1161
    %v1245 = vmul.f32 %v1162, %v1162
    %v1246 = vmul.f32 %v1163, %v1163
    %v1247 = vmul.f32 %v1164, %v1164
    %v1248 = vmul.f32 %v1165, %v1165
    %v1249 = vmul.f32 %v1166, %v1166
    %v1250 = vmul.f32 %v1167, %v1167
    %v1251 = vmul.f32 %v1168, %v1168
    %v1252 = vmul.f32 %v1169, %v1169
    %v1253 = vmul.f32 %v1170, %v1170
    %v1254 = vadd.f32 %v1222, %v1224
    %v1255 = vadd.f32 %v1254, %v1226
    %v1256 = vadd.f32 %v1255, %v1228
    %v1257 = vadd.f32 %v1256, %v1230
    %v1258 = vadd.f32 %v1257, %v1232
    %v1259 = vadd.f32 %v1258, %v1234
    %v1260 = vadd.f32 %v1259, %v1236
    %v1261 = vadd.f32 %v1260, %v1238
    %v1262 = vadd.f32 %v1261, %v1240
    %v1263 = vadd.f32 %v1262, %v1242
    %v1264 = vadd.f32 %v1263, %v1244
    %v1265 = vadd.f32 %v1264, %v1246
    %v1266 = vadd.f32 %v1265, %v1248
    %v1267 = vadd.f32 %v1266, %v1250
    %v1268 = vadd.f32 %v1267, %v1252
    %v1269 = vrot.slane %v1268, 4
    %v1270 = vadd.f32 %v1268, %v1269
    %v1271 = vrot.slane %v1270, 2
    %v1272 = vadd.f32 %v1270, %v1271
    %v1273 = vrot.slane %v1272, 1
    %v1274 = vadd.f32 %v1272, %v1273
    %v1275 = vadd.f32 %v1223, %v1225
    %v1276 = vadd.f32 %v1275, %v1227
    %v1277 = vadd.f32 %v1276, %v1229
    %v1278 = vadd.f32 %v1277, %v1231
    %v1279 = vadd.f32 %v1278, %v1233
    %v1280 = vadd.f32 %v1279, %v1235
    %v1281 = vadd.f32 %v1280, %v1237
    %v1282 = vadd.f32 %v1281, %v1239
    %v1283 = vadd.f32 %v1282, %v1241
    %v1284 = vadd.f32 %v1283, %v1243
    %v1285 = vadd.f32 %v1284, %v1245
    %v1286 = vadd.f32 %v1285, %v1247
    %v1287 = vadd.f32 %v1286, %v1249
    %v1288 = vadd.f32 %v1287, %v1251
    %v1289 = vadd.f32 %v1288, %v1253
    %v1290 = vrot.slane %v1289, 4
    %v1291 = vadd.f32 %v1289, %v1290
    %v1292 = vrot.slane %v1291, 2
    %v1293 = vadd.f32 %v1291, %v1292
    %v1294 = vrot.slane %v1293, 1
    %v1295 = vadd.f32 %v1293, %v1294
    %v1296 = vmul.f32 %v1274, %v1219
    %v1297 = vmul.f32 %v1295, %v1219
    %v1298 = vmul.f32 %v1220, %v1220
    %v1299 = vmul.f32 %v1221, %v1221
    %v1300 = vsub.f32 %v1296, %v1298
    %v1301 = vsub.f32 %v1297, %v1299
    %v1302 = vmax.f32 %v1300, 0.0
    %v1303 = vmax.f32 %v1301, 0.0
    %v1304 = vsub.f32 %v1139, %v1220
    %v1305 = vsub.f32 %v1140, %v1221
    %v1306 = vsub.f32 %v1141, %v1220
    %v1307 = vsub.f32 %v1142, %v1221
    %v1308 = vsub.f32 %v1143, %v1220
    %v1309 = vsub.f32 %v1144, %v1221
    %v1310 = vsub.f32 %v1145, %v1220
    %v1311 = vsub.f32 %v1146, %v1221
    %v1312 = vsub.f32 %v1147, %v1220
    %v1313 = vsub.f32 %v1148, %v1221
    %v1314 = vsub.f32 %v1149, %v1220
    %v1315 = vsub.f32 %v1150, %v1221
    %v1316 = vsub.f32 %v1151, %v1220
    %v1317 = vsub.f32 %v1152, %v1221
    %v1318 = vsub.f32 %v1153, %v1220
    %v1319 = vsub.f32 %v1154, %v1221
    %v1320 = vsub.f32 %v1155, %v1220
    %v1321 = vsub.f32 %v1156, %v1221
    %v1322 = vsub.f32 %v1157, %v1220
    %v1323 = vsub.f32 %v1158, %v1221
    %v1324 = vsub.f32 %v1159, %v1220
    %v1325 = vsub.f32 %v1160, %v1221
    %v1326 = vsub.f32 %v1161, %v1220
    %v1327 = vsub.f32 %v1162, %v1221
    %v1328 = vsub.f32 %v1163, %v1220
    %v1329 = vsub.f32 %v1164, %v1221
    %v1330 = vsub.f32 %v1165, %v1220
    %v1331 = vsub.f32 %v1166, %v1221
    %v1332 = vsub.f32 %v1167, %v1220
    %v1333 = vsub.f32 %v1168, %v1221
    %v1334 = vsub.f32 %v1169, %v1220
    %v1335 = vsub.f32 %v1170, %v1221
    %v1336 = vadd.f32 %v1302, 1e-05
    %v1337 = vadd.f32 %v1303, 1e-05
    %v1338 = vrsqrt.pop %v1336
    %v1339 = vmul.f32 %v1338, %v1336
    %v1340 = vmul.f32 %v1339, %v1338
    %v1341 = vmul.f32 0.5, %v1340
    %v1342 = vsub.f32 1.5, %v1341
    %v1343 = vmul.f32 %v1338, %v1342
    %vm1344 = vweird.f32 %v1336
    %vm1345 = vweird.f32 %v1338
    %vm1346 = vmor %vm1344, %vm1345
    %v1347 = vsel %vm1346, %v1338, %v1343
    %v1348 = vrsqrt.pop %v1337
    %v1349 = vmul.f32 %v1348, %v1337
    %v1350 = vmul.f32 %v1349, %v1348
    %v1351 = vmul.f32 0.5, %v1350
    %v1352 = vsub.f32 1.5, %v1351
    %v1353 = vmul.f32 %v1348, %v1352
    %vm1354 = vweird.f32 %v1337
    %vm1355 = vweird.f32 %v1348
    %vm1356 = vmor %vm1354, %vm1355
    %v1357 = vsel %vm1356, %v1348, %v1353
    %v1358 = vmul.f32 %v1304, %v1347
    %v1359 = vmul.f32 %v1305, %v1357
    %v1360 = vmul.f32 %v1306, %v1347
    %v1361 = vmul.f32 %v1307, %v1357
    %v1362 = vmul.f32 %v1308, %v1347
    %v1363 = vmul.f32 %v1309, %v1357
    %v1364 = vmul.f32 %v1310, %v1347
    %v1365 = vmul.f32 %v1311, %v1357
    %v1366 = vmul.f32 %v1312, %v1347
    %v1367 = vmul.f32 %v1313, %v1357
    %v1368 = vmul.f32 %v1314, %v1347
    %v1369 = vmul.f32 %v1315, %v1357
    %v1370 = vmul.f32 %v1316, %v1347
    %v1371 = vmul.f32 %v1317, %v1357
    %v1372 = vmul.f32 %v1318, %v1347
    %v1373 = vmul.f32 %v1319, %v1357
    %v1374 = vmul.f32 %v1320, %v1347
    %v1375 = vmul.f32 %v1321, %v1357
    %v1376 = vmul.f32 %v1322, %v1347
    %v1377 = vmul.f32 %v1323, %v1357
    %v1378 = vmul.f32 %v1324, %v1347
    %v1379 = vmul.f32 %v1325, %v1357
    %v1380 = vmul.f32 %v1326, %v1347
    %v1381 = vmul.f32 %v1327, %v1357
    %v1382 = vmul.f32 %v1328, %v1347
    %v1383 = vmul.f32 %v1329, %v1357
    %v1384 = vmul.f32 %v1330, %v1347
    %v1385 = vmul.f32 %v1331, %v1357
    %v1386 = vmul.f32 %v1332, %v1347
    %v1387 = vmul.f32 %v1333, %v1357
    %v1388 = vmul.f32 %v1334, %v1347
    %v1389 = vmul.f32 %v1335, %v1357
    %v1391 = vperm.slane %v516, 0
    %v1392 = vperm.slane %v516, 1
    %v1395 = vmul.f32 %v1358, %v1391
    %v1396 = vmul.f32 %v1359, %v1392
    %v1397 = vmul.f32 %v1360, %v1391
    %v1398 = vmul.f32 %v1361, %v1392
    %v1399 = vmul.f32 %v1362, %v1391
    %v1400 = vmul.f32 %v1363, %v1392
    %v1401 = vmul.f32 %v1364, %v1391
    %v1402 = vmul.f32 %v1365, %v1392
    %v1403 = vmul.f32 %v1366, %v1391
    %v1404 = vmul.f32 %v1367, %v1392
    %v1405 = vmul.f32 %v1368, %v1391
    %v1406 = vmul.f32 %v1369, %v1392
    %v1407 = vmul.f32 %v1370, %v1391
    %v1408 = vmul.f32 %v1371, %v1392
    %v1409 = vmul.f32 %v1372, %v1391
    %v1410 = vmul.f32 %v1373, %v1392
    %v1411 = vmul.f32 %v1374, %v1391
    %v1412 = vmul.f32 %v1375, %v1392
    %v1413 = vmul.f32 %v1376, %v1391
    %v1414 = vmul.f32 %v1377, %v1392
    %v1415 = vmul.f32 %v1378, %v1391
    %v1416 = vmul.f32 %v1379, %v1392
    %v1417 = vmul.f32 %v1380, %v1391
    %v1418 = vmul.f32 %v1381, %v1392
    %v1419 = vmul.f32 %v1382, %v1391
    %v1420 = vmul.f32 %v1383, %v1392
    %v1421 = vmul.f32 %v1384, %v1391
    %v1422 = vmul.f32 %v1385, %v1392
    %v1423 = vmul.f32 %v1386, %v1391
    %v1424 = vmul.f32 %v1387, %v1392
    %v1425 = vmul.f32 %v1388, %v1391
    %v1426 = vmul.f32 %v1389, %v1392
    %v1428 = vperm.slane %v518, 0
    %v1429 = vperm.slane %v518, 1
    %v1432 = vadd.f32 %v1395, %v1428
    %v1433 = vadd.f32 %v1396, %v1429
    %v1434 = vadd.f32 %v1397, %v1428
    %v1435 = vadd.f32 %v1398, %v1429
    %v1436 = vadd.f32 %v1399, %v1428
    %v1437 = vadd.f32 %v1400, %v1429
    %v1438 = vadd.f32 %v1401, %v1428
    %v1439 = vadd.f32 %v1402, %v1429
    %v1440 = vadd.f32 %v1403, %v1428
    %v1441 = vadd.f32 %v1404, %v1429
    %v1442 = vadd.f32 %v1405, %v1428
    %v1443 = vadd.f32 %v1406, %v1429
    %v1444 = vadd.f32 %v1407, %v1428
    %v1445 = vadd.f32 %v1408, %v1429
    %v1446 = vadd.f32 %v1409, %v1428
    %v1447 = vadd.f32 %v1410, %v1429
    %v1448 = vadd.f32 %v1411, %v1428
    %v1449 = vadd.f32 %v1412, %v1429
    %v1450 = vadd.f32 %v1413, %v1428
    %v1451 = vadd.f32 %v1414, %v1429
    %v1452 = vadd.f32 %v1415, %v1428
    %v1453 = vadd.f32 %v1416, %v1429
    %v1454 = vadd.f32 %v1417, %v1428
    %v1455 = vadd.f32 %v1418, %v1429
    %v1456 = vadd.f32 %v1419, %v1428
    %v1457 = vadd.f32 %v1420, %v1429
    %v1458 = vadd.f32 %v1421, %v1428
    %v1459 = vadd.f32 %v1422, %v1429
    %v1460 = vadd.f32 %v1423, %v1428
    %v1461 = vadd.f32 %v1424, %v1429
    %v1462 = vadd.f32 %v1425, %v1428
    %v1463 = vadd.f32 %v1426, %v1429
    %v1464 = vmul.f32 %v1432, 0.5
    %v1465 = vmul.f32 %v1434, 0.5
    %v1466 = vmul.f32 %v1436, 0.5
    %v1467 = vmul.f32 %v1438, 0.5
    %v1468 = vmul.f32 %v1440, 0.5
    %v1469 = vmul.f32 %v1442, 0.5
    %v1470 = vmul.f32 %v1444, 0.5
    %v1471 = vmul.f32 %v1446, 0.5
    %v1472 = vmul.f32 %v1448, 0.5
    %v1473 = vmul.f32 %v1450, 0.5
    %v1474 = vmul.f32 %v1452, 0.5
    %v1475 = vmul.f32 %v1454, 0.5
    %v1476 = vmul.f32 %v1456, 0.5
    %v1477 = vmul.f32 %v1458, 0.5
    %v1478 = vmul.f32 %v1460, 0.5
    %v1479 = vmul.f32 %v1462, 0.5
    %v1480 = vtanh.pop %v1464
    %v1481 = vtanh.pop %v1465
    %v1482 = vtanh.pop %v1466
    %v1483 = vtanh.pop %v1467
    %v1484 = vtanh.pop %v1468
    %v1485 = vtanh.pop %v1469
    %v1486 = vtanh.pop %v1470
    %v1487 = vtanh.pop %v1471
    %v1488 = vtanh.pop %v1472
    %v1489 = vtanh.pop %v1473
    %v1490 = vtanh.pop %v1474
    %v1491 = vtanh.pop %v1475
    %v1492 = vtanh.pop %v1476
    %v1493 = vtanh.pop %v1477
    %v1494 = vtanh.pop %v1478
    %v1495 = vtanh.pop %v1479
    %v1496 = vadd.f32 %v1480, 1.0
    %v1497 = vadd.f32 %v1481, 1.0
    %v1498 = vadd.f32 %v1482, 1.0
    %v1499 = vadd.f32 %v1483, 1.0
    %v1500 = vadd.f32 %v1484, 1.0
    %v1501 = vadd.f32 %v1485, 1.0
    %v1502 = vadd.f32 %v1486, 1.0
    %v1503 = vadd.f32 %v1487, 1.0
    %v1504 = vadd.f32 %v1488, 1.0
    %v1505 = vadd.f32 %v1489, 1.0
    %v1506 = vadd.f32 %v1490, 1.0
    %v1507 = vadd.f32 %v1491, 1.0
    %v1508 = vadd.f32 %v1492, 1.0
    %v1509 = vadd.f32 %v1493, 1.0
    %v1510 = vadd.f32 %v1494, 1.0
    %v1511 = vadd.f32 %v1495, 1.0
    %v1512 = vmul.f32 %v1496, 0.5
    %v1513 = vmul.f32 %v1497, 0.5
    %v1514 = vmul.f32 %v1498, 0.5
    %v1515 = vmul.f32 %v1499, 0.5
    %v1516 = vmul.f32 %v1500, 0.5
    %v1517 = vmul.f32 %v1501, 0.5
    %v1518 = vmul.f32 %v1502, 0.5
    %v1519 = vmul.f32 %v1503, 0.5
    %v1520 = vmul.f32 %v1504, 0.5
    %v1521 = vmul.f32 %v1505, 0.5
    %v1522 = vmul.f32 %v1506, 0.5
    %v1523 = vmul.f32 %v1507, 0.5
    %v1524 = vmul.f32 %v1508, 0.5
    %v1525 = vmul.f32 %v1509, 0.5
    %v1526 = vmul.f32 %v1510, 0.5
    %v1527 = vmul.f32 %v1511, 0.5
    %v1528 = vmax.f32 %v1433, 0.0
    %v1529 = vmax.f32 %v1435, 0.0
    %v1530 = vmax.f32 %v1437, 0.0
    %v1531 = vmax.f32 %v1439, 0.0
    %v1532 = vmax.f32 %v1441, 0.0
    %v1533 = vmax.f32 %v1443, 0.0
    %v1534 = vmax.f32 %v1445, 0.0
    %v1535 = vmax.f32 %v1447, 0.0
    %v1536 = vmax.f32 %v1449, 0.0
    %v1537 = vmax.f32 %v1451, 0.0
    %v1538 = vmax.f32 %v1453, 0.0
    %v1539 = vmax.f32 %v1455, 0.0
    %v1540 = vmax.f32 %v1457, 0.0
    %v1541 = vmax.f32 %v1459, 0.0
    %v1542 = vmax.f32 %v1461, 0.0
    %v1543 = vmax.f32 %v1463, 0.0
    %v1544 = vand.u32 2147483647, %v1433
    %v1545 = vand.u32 2147483647, %v1435
    %v1546 = vand.u32 2147483647, %v1437
    %v1547 = vand.u32 2147483647, %v1439
    %v1548 = vand.u32 2147483647, %v1441
    %v1549 = vand.u32 2147483647, %v1443
    %v1550 = vand.u32 2147483647, %v1445
    %v1551 = vand.u32 2147483647, %v1447
    %v1552 = vand.u32 2147483647, %v1449
    %v1553 = vand.u32 2147483647, %v1451
    %v1554 = vand.u32 2147483647, %v1453
    %v1555 = vand.u32 2147483647, %v1455
    %v1556 = vand.u32 2147483647, %v1457
    %v1557 = vand.u32 2147483647, %v1459
    %v1558 = vand.u32 2147483647, %v1461
    %v1559 = vand.u32 2147483647, %v1463
    %v1560 = vsub.f32 0.0, %v1544
    %v1561 = vsub.f32 0.0, %v1545
    %v1562 = vsub.f32 0.0, %v1546
    %v1563 = vsub.f32 0.0, %v1547
    %v1564 = vsub.f32 0.0, %v1548
    %v1565 = vsub.f32 0.0, %v1549
    %v1566 = vsub.f32 0.0, %v1550
    %v1567 = vsub.f32 0.0, %v1551
    %v1568 = vsub.f32 0.0, %v1552
    %v1569 = vsub.f32 0.0, %v1553
    %v1570 = vsub.f32 0.0, %v1554
    %v1571 = vsub.f32 0.0, %v1555
    %v1572 = vsub.f32 0.0, %v1556
    %v1573 = vsub.f32 0.0, %v1557
    %v1574 = vsub.f32 0.0, %v1558
    %v1575 = vsub.f32 0.0, %v1559
    %v1576 = vmul.f32 %v1560, 1.442695
    %v1577 = vpow.pop %v1576
    %v1578 = vmul.f32 %v1561, 1.442695
    %v1579 = vpow.pop %v1578
    %v1580 = vmul.f32 %v1562, 1.442695
    %v1581 = vpow.pop %v1580
    %v1582 = vmul.f32 %v1563, 1.442695
    %v1583 = vpow.pop %v1582
    %v1584 = vmul.f32 %v1564, 1.442695
    %v1585 = vpow.pop %v1584
    %v1586 = vmul.f32 %v1565, 1.442695
    %v1587 = vpow.pop %v1586
    %v1588 = vmul.f32 %v1566, 1.442695
    %v1589 = vpow.pop %v1588
    %v1590 = vmul.f32 %v1567, 1.442695
    %v1591 = vpow.pop %v1590
    %v1592 = vmul.f32 %v1568, 1.442695
    %v1593 = vpow.pop %v1592
    %v1594 = vmul.f32 %v1569, 1.442695
    %v1595 = vpow.pop %v1594
    %v1596 = vmul.f32 %v1570, 1.442695
    %v1597 = vpow.pop %v1596
    %v1598 = vmul.f32 %v1571, 1.442695
    %v1599 = vpow.pop %v1598
    %v1600 = vmul.f32 %v1572, 1.442695
    %v1601 = vpow.pop %v1600
    %v1602 = vmul.f32 %v1573, 1.442695
    %v1603 = vpow.pop %v1602
    %v1604 = vmul.f32 %v1574, 1.442695
    %v1605 = vpow.pop %v1604
    %v1606 = vmul.f32 %v1575, 1.442695
    %v1607 = vpow.pop %v1606
    %v1608 = vadd.f32 %v1577, 1.0
    %v1609 = vlog2.pop %v1608
    %v1610 = vmul.f32 %v1609, 0.6931472
    %v1611 = vmul.f32 -0.5, %v1577
    %v1612 = vadd.f32 %v1611, 1.0
    %v1613 = vmul.f32 %v1612, %v1577
    %v1614 = vand.u32 2147483647, %v1577
    %vm1615 = vcmp.lt.f32.partialorder %v1614, 0.0004427343
    %v1616 = vsel %vm1615, %v1613, %v1610
    %v1617 = vadd.f32 %v1579, 1.0
    %v1618 = vlog2.pop %v1617
    %v1619 = vmul.f32 %v1618, 0.6931472
    %v1620 = vmul.f32 -0.5, %v1579
    %v1621 = vadd.f32 %v1620, 1.0
    %v1622 = vmul.f32 %v1621, %v1579
    %v1623 = vand.u32 2147483647, %v1579
    %vm1624 = vcmp.lt.f32.partialorder %v1623, 0.0004427343
    %v1625 = vsel %vm1624, %v1622, %v1619
    %v1626 = vadd.f32 %v1581, 1.0
    %v1627 = vlog2.pop %v1626
    %v1628 = vmul.f32 %v1627, 0.6931472
    %v1629 = vmul.f32 -0.5, %v1581
    %v1630 = vadd.f32 %v1629, 1.0
    %v1631 = vmul.f32 %v1630, %v1581
    %v1632 = vand.u32 2147483647, %v1581
    %vm1633 = vcmp.lt.f32.partialorder %v1632, 0.0004427343
    %v1634 = vsel %vm1633, %v1631, %v1628
    %v1635 = vadd.f32 %v1583, 1.0
    %v1636 = vlog2.pop %v1635
    %v1637 = vmul.f32 %v1636, 0.6931472
    %v1638 = vmul.f32 -0.5, %v1583
    %v1639 = vadd.f32 %v1638, 1.0
    %v1640 = vmul.f32 %v1639, %v1583
    %v1641 = vand.u32 2147483647, %v1583
    %vm1642 = vcmp.lt.f32.partialorder %v1641, 0.0004427343
    %v1643 = vsel %vm1642, %v1640, %v1637
    %v1644 = vadd.f32 %v1585, 1.0
    %v1645 = vlog2.pop %v1644
    %v1646 = vmul.f32 %v1645, 0.6931472
    %v1647 = vmul.f32 -0.5, %v1585
    %v1648 = vadd.f32 %v1647, 1.0
    %v1649 = vmul.f32 %v1648, %v1585
    %v1650 = vand.u32 2147483647, %v1585
    %vm1651 = vcmp.lt.f32.partialorder %v1650, 0.0004427343
    %v1652 = vsel %vm1651, %v1649, %v1646
    %v1653 = vadd.f32 %v1587, 1.0
    %v1654 = vlog2.pop %v1653
    %v1655 = vmul.f32 %v1654, 0.6931472
    %v1656 = vmul.f32 -0.5, %v1587
    %v1657 = vadd.f32 %v1656, 1.0
    %v1658 = vmul.f32 %v1657, %v1587
    %v1659 = vand.u32 2147483647, %v1587
    %vm1660 = vcmp.lt.f32.partialorder %v1659, 0.0004427343
    %v1661 = vsel %vm1660, %v1658, %v1655
    %v1662 = vadd.f32 %v1589, 1.0
    %v1663 = vlog2.pop %v1662
    %v1664 = vmul.f32 %v1663, 0.6931472
    %v1665 = vmul.f32 -0.5, %v1589
    %v1666 = vadd.f32 %v1665, 1.0
    %v1667 = vmul.f32 %v1666, %v1589
    %v1668 = vand.u32 2147483647, %v1589
    %vm1669 = vcmp.lt.f32.partialorder %v1668, 0.0004427343
    %v1670 = vsel %vm1669, %v1667, %v1664
    %v1671 = vadd.f32 %v1591, 1.0
    %v1672 = vlog2.pop %v1671
    %v1673 = vmul.f32 %v1672, 0.6931472
    %v1674 = vmul.f32 -0.5, %v1591
    %v1675 = vadd.f32 %v1674, 1.0
    %v1676 = vmul.f32 %v1675, %v1591
    %v1677 = vand.u32 2147483647, %v1591
    %vm1678 = vcmp.lt.f32.partialorder %v1677, 0.0004427343
    %v1679 = vsel %vm1678, %v1676, %v1673
    %v1680 = vadd.f32 %v1593, 1.0
    %v1681 = vlog2.pop %v1680
    %v1682 = vmul.f32 %v1681, 0.6931472
    %v1683 = vmul.f32 -0.5, %v1593
    %v1684 = vadd.f32 %v1683, 1.0
    %v1685 = vmul.f32 %v1684, %v1593
    %v1686 = vand.u32 2147483647, %v1593
    %vm1687 = vcmp.lt.f32.partialorder %v1686, 0.0004427343
    %v1688 = vsel %vm1687, %v1685, %v1682
    %v1689 = vadd.f32 %v1595, 1.0
    %v1690 = vlog2.pop %v1689
    %v1691 = vmul.f32 %v1690, 0.6931472
    %v1692 = vmul.f32 -0.5, %v1595
    %v1693 = vadd.f32 %v1692, 1.0
    %v1694 = vmul.f32 %v1693, %v1595
    %v1695 = vand.u32 2147483647, %v1595
    %vm1696 = vcmp.lt.f32.partialorder %v1695, 0.0004427343
    %v1697 = vsel %vm1696, %v1694, %v1691
    %v1698 = vadd.f32 %v1597, 1.0
    %v1699 = vlog2.pop %v1698
    %v1700 = vmul.f32 %v1699, 0.6931472
    %v1701 = vmul.f32 -0.5, %v1597
    %v1702 = vadd.f32 %v1701, 1.0
    %v1703 = vmul.f32 %v1702, %v1597
    %v1704 = vand.u32 2147483647, %v1597
    %vm1705 = vcmp.lt.f32.partialorder %v1704, 0.0004427343
    %v1706 = vsel %vm1705, %v1703, %v1700
    %v1707 = vadd.f32 %v1599, 1.0
    %v1708 = vlog2.pop %v1707
    %v1709 = vmul.f32 %v1708, 0.6931472
    %v1710 = vmul.f32 -0.5, %v1599
    %v1711 = vadd.f32 %v1710, 1.0
    %v1712 = vmul.f32 %v1711, %v1599
    %v1713 = vand.u32 2147483647, %v1599
    %vm1714 = vcmp.lt.f32.partialorder %v1713, 0.0004427343
    %v1715 = vsel %vm1714, %v1712, %v1709
    %v1716 = vadd.f32 %v1601, 1.0
    %v1717 = vlog2.pop %v1716
    %v1718 = vmul.f32 %v1717, 0.6931472
    %v1719 = vmul.f32 -0.5, %v1601
    %v1720 = vadd.f32 %v1719, 1.0
    %v1721 = vmul.f32 %v1720, %v1601
    %v1722 = vand.u32 2147483647, %v1601
    %vm1723 = vcmp.lt.f32.partialorder %v1722, 0.0004427343
    %v1724 = vsel %vm1723, %v1721, %v1718
    %v1725 = vadd.f32 %v1603, 1.0
    %v1726 = vlog2.pop %v1725
    %v1727 = vmul.f32 %v1726, 0.6931472
    %v1728 = vmul.f32 -0.5, %v1603
    %v1729 = vadd.f32 %v1728, 1.0
    %v1730 = vmul.f32 %v1729, %v1603
    %v1731 = vand.u32 2147483647, %v1603
    %vm1732 = vcmp.lt.f32.partialorder %v1731, 0.0004427343
    %v1733 = vsel %vm1732, %v1730, %v1727
    %v1734 = vadd.f32 %v1605, 1.0
    %v1735 = vlog2.pop %v1734
    %v1736 = vmul.f32 %v1735, 0.6931472
    %v1737 = vmul.f32 -0.5, %v1605
    %v1738 = vadd.f32 %v1737, 1.0
    %v1739 = vmul.f32 %v1738, %v1605
    %v1740 = vand.u32 2147483647, %v1605
    %vm1741 = vcmp.lt.f32.partialorder %v1740, 0.0004427343
    %v1742 = vsel %vm1741, %v1739, %v1736
    %v1743 = vadd.f32 %v1607, 1.0
    %v1744 = vlog2.pop %v1743
    %v1745 = vmul.f32 %v1744, 0.6931472
    %v1746 = vmul.f32 -0.5, %v1607
    %v1747 = vadd.f32 %v1746, 1.0
    %v1748 = vmul.f32 %v1747, %v1607
    %v1749 = vand.u32 2147483647, %v1607
    %vm1750 = vcmp.lt.f32.partialorder %v1749, 0.0004427343
    %v1751 = vsel %vm1750, %v1748, %v1745
    %v1752 = vadd.f32 %v1528, %v1616
    %v1753 = vadd.f32 %v1529, %v1625
    %v1754 = vadd.f32 %v1530, %v1634
    %v1755 = vadd.f32 %v1531, %v1643
    %v1756 = vadd.f32 %v1532, %v1652
    %v1757 = vadd.f32 %v1533, %v1661
    %v1758 = vadd.f32 %v1534, %v1670
    %v1759 = vadd.f32 %v1535, %v1679
    %v1760 = vadd.f32 %v1536, %v1688
    %v1761 = vadd.f32 %v1537, %v1697
    %v1762 = vadd.f32 %v1538, %v1706
    %v1763 = vadd.f32 %v1539, %v1715
    %v1764 = vadd.f32 %v1540, %v1724
    %v1765 = vadd.f32 %v1541, %v1733
    %v1766 = vadd.f32 %v1542, %v1742
    %v1767 = vadd.f32 %v1543, %v1751
    %v1768 = vmul.f32 %v1512, %v1752
    %v1769 = vmul.f32 %v1513, %v1753
    %v1770 = vmul.f32 %v1514, %v1754
    %v1771 = vmul.f32 %v1515, %v1755
    %v1772 = vmul.f32 %v1516, %v1756
    %v1773 = vmul.f32 %v1517, %v1757
    %v1774 = vmul.f32 %v1518, %v1758
    %v1775 = vmul.f32 %v1519, %v1759
    %v1776 = vmul.f32 %v1520, %v1760
    %v1777 = vmul.f32 %v1521, %v1761
    %v1778 = vmul.f32 %v1522, %v1762
    %v1779 = vmul.f32 %v1523, %v1763
    %v1780 = vmul.f32 %v1524, %v1764
    %v1781 = vmul.f32 %v1525, %v1765
    %v1782 = vmul.f32 %v1526, %v1766
    %v1783 = vmul.f32 %v1527, %v1767
    %1784 = vmatpush.msra.mxu0 %v1783
    %1785 = vmatpush.msra.mxu0 %v1782
    %1786 = vmatpush.msra.mxu0 %v1781
    %1787 = vmatpush.msra.mxu0 %v1780
    %1788 = vmatpush.msra.mxu0 %v1779
    %1789 = vmatpush.msra.mxu0 %v1778
    %1790 = vmatpush.msra.mxu0 %v1777
    %1791 = vmatpush.msra.mxu0 %v1776
    %1792 = vmatpush.msra.mxu0 %v1775
    %1793 = vmatpush.msra.mxu0 %v1774
    %1794 = vmatpush.msra.mxu0 %v1773
    %1795 = vmatpush.msra.mxu0 %v1772
    %1796 = vmatpush.msra.mxu0 %v1771
    %1797 = vmatpush.msra.mxu0 %v1770
    %1798 = vmatpush.msra.mxu0 %v1769
    %1799 = vmatpush.msra.mxu0 %v1768
    %1800 = vmatmul.f32.gmra.mxu0 %v367
    %v1801 = vpop.f32.mrf.mxu0
    %v1802 = vadd.f32 0.0, %v1801
    %1803 = vmatmul.f32.gmra.mxu0 %v368
    %v1804 = vpop.f32.mrf.mxu0
    %v1805 = vadd.f32 0.0, %v1804
    %1806 = vdwg.mxu0
    %v1807 = vadd.f32 %v1802, %v1805
    %v1808 = vrot.slane %v1807, 4
    %v1809 = vadd.f32 %v1807, %v1808
    %v1810 = vrot.slane %v1809, 2
    %v1811 = vadd.f32 %v1809, %v1810
    %v1812 = vrot.slane %v1811, 1
    %v1813 = vadd.f32 %v1811, %v1812
    %v1814 = vrcp.pop 16.0
    %v1815 = vmul.f32 16.0, %v1814
    %v1816 = vsub.f32 1.0, %v1815
    %v1817 = vmul.f32 %v1814, %v1816
    %v1818 = vadd.f32 %v1814, %v1817
    %vm1819 = vweird.f32 %v1814
    %v1820 = vsel %vm1819, %v1814, %v1818
    %v1821 = vmul.f32 %v1813, %v1820
    %v1822 = vmul.f32 %v1802, %v1802
    %v1823 = vmul.f32 %v1805, %v1805
    %v1824 = vadd.f32 %v1822, %v1823
    %v1825 = vrot.slane %v1824, 4
    %v1826 = vadd.f32 %v1824, %v1825
    %v1827 = vrot.slane %v1826, 2
    %v1828 = vadd.f32 %v1826, %v1827
    %v1829 = vrot.slane %v1828, 1
    %v1830 = vadd.f32 %v1828, %v1829
    %v1831 = vmul.f32 %v1830, %v1820
    %v1832 = vmul.f32 %v1821, %v1821
    %v1833 = vsub.f32 %v1831, %v1832
    %v1834 = vmax.f32 %v1833, 0.0
    %v1835 = vsub.f32 %v1802, %v1821
    %v1836 = vsub.f32 %v1805, %v1821
    %v1837 = vadd.f32 %v1834, 1e-05
    %v1838 = vrsqrt.pop %v1837
    %v1839 = vmul.f32 %v1838, %v1837
    %v1840 = vmul.f32 %v1839, %v1838
    %v1841 = vmul.f32 0.5, %v1840
    %v1842 = vsub.f32 1.5, %v1841
    %v1843 = vmul.f32 %v1838, %v1842
    %vm1844 = vweird.f32 %v1837
    %vm1845 = vweird.f32 %v1838
    %vm1846 = vmor %vm1844, %vm1845
    %v1847 = vsel %vm1846, %v1838, %v1843
    %v1848 = vmul.f32 %v1835, %v1847
    %v1849 = vmul.f32 %v1836, %v1847
    %v1851 = vperm.slane %v520, 0
    %v1853 = vmul.f32 %v1848, %v1851
    %v1854 = vmul.f32 %v1849, %v1851
    %v1856 = vperm.slane %v522, 0
    %v1858 = vadd.f32 %v1853, %v1856
    %v1859 = vadd.f32 %v1854, %v1856
    %v1860 = vadd.f32 %v409, %v1858
    %v1861 = vadd.f32 %v412, %v1859
    %v1862 = vmax.f32 %v1860, 0.0
    %v1863 = vmax.f32 %v1861, 0.0
    %v1864 = vand.u32 2147483647, %v1860
    %v1865 = vand.u32 2147483647, %v1861
    %v1866 = vsub.f32 0.0, %v1864
    %v1867 = vsub.f32 0.0, %v1865
    %v1868 = vmul.f32 %v1866, 1.442695
    %v1869 = vpow.pop %v1868
    %v1870 = vmul.f32 %v1867, 1.442695
    %v1871 = vpow.pop %v1870
    %v1872 = vadd.f32 %v1869, 1.0
    %v1873 = vlog2.pop %v1872
    %v1874 = vmul.f32 %v1873, 0.6931472
    %v1875 = vmul.f32 -0.5, %v1869
    %v1876 = vadd.f32 %v1875, 1.0
    %v1877 = vmul.f32 %v1876, %v1869
    %v1878 = vand.u32 2147483647, %v1869
    %vm1879 = vcmp.lt.f32.partialorder %v1878, 0.0004427343
    %v1880 = vsel %vm1879, %v1877, %v1874
    %v1881 = vadd.f32 %v1871, 1.0
    %v1882 = vlog2.pop %v1881
    %v1883 = vmul.f32 %v1882, 0.6931472
    %v1884 = vmul.f32 -0.5, %v1871
    %v1885 = vadd.f32 %v1884, 1.0
    %v1886 = vmul.f32 %v1885, %v1871
    %v1887 = vand.u32 2147483647, %v1871
    %vm1888 = vcmp.lt.f32.partialorder %v1887, 0.0004427343
    %v1889 = vsel %vm1888, %v1886, %v1883
    %v1890 = vadd.f32 %v1862, %v1880
    %v1891 = vadd.f32 %v1863, %v1889
    %v1892 = vld [vmem:[%s16] sm:$0xff]
    %v1893 = vld [vmem:[%s16 + $0x8] sm:$0xff]
    %v1894 = vld [vmem:[%s16 + $0x10] sm:$0xff]
    %v1895 = vld [vmem:[%s16 + $0x18] sm:$0xff]
    %v1896 = vld [vmem:[%s16 + $0x20] sm:$0xff]
    %v1897 = vld [vmem:[%s16 + $0x28] sm:$0xff]
    %v1898 = vld [vmem:[%s16 + $0x30] sm:$0xff]
    %v1899 = vld [vmem:[%s16 + $0x38] sm:$0xff]
    %v1900 = vld [vmem:[%s16 + $0x40] sm:$0xff]
    %v1901 = vld [vmem:[%s16 + $0x48] sm:$0xff]
    %v1902 = vld [vmem:[%s16 + $0x50] sm:$0xff]
    %v1903 = vld [vmem:[%s16 + $0x58] sm:$0xff]
    %v1904 = vld [vmem:[%s16 + $0x60] sm:$0xff]
    %v1905 = vld [vmem:[%s16 + $0x68] sm:$0xff]
    %v1906 = vld [vmem:[%s16 + $0x70] sm:$0xff]
    %v1907 = vld [vmem:[%s16 + $0x78] sm:$0xff]
    %v1908 = vld [vmem:[%s16 + $0x80] sm:$0xff]
    %v1909 = vld [vmem:[%s16 + $0x88] sm:$0xff]
    %v1910 = vld [vmem:[%s16 + $0x90] sm:$0xff]
    %v1911 = vld [vmem:[%s16 + $0x98] sm:$0xff]
    %v1912 = vld [vmem:[%s16 + $0xa0] sm:$0xff]
    %v1913 = vld [vmem:[%s16 + $0xa8] sm:$0xff]
    %v1914 = vld [vmem:[%s16 + $0xb0] sm:$0xff]
    %v1915 = vld [vmem:[%s16 + $0xb8] sm:$0xff]
    %v1916 = vld [vmem:[%s16 + $0xc0] sm:$0xff]
    %v1917 = vld [vmem:[%s16 + $0xc8] sm:$0xff]
    %v1918 = vld [vmem:[%s16 + $0xd0] sm:$0xff]
    %v1919 = vld [vmem:[%s16 + $0xd8] sm:$0xff]
    %v1920 = vld [vmem:[%s16 + $0xe0] sm:$0xff]
    %v1921 = vld [vmem:[%s16 + $0xe8] sm:$0xff]
    %v1922 = vld [vmem:[%s16 + $0xf0] sm:$0xff]
    %v1923 = vld [vmem:[%s16 + $0xf8] sm:$0xff]
    %v1924 = vld [vmem:[#allocation20] sm:$0xff]
    %v1925 = vld [vmem:[#allocation20 + $0x8] sm:$0xff]
    %v1926 = vld [vmem:[#allocation20 + $0x10] sm:$0xff]
    %v1927 = vld [vmem:[#allocation20 + $0x18] sm:$0xff]
    %v1928 = vld [vmem:[#allocation20 + $0x20] sm:$0xff]
    %v1929 = vld [vmem:[#allocation20 + $0x28] sm:$0xff]
    %v1930 = vld [vmem:[#allocation20 + $0x30] sm:$0xff]
    %v1931 = vld [vmem:[#allocation20 + $0x38] sm:$0xff]
    %v1932 = vld [vmem:[#allocation20 + $0x40] sm:$0xff]
    %v1933 = vld [vmem:[#allocation20 + $0x48] sm:$0xff]
    %v1934 = vld [vmem:[#allocation20 + $0x50] sm:$0xff]
    %v1935 = vld [vmem:[#allocation20 + $0x58] sm:$0xff]
    %v1936 = vld [vmem:[#allocation20 + $0x60] sm:$0xff]
    %v1937 = vld [vmem:[#allocation20 + $0x68] sm:$0xff]
    %v1938 = vld [vmem:[#allocation20 + $0x70] sm:$0xff]
    %v1939 = vld [vmem:[#allocation20 + $0x78] sm:$0xff]
    %v1940 = vld [vmem:[#allocation20 + $0x80] sm:$0xff]
    %v1941 = vld [vmem:[#allocation20 + $0x88] sm:$0xff]
    %v1942 = vld [vmem:[#allocation20 + $0x90] sm:$0xff]
    %v1943 = vld [vmem:[#allocation20 + $0x98] sm:$0xff]
    %v1944 = vld [vmem:[#allocation20 + $0xa0] sm:$0xff]
    %v1945 = vld [vmem:[#allocation20 + $0xa8] sm:$0xff]
    %v1946 = vld [vmem:[#allocation20 + $0xb0] sm:$0xff]
    %v1947 = vld [vmem:[#allocation20 + $0xb8] sm:$0xff]
    %v1948 = vld [vmem:[#allocation20 + $0xc0] sm:$0xff]
    %v1949 = vld [vmem:[#allocation20 + $0xc8] sm:$0xff]
    %v1950 = vld [vmem:[#allocation20 + $0xd0] sm:$0xff]
    %v1951 = vld [vmem:[#allocation20 + $0xd8] sm:$0xff]
    %v1952 = vld [vmem:[#allocation20 + $0xe0] sm:$0xff]
    %v1953 = vld [vmem:[#allocation20 + $0xe8] sm:$0xff]
    %v1954 = vld [vmem:[#allocation20 + $0xf0] sm:$0xff]
    %v1955 = vld [vmem:[#allocation20 + $0xf8] sm:$0xff]
    %v1956 = vld [vmem:[#allocation22] sm:$0xff]
    %v1957 = vld [vmem:[#allocation22 + $0x8] sm:$0xff]
    %v1958 = vld [vmem:[#allocation22 + $0x10] sm:$0xff]
    %v1959 = vld [vmem:[#allocation22 + $0x18] sm:$0xff]
    %v1960 = vld [vmem:[#allocation22 + $0x20] sm:$0xff]
    %v1961 = vld [vmem:[#allocation22 + $0x28] sm:$0xff]
    %v1962 = vld [vmem:[#allocation22 + $0x30] sm:$0xff]
    %v1963 = vld [vmem:[#allocation22 + $0x38] sm:$0xff]
    %v1964 = vld [vmem:[#allocation22 + $0x40] sm:$0xff]
    %v1965 = vld [vmem:[#allocation22 + $0x48] sm:$0xff]
    %v1966 = vld [vmem:[#allocation22 + $0x50] sm:$0xff]
    %v1967 = vld [vmem:[#allocation22 + $0x58] sm:$0xff]
    %v1968 = vld [vmem:[#allocation22 + $0x60] sm:$0xff]
    %v1969 = vld [vmem:[#allocation22 + $0x68] sm:$0xff]
    %v1970 = vld [vmem:[#allocation22 + $0x70] sm:$0xff]
    %v1971 = vld [vmem:[#allocation22 + $0x78] sm:$0xff]
    %v1972 = vld [vmem:[#allocation22 + $0x80] sm:$0xff]
    %v1973 = vld [vmem:[#allocation22 + $0x88] sm:$0xff]
    %v1974 = vld [vmem:[#allocation22 + $0x90] sm:$0xff]
    %v1975 = vld [vmem:[#allocation22 + $0x98] sm:$0xff]
    %v1976 = vld [vmem:[#allocation22 + $0xa0] sm:$0xff]
    %v1977 = vld [vmem:[#allocation22 + $0xa8] sm:$0xff]
    %v1978 = vld [vmem:[#allocation22 + $0xb0] sm:$0xff]
    %v1979 = vld [vmem:[#allocation22 + $0xb8] sm:$0xff]
    %v1980 = vld [vmem:[#allocation22 + $0xc0] sm:$0xff]
    %v1981 = vld [vmem:[#allocation22 + $0xc8] sm:$0xff]
    %v1982 = vld [vmem:[#allocation22 + $0xd0] sm:$0xff]
    %v1983 = vld [vmem:[#allocation22 + $0xd8] sm:$0xff]
    %v1984 = vld [vmem:[#allocation22 + $0xe0] sm:$0xff]
    %v1985 = vld [vmem:[#allocation22 + $0xe8] sm:$0xff]
    %v1986 = vld [vmem:[#allocation22 + $0xf0] sm:$0xff]
    %v1987 = vld [vmem:[#allocation22 + $0xf8] sm:$0xff]
    %v1988 = vld [vmem:[%s19] sm:$0x3]
    %v1989 = vld [vmem:[%s20] sm:$0x3]
    %v1990 = vld [vmem:[%s21] sm:$0x3]
    %v1991 = vld [vmem:[%s22] sm:$0x1]
    %v1992 = vld [vmem:[%s23] sm:$0x1]
    %1993 = vmatpush.msra.mxu0 %v1922
    %1994 = vmatpush.msra.mxu0 %v1920
    %1995 = vmatpush.msra.mxu0 %v1918
    %1996 = vmatpush.msra.mxu0 %v1916
    %1997 = vmatpush.msra.mxu0 %v1914
    %1998 = vmatpush.msra.mxu0 %v1912
    %1999 = vmatpush.msra.mxu0 %v1910
    %2000 = vmatpush.msra.mxu0 %v1908
    %2001 = vmatpush.msra.mxu0 %v1906
    %2002 = vmatpush.msra.mxu0 %v1904
    %2003 = vmatpush.msra.mxu0 %v1902
    %2004 = vmatpush.msra.mxu0 %v1900
    %2005 = vmatpush.msra.mxu0 %v1898
    %2006 = vmatpush.msra.mxu0 %v1896
    %2007 = vmatpush.msra.mxu0 %v1894
    %2008 = vmatpush.msra.mxu0 %v1892
    %2009 = vmatmul.f32.gmra.mxu0 %v1890
    %v2010 = vpop.f32.mrf.mxu0
    %v2011 = vadd.f32 0.0, %v2010
    %2012 = vmatmul.f32.gmra.mxu0 %v1891
    %v2013 = vpop.f32.mrf.mxu0
    %v2014 = vadd.f32 0.0, %v2013
    %2015 = vdwg.mxu0
    %2016 = vmatpush.msra.mxu0 %v1923
    %2017 = vmatpush.msra.mxu0 %v1921
    %2018 = vmatpush.msra.mxu0 %v1919
    %2019 = vmatpush.msra.mxu0 %v1917
    %2020 = vmatpush.msra.mxu0 %v1915
    %2021 = vmatpush.msra.mxu0 %v1913
    %2022 = vmatpush.msra.mxu0 %v1911
    %2023 = vmatpush.msra.mxu0 %v1909
    %2024 = vmatpush.msra.mxu0 %v1907
    %2025 = vmatpush.msra.mxu0 %v1905
    %2026 = vmatpush.msra.mxu0 %v1903
    %2027 = vmatpush.msra.mxu0 %v1901
    %2028 = vmatpush.msra.mxu0 %v1899
    %2029 = vmatpush.msra.mxu0 %v1897
    %2030 = vmatpush.msra.mxu0 %v1895
    %2031 = vmatpush.msra.mxu0 %v1893
    %2032 = vmatmul.f32.gmra.mxu0 %v1890
    %v2033 = vpop.f32.mrf.mxu0
    %v2034 = vadd.f32 0.0, %v2033
    %2035 = vmatmul.f32.gmra.mxu0 %v1891
    %v2036 = vpop.f32.mrf.mxu0
    %v2037 = vadd.f32 0.0, %v2036
    %2038 = vdwg.mxu0
    %2039 = vmatpush.msra.mxu0 %v1954
    %2040 = vmatpush.msra.mxu0 %v1952
    %2041 = vmatpush.msra.mxu0 %v1950
    %2042 = vmatpush.msra.mxu0 %v1948
    %2043 = vmatpush.msra.mxu0 %v1946
    %2044 = vmatpush.msra.mxu0 %v1944
    %2045 = vmatpush.msra.mxu0 %v1942
    %2046 = vmatpush.msra.mxu0 %v1940
    %2047 = vmatpush.msra.mxu0 %v1938
    %2048 = vmatpush.msra.mxu0 %v1936
    %2049 = vmatpush.msra.mxu0 %v1934
    %2050 = vmatpush.msra.mxu0 %v1932
    %2051 = vmatpush.msra.mxu0 %v1930
    %2052 = vmatpush.msra.mxu0 %v1928
    %2053 = vmatpush.msra.mxu0 %v1926
    %2054 = vmatpush.msra.mxu0 %v1924
    %2055 = vmatmul.f32.gmra.mxu0 %v1890
    %v2056 = vpop.f32.mrf.mxu0
    %v2057 = vadd.f32 0.0, %v2056
    %2058 = vmatmul.f32.gmra.mxu0 %v1891
    %v2059 = vpop.f32.mrf.mxu0
    %v2060 = vadd.f32 0.0, %v2059
    %2061 = vdwg.mxu0
    %2062 = vmatpush.msra.mxu0 %v1955
    %2063 = vmatpush.msra.mxu0 %v1953
    %2064 = vmatpush.msra.mxu0 %v1951
    %2065 = vmatpush.msra.mxu0 %v1949
    %2066 = vmatpush.msra.mxu0 %v1947
    %2067 = vmatpush.msra.mxu0 %v1945
    %2068 = vmatpush.msra.mxu0 %v1943
    %2069 = vmatpush.msra.mxu0 %v1941
    %2070 = vmatpush.msra.mxu0 %v1939
    %2071 = vmatpush.msra.mxu0 %v1937
    %2072 = vmatpush.msra.mxu0 %v1935
    %2073 = vmatpush.msra.mxu0 %v1933
    %2074 = vmatpush.msra.mxu0 %v1931
    %2075 = vmatpush.msra.mxu0 %v1929
    %2076 = vmatpush.msra.mxu0 %v1927
    %2077 = vmatpush.msra.mxu0 %v1925
    %2078 = vmatmul.f32.gmra.mxu0 %v1890
    %v2079 = vpop.f32.mrf.mxu0
    %v2080 = vadd.f32 0.0, %v2079
    %2081 = vmatmul.f32.gmra.mxu0 %v1891
    %v2082 = vpop.f32.mrf.mxu0
    %v2083 = vadd.f32 0.0, %v2082
    %2084 = vdwg.mxu0
    %2085 = vmatpush.msra.mxu0 0.0
    %2086 = vmatpush.msra.mxu0 0.0
    %2087 = vmatpush.msra.mxu0 0.0
    %2088 = vmatpush.msra.mxu0 0.0
    %2089 = vmatpush.msra.mxu0 0.0
    %2090 = vmatpush.msra.mxu0 0.0
    %2091 = vmatpush.msra.mxu0 0.0
    %2092 = vmatpush.msra.mxu0 0.0
    %2093 = vmatpush.msra.mxu0 0.0
    %2094 = vmatpush.msra.mxu0 0.0
    %2095 = vmatpush.msra.mxu0 0.0
    %2096 = vmatpush.msra.mxu0 0.0
    %2097 = vmatpush.msra.mxu0 0.0
    %2098 = vmatpush.msra.mxu0 0.0
    %2099 = vmatpush.msra.mxu0 %v2060
    %2100 = vmatpush.msra.mxu0 %v2057
    %2101 = vmatmul.f32.gmra.mxu0 %v617
    %v2102 = vpop.f32.mrf.mxu0
    %v2103 = vadd.f32 0.0, %v2102
    %2104 = vmatmul.f32.gmra.mxu0 %v620
    %v2105 = vpop.f32.mrf.mxu0
    %v2106 = vadd.f32 0.0, %v2105
    %2107 = vmatmul.f32.gmra.mxu0 %v623
    %v2108 = vpop.f32.mrf.mxu0
    %v2109 = vadd.f32 0.0, %v2108
    %2110 = vmatmul.f32.gmra.mxu0 %v626
    %v2111 = vpop.f32.mrf.mxu0
    %v2112 = vadd.f32 0.0, %v2111
    %2113 = vmatmul.f32.gmra.mxu0 %v629
    %v2114 = vpop.f32.mrf.mxu0
    %v2115 = vadd.f32 0.0, %v2114
    %2116 = vmatmul.f32.gmra.mxu0 %v632
    %v2117 = vpop.f32.mrf.mxu0
    %v2118 = vadd.f32 0.0, %v2117
    %2119 = vmatmul.f32.gmra.mxu0 %v635
    %v2120 = vpop.f32.mrf.mxu0
    %v2121 = vadd.f32 0.0, %v2120
    %2122 = vmatmul.f32.gmra.mxu0 %v638
    %v2123 = vpop.f32.mrf.mxu0
    %v2124 = vadd.f32 0.0, %v2123
    %2125 = vmatmul.f32.gmra.mxu0 %v641
    %v2126 = vpop.f32.mrf.mxu0
    %v2127 = vadd.f32 0.0, %v2126
    %2128 = vmatmul.f32.gmra.mxu0 %v644
    %v2129 = vpop.f32.mrf.mxu0
    %v2130 = vadd.f32 0.0, %v2129
    %2131 = vmatmul.f32.gmra.mxu0 %v647
    %v2132 = vpop.f32.mrf.mxu0
    %v2133 = vadd.f32 0.0, %v2132
    %2134 = vmatmul.f32.gmra.mxu0 %v650
    %v2135 = vpop.f32.mrf.mxu0
    %v2136 = vadd.f32 0.0, %v2135
    %2137 = vmatmul.f32.gmra.mxu0 %v653
    %v2138 = vpop.f32.mrf.mxu0
    %v2139 = vadd.f32 0.0, %v2138
    %2140 = vmatmul.f32.gmra.mxu0 %v656
    %v2141 = vpop.f32.mrf.mxu0
    %v2142 = vadd.f32 0.0, %v2141
    %2143 = vmatmul.f32.gmra.mxu0 %v659
    %v2144 = vpop.f32.mrf.mxu0
    %v2145 = vadd.f32 0.0, %v2144
    %2146 = vmatmul.f32.gmra.mxu0 %v662
    %v2147 = vpop.f32.mrf.mxu0
    %v2148 = vadd.f32 0.0, %v2147
    %2149 = vdwg.mxu0
    %2150 = vmatpush.msra.mxu0 0.0
    %2151 = vmatpush.msra.mxu0 0.0
    %2152 = vmatpush.msra.mxu0 0.0
    %2153 = vmatpush.msra.mxu0 0.0
    %2154 = vmatpush.msra.mxu0 0.0
    %2155 = vmatpush.msra.mxu0 0.0
    %2156 = vmatpush.msra.mxu0 0.0
    %2157 = vmatpush.msra.mxu0 0.0
    %2158 = vmatpush.msra.mxu0 0.0
    %2159 = vmatpush.msra.mxu0 0.0
    %2160 = vmatpush.msra.mxu0 0.0
    %2161 = vmatpush.msra.mxu0 0.0
    %2162 = vmatpush.msra.mxu0 0.0
    %2163 = vmatpush.msra.mxu0 0.0
    %2164 = vmatpush.msra.mxu0 %v2083
    %2165 = vmatpush.msra.mxu0 %v2080
    %2166 = vmatmul.f32.gmra.mxu0 %v617
    %v2167 = vpop.f32.mrf.mxu0
    %v2168 = vadd.f32 0.0, %v2167
    %2169 = vmatmul.f32.gmra.mxu0 %v620
    %v2170 = vpop.f32.mrf.mxu0
    %v2171 = vadd.f32 0.0, %v2170
    %2172 = vmatmul.f32.gmra.mxu0 %v623
    %v2173 = vpop.f32.mrf.mxu0
    %v2174 = vadd.f32 0.0, %v2173
    %2175 = vmatmul.f32.gmra.mxu0 %v626
    %v2176 = vpop.f32.mrf.mxu0
    %v2177 = vadd.f32 0.0, %v2176
    %2178 = vmatmul.f32.gmra.mxu0 %v629
    %v2179 = vpop.f32.mrf.mxu0
    %v2180 = vadd.f32 0.0, %v2179
    %2181 = vmatmul.f32.gmra.mxu0 %v632
    %v2182 = vpop.f32.mrf.mxu0
    %v2183 = vadd.f32 0.0, %v2182
    %2184 = vmatmul.f32.gmra.mxu0 %v635
    %v2185 = vpop.f32.mrf.mxu0
    %v2186 = vadd.f32 0.0, %v2185
    %2187 = vmatmul.f32.gmra.mxu0 %v638
    %v2188 = vpop.f32.mrf.mxu0
    %v2189 = vadd.f32 0.0, %v2188
    %2190 = vmatmul.f32.gmra.mxu0 %v641
    %v2191 = vpop.f32.mrf.mxu0
    %v2192 = vadd.f32 0.0, %v2191
    %2193 = vmatmul.f32.gmra.mxu0 %v644
    %v2194 = vpop.f32.mrf.mxu0
    %v2195 = vadd.f32 0.0, %v2194
    %2196 = vmatmul.f32.gmra.mxu0 %v647
    %v2197 = vpop.f32.mrf.mxu0
    %v2198 = vadd.f32 0.0, %v2197
    %2199 = vmatmul.f32.gmra.mxu0 %v650
    %v2200 = vpop.f32.mrf.mxu0
    %v2201 = vadd.f32 0.0, %v2200
    %2202 = vmatmul.f32.gmra.mxu0 %v653
    %v2203 = vpop.f32.mrf.mxu0
    %v2204 = vadd.f32 0.0, %v2203
    %2205 = vmatmul.f32.gmra.mxu0 %v656
    %v2206 = vpop.f32.mrf.mxu0
    %v2207 = vadd.f32 0.0, %v2206
    %2208 = vmatmul.f32.gmra.mxu0 %v659
    %v2209 = vpop.f32.mrf.mxu0
    %v2210 = vadd.f32 0.0, %v2209
    %2211 = vmatmul.f32.gmra.mxu0 %v662
    %v2212 = vpop.f32.mrf.mxu0
    %v2213 = vadd.f32 0.0, %v2212
    %2214 = vdwg.mxu0
    %2215 = vmatpush.msra.mxu0 0.0
    %2216 = vmatpush.msra.mxu0 0.0
    %2217 = vmatpush.msra.mxu0 0.0
    %2218 = vmatpush.msra.mxu0 0.0
    %2219 = vmatpush.msra.mxu0 0.0
    %2220 = vmatpush.msra.mxu0 0.0
    %2221 = vmatpush.msra.mxu0 0.0
    %2222 = vmatpush.msra.mxu0 0.0
    %2223 = vmatpush.msra.mxu0 0.0
    %2224 = vmatpush.msra.mxu0 0.0
    %2225 = vmatpush.msra.mxu0 0.0
    %2226 = vmatpush.msra.mxu0 0.0
    %2227 = vmatpush.msra.mxu0 0.0
    %2228 = vmatpush.msra.mxu0 0.0
    %2229 = vmatpush.msra.mxu0 %v2014
    %2230 = vmatpush.msra.mxu0 %v2011
    %2231 = vmatmul.f32.gmra.mxu0 %v795
    %v2232 = vpop.f32.mrf.mxu0
    %v2233 = vadd.f32 %v2103, %v2232
    %2234 = vmatmul.f32.gmra.mxu0 %v798
    %v2235 = vpop.f32.mrf.mxu0
    %v2236 = vadd.f32 %v2106, %v2235
    %2237 = vmatmul.f32.gmra.mxu0 %v801
    %v2238 = vpop.f32.mrf.mxu0
    %v2239 = vadd.f32 %v2109, %v2238
    %2240 = vmatmul.f32.gmra.mxu0 %v804
    %v2241 = vpop.f32.mrf.mxu0
    %v2242 = vadd.f32 %v2112, %v2241
    %2243 = vmatmul.f32.gmra.mxu0 %v807
    %v2244 = vpop.f32.mrf.mxu0
    %v2245 = vadd.f32 %v2115, %v2244
    %2246 = vmatmul.f32.gmra.mxu0 %v810
    %v2247 = vpop.f32.mrf.mxu0
    %v2248 = vadd.f32 %v2118, %v2247
    %2249 = vmatmul.f32.gmra.mxu0 %v813
    %v2250 = vpop.f32.mrf.mxu0
    %v2251 = vadd.f32 %v2121, %v2250
    %2252 = vmatmul.f32.gmra.mxu0 %v816
    %v2253 = vpop.f32.mrf.mxu0
    %v2254 = vadd.f32 %v2124, %v2253
    %2255 = vmatmul.f32.gmra.mxu0 %v819
    %v2256 = vpop.f32.mrf.mxu0
    %v2257 = vadd.f32 %v2127, %v2256
    %2258 = vmatmul.f32.gmra.mxu0 %v822
    %v2259 = vpop.f32.mrf.mxu0
    %v2260 = vadd.f32 %v2130, %v2259
    %2261 = vmatmul.f32.gmra.mxu0 %v825
    %v2262 = vpop.f32.mrf.mxu0
    %v2263 = vadd.f32 %v2133, %v2262
    %2264 = vmatmul.f32.gmra.mxu0 %v828
    %v2265 = vpop.f32.mrf.mxu0
    %v2266 = vadd.f32 %v2136, %v2265
    %2267 = vmatmul.f32.gmra.mxu0 %v831
    %v2268 = vpop.f32.mrf.mxu0
    %v2269 = vadd.f32 %v2139, %v2268
    %2270 = vmatmul.f32.gmra.mxu0 %v834
    %v2271 = vpop.f32.mrf.mxu0
    %v2272 = vadd.f32 %v2142, %v2271
    %2273 = vmatmul.f32.gmra.mxu0 %v837
    %v2274 = vpop.f32.mrf.mxu0
    %v2275 = vadd.f32 %v2145, %v2274
    %2276 = vmatmul.f32.gmra.mxu0 %v840
    %v2277 = vpop.f32.mrf.mxu0
    %v2278 = vadd.f32 %v2148, %v2277
    %2279 = vdwg.mxu0
    %2280 = vmatpush.msra.mxu0 0.0
    %2281 = vmatpush.msra.mxu0 0.0
    %2282 = vmatpush.msra.mxu0 0.0
    %2283 = vmatpush.msra.mxu0 0.0
    %2284 = vmatpush.msra.mxu0 0.0
    %2285 = vmatpush.msra.mxu0 0.0
    %2286 = vmatpush.msra.mxu0 0.0
    %2287 = vmatpush.msra.mxu0 0.0
    %2288 = vmatpush.msra.mxu0 0.0
    %2289 = vmatpush.msra.mxu0 0.0
    %2290 = vmatpush.msra.mxu0 0.0
    %2291 = vmatpush.msra.mxu0 0.0
    %2292 = vmatpush.msra.mxu0 0.0
    %2293 = vmatpush.msra.mxu0 0.0
    %2294 = vmatpush.msra.mxu0 %v2037
    %2295 = vmatpush.msra.mxu0 %v2034
    %2296 = vmatmul.f32.gmra.mxu0 %v795
    %v2297 = vpop.f32.mrf.mxu0
    %v2298 = vadd.f32 %v2168, %v2297
    %2299 = vmatmul.f32.gmra.mxu0 %v798
    %v2300 = vpop.f32.mrf.mxu0
    %v2301 = vadd.f32 %v2171, %v2300
    %2302 = vmatmul.f32.gmra.mxu0 %v801
    %v2303 = vpop.f32.mrf.mxu0
    %v2304 = vadd.f32 %v2174, %v2303
    %2305 = vmatmul.f32.gmra.mxu0 %v804
    %v2306 = vpop.f32.mrf.mxu0
    %v2307 = vadd.f32 %v2177, %v2306
    %2308 = vmatmul.f32.gmra.mxu0 %v807
    %v2309 = vpop.f32.mrf.mxu0
    %v2310 = vadd.f32 %v2180, %v2309
    %2311 = vmatmul.f32.gmra.mxu0 %v810
    %v2312 = vpop.f32.mrf.mxu0
    %v2313 = vadd.f32 %v2183, %v2312
    %2314 = vmatmul.f32.gmra.mxu0 %v813
    %v2315 = vpop.f32.mrf.mxu0
    %v2316 = vadd.f32 %v2186, %v2315
    %2317 = vmatmul.f32.gmra.mxu0 %v816
    %v2318 = vpop.f32.mrf.mxu0
    %v2319 = vadd.f32 %v2189, %v2318
    %2320 = vmatmul.f32.gmra.mxu0 %v819
    %v2321 = vpop.f32.mrf.mxu0
    %v2322 = vadd.f32 %v2192, %v2321
    %2323 = vmatmul.f32.gmra.mxu0 %v822
    %v2324 = vpop.f32.mrf.mxu0
    %v2325 = vadd.f32 %v2195, %v2324
    %2326 = vmatmul.f32.gmra.mxu0 %v825
    %v2327 = vpop.f32.mrf.mxu0
    %v2328 = vadd.f32 %v2198, %v2327
    %2329 = vmatmul.f32.gmra.mxu0 %v828
    %v2330 = vpop.f32.mrf.mxu0
    %v2331 = vadd.f32 %v2201, %v2330
    %2332 = vmatmul.f32.gmra.mxu0 %v831
    %v2333 = vpop.f32.mrf.mxu0
    %v2334 = vadd.f32 %v2204, %v2333
    %2335 = vmatmul.f32.gmra.mxu0 %v834
    %v2336 = vpop.f32.mrf.mxu0
    %v2337 = vadd.f32 %v2207, %v2336
    %2338 = vmatmul.f32.gmra.mxu0 %v837
    %v2339 = vpop.f32.mrf.mxu0
    %v2340 = vadd.f32 %v2210, %v2339
    %2341 = vmatmul.f32.gmra.mxu0 %v840
    %v2342 = vpop.f32.mrf.mxu0
    %v2343 = vadd.f32 %v2213, %v2342
    %2344 = vdwg.mxu0
    %2345 = vmatpush.msra.mxu0 %v1986
    %2346 = vmatpush.msra.mxu0 %v1984
    %2347 = vmatpush.msra.mxu0 %v1982
    %2348 = vmatpush.msra.mxu0 %v1980
    %2349 = vmatpush.msra.mxu0 %v1978
    %2350 = vmatpush.msra.mxu0 %v1976
    %2351 = vmatpush.msra.mxu0 %v1974
    %2352 = vmatpush.msra.mxu0 %v1972
    %2353 = vmatpush.msra.mxu0 %v1970
    %2354 = vmatpush.msra.mxu0 %v1968
    %2355 = vmatpush.msra.mxu0 %v1966
    %2356 = vmatpush.msra.mxu0 %v1964
    %2357 = vmatpush.msra.mxu0 %v1962
    %2358 = vmatpush.msra.mxu0 %v1960
    %2359 = vmatpush.msra.mxu0 %v1958
    %2360 = vmatpush.msra.mxu0 %v1956
    %2361 = vmatmul.f32.gmra.mxu0 %v351
    %v2362 = vpop.f32.mrf.mxu0
    %v2363 = vadd.f32 0.0, %v2362
    %2364 = vmatmul.f32.gmra.mxu0 %v352
    %v2365 = vpop.f32.mrf.mxu0
    %v2366 = vadd.f32 0.0, %v2365
    %2367 = vmatmul.f32.gmra.mxu0 %v353
    %v2368 = vpop.f32.mrf.mxu0
    %v2369 = vadd.f32 0.0, %v2368
    %2370 = vmatmul.f32.gmra.mxu0 %v354
    %v2371 = vpop.f32.mrf.mxu0
    %v2372 = vadd.f32 0.0, %v2371
    %2373 = vmatmul.f32.gmra.mxu0 %v355
    %v2374 = vpop.f32.mrf.mxu0
    %v2375 = vadd.f32 0.0, %v2374
    %2376 = vmatmul.f32.gmra.mxu0 %v356
    %v2377 = vpop.f32.mrf.mxu0
    %v2378 = vadd.f32 0.0, %v2377
    %2379 = vmatmul.f32.gmra.mxu0 %v357
    %v2380 = vpop.f32.mrf.mxu0
    %v2381 = vadd.f32 0.0, %v2380
    %2382 = vmatmul.f32.gmra.mxu0 %v358
    %v2383 = vpop.f32.mrf.mxu0
    %v2384 = vadd.f32 0.0, %v2383
    %2385 = vmatmul.f32.gmra.mxu0 %v359
    %v2386 = vpop.f32.mrf.mxu0
    %v2387 = vadd.f32 0.0, %v2386
    %2388 = vmatmul.f32.gmra.mxu0 %v360
    %v2389 = vpop.f32.mrf.mxu0
    %v2390 = vadd.f32 0.0, %v2389
    %2391 = vmatmul.f32.gmra.mxu0 %v361
    %v2392 = vpop.f32.mrf.mxu0
    %v2393 = vadd.f32 0.0, %v2392
    %2394 = vmatmul.f32.gmra.mxu0 %v362
    %v2395 = vpop.f32.mrf.mxu0
    %v2396 = vadd.f32 0.0, %v2395
    %2397 = vmatmul.f32.gmra.mxu0 %v363
    %v2398 = vpop.f32.mrf.mxu0
    %v2399 = vadd.f32 0.0, %v2398
    %2400 = vmatmul.f32.gmra.mxu0 %v364
    %v2401 = vpop.f32.mrf.mxu0
    %v2402 = vadd.f32 0.0, %v2401
    %2403 = vmatmul.f32.gmra.mxu0 %v365
    %v2404 = vpop.f32.mrf.mxu0
    %v2405 = vadd.f32 0.0, %v2404
    %2406 = vmatmul.f32.gmra.mxu0 %v366
    %v2407 = vpop.f32.mrf.mxu0
    %v2408 = vadd.f32 0.0, %v2407
    %2409 = vdwg.mxu0
    %2410 = vmatpush.msra.mxu0 %v1987
    %2411 = vmatpush.msra.mxu0 %v1985
    %2412 = vmatpush.msra.mxu0 %v1983
    %2413 = vmatpush.msra.mxu0 %v1981
    %2414 = vmatpush.msra.mxu0 %v1979
    %2415 = vmatpush.msra.mxu0 %v1977
    %2416 = vmatpush.msra.mxu0 %v1975
    %2417 = vmatpush.msra.mxu0 %v1973
    %2418 = vmatpush.msra.mxu0 %v1971
    %2419 = vmatpush.msra.mxu0 %v1969
    %2420 = vmatpush.msra.mxu0 %v1967
    %2421 = vmatpush.msra.mxu0 %v1965
    %2422 = vmatpush.msra.mxu0 %v1963
    %2423 = vmatpush.msra.mxu0 %v1961
    %2424 = vmatpush.msra.mxu0 %v1959
    %2425 = vmatpush.msra.mxu0 %v1957
    %2426 = vmatmul.f32.gmra.mxu0 %v351
    %v2427 = vpop.f32.mrf.mxu0
    %v2428 = vadd.f32 0.0, %v2427
    %2429 = vmatmul.f32.gmra.mxu0 %v352
    %v2430 = vpop.f32.mrf.mxu0
    %v2431 = vadd.f32 0.0, %v2430
    %2432 = vmatmul.f32.gmra.mxu0 %v353
    %v2433 = vpop.f32.mrf.mxu0
    %v2434 = vadd.f32 0.0, %v2433
    %2435 = vmatmul.f32.gmra.mxu0 %v354
    %v2436 = vpop.f32.mrf.mxu0
    %v2437 = vadd.f32 0.0, %v2436
    %2438 = vmatmul.f32.gmra.mxu0 %v355
    %v2439 = vpop.f32.mrf.mxu0
    %v2440 = vadd.f32 0.0, %v2439
    %2441 = vmatmul.f32.gmra.mxu0 %v356
    %v2442 = vpop.f32.mrf.mxu0
    %v2443 = vadd.f32 0.0, %v2442
    %2444 = vmatmul.f32.gmra.mxu0 %v357
    %v2445 = vpop.f32.mrf.mxu0
    %v2446 = vadd.f32 0.0, %v2445
    %2447 = vmatmul.f32.gmra.mxu0 %v358
    %v2448 = vpop.f32.mrf.mxu0
    %v2449 = vadd.f32 0.0, %v2448
    %2450 = vmatmul.f32.gmra.mxu0 %v359
    %v2451 = vpop.f32.mrf.mxu0
    %v2452 = vadd.f32 0.0, %v2451
    %2453 = vmatmul.f32.gmra.mxu0 %v360
    %v2454 = vpop.f32.mrf.mxu0
    %v2455 = vadd.f32 0.0, %v2454
    %2456 = vmatmul.f32.gmra.mxu0 %v361
    %v2457 = vpop.f32.mrf.mxu0
    %v2458 = vadd.f32 0.0, %v2457
    %2459 = vmatmul.f32.gmra.mxu0 %v362
    %v2460 = vpop.f32.mrf.mxu0
    %v2461 = vadd.f32 0.0, %v2460
    %2462 = vmatmul.f32.gmra.mxu0 %v363
    %v2463 = vpop.f32.mrf.mxu0
    %v2464 = vadd.f32 0.0, %v2463
    %2465 = vmatmul.f32.gmra.mxu0 %v364
    %v2466 = vpop.f32.mrf.mxu0
    %v2467 = vadd.f32 0.0, %v2466
    %2468 = vmatmul.f32.gmra.mxu0 %v365
    %v2469 = vpop.f32.mrf.mxu0
    %v2470 = vadd.f32 0.0, %v2469
    %2471 = vmatmul.f32.gmra.mxu0 %v366
    %v2472 = vpop.f32.mrf.mxu0
    %v2473 = vadd.f32 0.0, %v2472
    %2474 = vdwg.mxu0
    %v2475 = vadd.f32 %v2233, %v2363
    %v2476 = vadd.f32 %v2298, %v2428
    %v2477 = vadd.f32 %v2236, %v2366
    %v2478 = vadd.f32 %v2301, %v2431
    %v2479 = vadd.f32 %v2239, %v2369
    %v2480 = vadd.f32 %v2304, %v2434
    %v2481 = vadd.f32 %v2242, %v2372
    %v2482 = vadd.f32 %v2307, %v2437
    %v2483 = vadd.f32 %v2245, %v2375
    %v2484 = vadd.f32 %v2310, %v2440
    %v2485 = vadd.f32 %v2248, %v2378
    %v2486 = vadd.f32 %v2313, %v2443
    %v2487 = vadd.f32 %v2251, %v2381
    %v2488 = vadd.f32 %v2316, %v2446
    %v2489 = vadd.f32 %v2254, %v2384
    %v2490 = vadd.f32 %v2319, %v2449
    %v2491 = vadd.f32 %v2257, %v2387
    %v2492 = vadd.f32 %v2322, %v2452
    %v2493 = vadd.f32 %v2260, %v2390
    %v2494 = vadd.f32 %v2325, %v2455
    %v2495 = vadd.f32 %v2263, %v2393
    %v2496 = vadd.f32 %v2328, %v2458
    %v2497 = vadd.f32 %v2266, %v2396
    %v2498 = vadd.f32 %v2331, %v2461
    %v2499 = vadd.f32 %v2269, %v2399
    %v2500 = vadd.f32 %v2334, %v2464
    %v2501 = vadd.f32 %v2272, %v2402
    %v2502 = vadd.f32 %v2337, %v2467
    %v2503 = vadd.f32 %v2275, %v2405
    %v2504 = vadd.f32 %v2340, %v2470
    %v2505 = vadd.f32 %v2278, %v2408
    %v2506 = vadd.f32 %v2343, %v2473
    %v2508 = vperm.slane %v1988, 0
    %v2509 = vperm.slane %v1988, 1
    %v2512 = vadd.f32 %v2475, %v2508
    %v2513 = vadd.f32 %v2476, %v2509
    %v2514 = vadd.f32 %v2477, %v2508
    %v2515 = vadd.f32 %v2478, %v2509
    %v2516 = vadd.f32 %v2479, %v2508
    %v2517 = vadd.f32 %v2480, %v2509
    %v2518 = vadd.f32 %v2481, %v2508
    %v2519 = vadd.f32 %v2482, %v2509
    %v2520 = vadd.f32 %v2483, %v2508
    %v2521 = vadd.f32 %v2484, %v2509
    %v2522 = vadd.f32 %v2485, %v2508
    %v2523 = vadd.f32 %v2486, %v2509
    %v2524 = vadd.f32 %v2487, %v2508
    %v2525 = vadd.f32 %v2488, %v2509
    %v2526 = vadd.f32 %v2489, %v2508
    %v2527 = vadd.f32 %v2490, %v2509
    %v2528 = vadd.f32 %v2491, %v2508
    %v2529 = vadd.f32 %v2492, %v2509
    %v2530 = vadd.f32 %v2493, %v2508
    %v2531 = vadd.f32 %v2494, %v2509
    %v2532 = vadd.f32 %v2495, %v2508
    %v2533 = vadd.f32 %v2496, %v2509
    %v2534 = vadd.f32 %v2497, %v2508
    %v2535 = vadd.f32 %v2498, %v2509
    %v2536 = vadd.f32 %v2499, %v2508
    %v2537 = vadd.f32 %v2500, %v2509
    %v2538 = vadd.f32 %v2501, %v2508
    %v2539 = vadd.f32 %v2502, %v2509
    %v2540 = vadd.f32 %v2503, %v2508
    %v2541 = vadd.f32 %v2504, %v2509
    %v2542 = vadd.f32 %v2505, %v2508
    %v2543 = vadd.f32 %v2506, %v2509
    %v2544 = vadd.f32 %v2512, %v2514
    %v2545 = vadd.f32 %v2544, %v2516
    %v2546 = vadd.f32 %v2545, %v2518
    %v2547 = vadd.f32 %v2546, %v2520
    %v2548 = vadd.f32 %v2547, %v2522
    %v2549 = vadd.f32 %v2548, %v2524
    %v2550 = vadd.f32 %v2549, %v2526
    %v2551 = vadd.f32 %v2550, %v2528
    %v2552 = vadd.f32 %v2551, %v2530
    %v2553 = vadd.f32 %v2552, %v2532
    %v2554 = vadd.f32 %v2553, %v2534
    %v2555 = vadd.f32 %v2554, %v2536
    %v2556 = vadd.f32 %v2555, %v2538
    %v2557 = vadd.f32 %v2556, %v2540
    %v2558 = vadd.f32 %v2557, %v2542
    %v2559 = vrot.slane %v2558, 4
    %v2560 = vadd.f32 %v2558, %v2559
    %v2561 = vrot.slane %v2560, 2
    %v2562 = vadd.f32 %v2560, %v2561
    %v2563 = vrot.slane %v2562, 1
    %v2564 = vadd.f32 %v2562, %v2563
    %v2565 = vadd.f32 %v2513, %v2515
    %v2566 = vadd.f32 %v2565, %v2517
    %v2567 = vadd.f32 %v2566, %v2519
    %v2568 = vadd.f32 %v2567, %v2521
    %v2569 = vadd.f32 %v2568, %v2523
    %v2570 = vadd.f32 %v2569, %v2525
    %v2571 = vadd.f32 %v2570, %v2527
    %v2572 = vadd.f32 %v2571, %v2529
    %v2573 = vadd.f32 %v2572, %v2531
    %v2574 = vadd.f32 %v2573, %v2533
    %v2575 = vadd.f32 %v2574, %v2535
    %v2576 = vadd.f32 %v2575, %v2537
    %v2577 = vadd.f32 %v2576, %v2539
    %v2578 = vadd.f32 %v2577, %v2541
    %v2579 = vadd.f32 %v2578, %v2543
    %v2580 = vrot.slane %v2579, 4
    %v2581 = vadd.f32 %v2579, %v2580
    %v2582 = vrot.slane %v2581, 2
    %v2583 = vadd.f32 %v2581, %v2582
    %v2584 = vrot.slane %v2583, 1
    %v2585 = vadd.f32 %v2583, %v2584
    %v2586 = vmul.f32 %v2564, %v1219
    %v2587 = vmul.f32 %v2585, %v1219
    %v2588 = vmul.f32 %v2512, %v2512
    %v2589 = vmul.f32 %v2513, %v2513
    %v2590 = vmul.f32 %v2514, %v2514
    %v2591 = vmul.f32 %v2515, %v2515
    %v2592 = vmul.f32 %v2516, %v2516
    %v2593 = vmul.f32 %v2517, %v2517
    %v2594 = vmul.f32 %v2518, %v2518
    %v2595 = vmul.f32 %v2519, %v2519
    %v2596 = vmul.f32 %v2520, %v2520
    %v2597 = vmul.f32 %v2521, %v2521
    %v2598 = vmul.f32 %v2522, %v2522
    %v2599 = vmul.f32 %v2523, %v2523
    %v2600 = vmul.f32 %v2524, %v2524
    %v2601 = vmul.f32 %v2525, %v2525
    %v2602 = vmul.f32 %v2526, %v2526
    %v2603 = vmul.f32 %v2527, %v2527
    %v2604 = vmul.f32 %v2528, %v2528
    %v2605 = vmul.f32 %v2529, %v2529
    %v2606 = vmul.f32 %v2530, %v2530
    %v2607 = vmul.f32 %v2531, %v2531
    %v2608 = vmul.f32 %v2532, %v2532
    %v2609 = vmul.f32 %v2533, %v2533
    %v2610 = vmul.f32 %v2534, %v2534
    %v2611 = vmul.f32 %v2535, %v2535
    %v2612 = vmul.f32 %v2536, %v2536
    %v2613 = vmul.f32 %v2537, %v2537
    %v2614 = vmul.f32 %v2538, %v2538
    %v2615 = vmul.f32 %v2539, %v2539
    %v2616 = vmul.f32 %v2540, %v2540
    %v2617 = vmul.f32 %v2541, %v2541
    %v2618 = vmul.f32 %v2542, %v2542
    %v2619 = vmul.f32 %v2543, %v2543
    %v2620 = vadd.f32 %v2588, %v2590
    %v2621 = vadd.f32 %v2620, %v2592
    %v2622 = vadd.f32 %v2621, %v2594
    %v2623 = vadd.f32 %v2622, %v2596
    %v2624 = vadd.f32 %v2623, %v2598
    %v2625 = vadd.f32 %v2624, %v2600
    %v2626 = vadd.f32 %v2625, %v2602
    %v2627 = vadd.f32 %v2626, %v2604
    %v2628 = vadd.f32 %v2627, %v2606
    %v2629 = vadd.f32 %v2628, %v2608
    %v2630 = vadd.f32 %v2629, %v2610
    %v2631 = vadd.f32 %v2630, %v2612
    %v2632 = vadd.f32 %v2631, %v2614
    %v2633 = vadd.f32 %v2632, %v2616
    %v2634 = vadd.f32 %v2633, %v2618
    %v2635 = vrot.slane %v2634, 4
    %v2636 = vadd.f32 %v2634, %v2635
    %v2637 = vrot.slane %v2636, 2
    %v2638 = vadd.f32 %v2636, %v2637
    %v2639 = vrot.slane %v2638, 1
    %v2640 = vadd.f32 %v2638, %v2639
    %v2641 = vadd.f32 %v2589, %v2591
    %v2642 = vadd.f32 %v2641, %v2593
    %v2643 = vadd.f32 %v2642, %v2595
    %v2644 = vadd.f32 %v2643, %v2597
    %v2645 = vadd.f32 %v2644, %v2599
    %v2646 = vadd.f32 %v2645, %v2601
    %v2647 = vadd.f32 %v2646, %v2603
    %v2648 = vadd.f32 %v2647, %v2605
    %v2649 = vadd.f32 %v2648, %v2607
    %v2650 = vadd.f32 %v2649, %v2609
    %v2651 = vadd.f32 %v2650, %v2611
    %v2652 = vadd.f32 %v2651, %v2613
    %v2653 = vadd.f32 %v2652, %v2615
    %v2654 = vadd.f32 %v2653, %v2617
    %v2655 = vadd.f32 %v2654, %v2619
    %v2656 = vrot.slane %v2655, 4
    %v2657 = vadd.f32 %v2655, %v2656
    %v2658 = vrot.slane %v2657, 2
    %v2659 = vadd.f32 %v2657, %v2658
    %v2660 = vrot.slane %v2659, 1
    %v2661 = vadd.f32 %v2659, %v2660
    %v2662 = vmul.f32 %v2640, %v1219
    %v2663 = vmul.f32 %v2661, %v1219
    %v2664 = vmul.f32 %v2586, %v2586
    %v2665 = vmul.f32 %v2587, %v2587
    %v2666 = vsub.f32 %v2662, %v2664
    %v2667 = vsub.f32 %v2663, %v2665
    %v2668 = vmax.f32 %v2666, 0.0
    %v2669 = vmax.f32 %v2667, 0.0
    %v2670 = vsub.f32 %v2512, %v2586
    %v2671 = vsub.f32 %v2513, %v2587
    %v2672 = vsub.f32 %v2514, %v2586
    %v2673 = vsub.f32 %v2515, %v2587
    %v2674 = vsub.f32 %v2516, %v2586
    %v2675 = vsub.f32 %v2517, %v2587
    %v2676 = vsub.f32 %v2518, %v2586
    %v2677 = vsub.f32 %v2519, %v2587
    %v2678 = vsub.f32 %v2520, %v2586
    %v2679 = vsub.f32 %v2521, %v2587
    %v2680 = vsub.f32 %v2522, %v2586
    %v2681 = vsub.f32 %v2523, %v2587
    %v2682 = vsub.f32 %v2524, %v2586
    %v2683 = vsub.f32 %v2525, %v2587
    %v2684 = vsub.f32 %v2526, %v2586
    %v2685 = vsub.f32 %v2527, %v2587
    %v2686 = vsub.f32 %v2528, %v2586
    %v2687 = vsub.f32 %v2529, %v2587
    %v2688 = vsub.f32 %v2530, %v2586
    %v2689 = vsub.f32 %v2531, %v2587
    %v2690 = vsub.f32 %v2532, %v2586
    %v2691 = vsub.f32 %v2533, %v2587
    %v2692 = vsub.f32 %v2534, %v2586
    %v2693 = vsub.f32 %v2535, %v2587
    %v2694 = vsub.f32 %v2536, %v2586
    %v2695 = vsub.f32 %v2537, %v2587
    %v2696 = vsub.f32 %v2538, %v2586
    %v2697 = vsub.f32 %v2539, %v2587
    %v2698 = vsub.f32 %v2540, %v2586
    %v2699 = vsub.f32 %v2541, %v2587
    %v2700 = vsub.f32 %v2542, %v2586
    %v2701 = vsub.f32 %v2543, %v2587
    %v2702 = vadd.f32 %v2668, 1e-05
    %v2703 = vadd.f32 %v2669, 1e-05
    %v2704 = vrsqrt.pop %v2702
    %v2705 = vmul.f32 %v2704, %v2702
    %v2706 = vmul.f32 %v2705, %v2704
    %v2707 = vmul.f32 0.5, %v2706
    %v2708 = vsub.f32 1.5, %v2707
    %v2709 = vmul.f32 %v2704, %v2708
    %vm2710 = vweird.f32 %v2702
    %vm2711 = vweird.f32 %v2704
    %vm2712 = vmor %vm2710, %vm2711
    %v2713 = vsel %vm2712, %v2704, %v2709
    %v2714 = vrsqrt.pop %v2703
    %v2715 = vmul.f32 %v2714, %v2703
    %v2716 = vmul.f32 %v2715, %v2714
    %v2717 = vmul.f32 0.5, %v2716
    %v2718 = vsub.f32 1.5, %v2717
    %v2719 = vmul.f32 %v2714, %v2718
    %vm2720 = vweird.f32 %v2703
    %vm2721 = vweird.f32 %v2714
    %vm2722 = vmor %vm2720, %vm2721
    %v2723 = vsel %vm2722, %v2714, %v2719
    %v2724 = vmul.f32 %v2670, %v2713
    %v2725 = vmul.f32 %v2671, %v2723
    %v2726 = vmul.f32 %v2672, %v2713
    %v2727 = vmul.f32 %v2673, %v2723
    %v2728 = vmul.f32 %v2674, %v2713
    %v2729 = vmul.f32 %v2675, %v2723
    %v2730 = vmul.f32 %v2676, %v2713
    %v2731 = vmul.f32 %v2677, %v2723
    %v2732 = vmul.f32 %v2678, %v2713
    %v2733 = vmul.f32 %v2679, %v2723
    %v2734 = vmul.f32 %v2680, %v2713
    %v2735 = vmul.f32 %v2681, %v2723
    %v2736 = vmul.f32 %v2682, %v2713
    %v2737 = vmul.f32 %v2683, %v2723
    %v2738 = vmul.f32 %v2684, %v2713
    %v2739 = vmul.f32 %v2685, %v2723
    %v2740 = vmul.f32 %v2686, %v2713
    %v2741 = vmul.f32 %v2687, %v2723
    %v2742 = vmul.f32 %v2688, %v2713
    %v2743 = vmul.f32 %v2689, %v2723
    %v2744 = vmul.f32 %v2690, %v2713
    %v2745 = vmul.f32 %v2691, %v2723
    %v2746 = vmul.f32 %v2692, %v2713
    %v2747 = vmul.f32 %v2693, %v2723
    %v2748 = vmul.f32 %v2694, %v2713
    %v2749 = vmul.f32 %v2695, %v2723
    %v2750 = vmul.f32 %v2696, %v2713
    %v2751 = vmul.f32 %v2697, %v2723
    %v2752 = vmul.f32 %v2698, %v2713
    %v2753 = vmul.f32 %v2699, %v2723
    %v2754 = vmul.f32 %v2700, %v2713
    %v2755 = vmul.f32 %v2701, %v2723
    %v2757 = vperm.slane %v1989, 0
    %v2758 = vperm.slane %v1989, 1
    %v2761 = vmul.f32 %v2724, %v2757
    %v2762 = vmul.f32 %v2725, %v2758
    %v2763 = vmul.f32 %v2726, %v2757
    %v2764 = vmul.f32 %v2727, %v2758
    %v2765 = vmul.f32 %v2728, %v2757
    %v2766 = vmul.f32 %v2729, %v2758
    %v2767 = vmul.f32 %v2730, %v2757
    %v2768 = vmul.f32 %v2731, %v2758
    %v2769 = vmul.f32 %v2732, %v2757
    %v2770 = vmul.f32 %v2733, %v2758
    %v2771 = vmul.f32 %v2734, %v2757
    %v2772 = vmul.f32 %v2735, %v2758
    %v2773 = vmul.f32 %v2736, %v2757
    %v2774 = vmul.f32 %v2737, %v2758
    %v2775 = vmul.f32 %v2738, %v2757
    %v2776 = vmul.f32 %v2739, %v2758
    %v2777 = vmul.f32 %v2740, %v2757
    %v2778 = vmul.f32 %v2741, %v2758
    %v2779 = vmul.f32 %v2742, %v2757
    %v2780 = vmul.f32 %v2743, %v2758
    %v2781 = vmul.f32 %v2744, %v2757
    %v2782 = vmul.f32 %v2745, %v2758
    %v2783 = vmul.f32 %v2746, %v2757
    %v2784 = vmul.f32 %v2747, %v2758
    %v2785 = vmul.f32 %v2748, %v2757
    %v2786 = vmul.f32 %v2749, %v2758
    %v2787 = vmul.f32 %v2750, %v2757
    %v2788 = vmul.f32 %v2751, %v2758
    %v2789 = vmul.f32 %v2752, %v2757
    %v2790 = vmul.f32 %v2753, %v2758
    %v2791 = vmul.f32 %v2754, %v2757
    %v2792 = vmul.f32 %v2755, %v2758
    %v2794 = vperm.slane %v1990, 0
    %v2795 = vperm.slane %v1990, 1
    %v2798 = vadd.f32 %v2761, %v2794
    %v2799 = vadd.f32 %v2762, %v2795
    %v2800 = vadd.f32 %v2763, %v2794
    %v2801 = vadd.f32 %v2764, %v2795
    %v2802 = vadd.f32 %v2765, %v2794
    %v2803 = vadd.f32 %v2766, %v2795
    %v2804 = vadd.f32 %v2767, %v2794
    %v2805 = vadd.f32 %v2768, %v2795
    %v2806 = vadd.f32 %v2769, %v2794
    %v2807 = vadd.f32 %v2770, %v2795
    %v2808 = vadd.f32 %v2771, %v2794
    %v2809 = vadd.f32 %v2772, %v2795
    %v2810 = vadd.f32 %v2773, %v2794
    %v2811 = vadd.f32 %v2774, %v2795
    %v2812 = vadd.f32 %v2775, %v2794
    %v2813 = vadd.f32 %v2776, %v2795
    %v2814 = vadd.f32 %v2777, %v2794
    %v2815 = vadd.f32 %v2778, %v2795
    %v2816 = vadd.f32 %v2779, %v2794
    %v2817 = vadd.f32 %v2780, %v2795
    %v2818 = vadd.f32 %v2781, %v2794
    %v2819 = vadd.f32 %v2782, %v2795
    %v2820 = vadd.f32 %v2783, %v2794
    %v2821 = vadd.f32 %v2784, %v2795
    %v2822 = vadd.f32 %v2785, %v2794
    %v2823 = vadd.f32 %v2786, %v2795
    %v2824 = vadd.f32 %v2787, %v2794
    %v2825 = vadd.f32 %v2788, %v2795
    %v2826 = vadd.f32 %v2789, %v2794
    %v2827 = vadd.f32 %v2790, %v2795
    %v2828 = vadd.f32 %v2791, %v2794
    %v2829 = vadd.f32 %v2792, %v2795
    %v2830 = vmul.f32 %v2798, 0.5
    %v2831 = vmul.f32 %v2800, 0.5
    %v2832 = vmul.f32 %v2802, 0.5
    %v2833 = vmul.f32 %v2804, 0.5
    %v2834 = vmul.f32 %v2806, 0.5
    %v2835 = vmul.f32 %v2808, 0.5
    %v2836 = vmul.f32 %v2810, 0.5
    %v2837 = vmul.f32 %v2812, 0.5
    %v2838 = vmul.f32 %v2814, 0.5
    %v2839 = vmul.f32 %v2816, 0.5
    %v2840 = vmul.f32 %v2818, 0.5
    %v2841 = vmul.f32 %v2820, 0.5
    %v2842 = vmul.f32 %v2822, 0.5
    %v2843 = vmul.f32 %v2824, 0.5
    %v2844 = vmul.f32 %v2826, 0.5
    %v2845 = vmul.f32 %v2828, 0.5
    %v2846 = vtanh.pop %v2830
    %v2847 = vtanh.pop %v2831
    %v2848 = vtanh.pop %v2832
    %v2849 = vtanh.pop %v2833
    %v2850 = vtanh.pop %v2834
    %v2851 = vtanh.pop %v2835
    %v2852 = vtanh.pop %v2836
    %v2853 = vtanh.pop %v2837
    %v2854 = vtanh.pop %v2838
    %v2855 = vtanh.pop %v2839
    %v2856 = vtanh.pop %v2840
    %v2857 = vtanh.pop %v2841
    %v2858 = vtanh.pop %v2842
    %v2859 = vtanh.pop %v2843
    %v2860 = vtanh.pop %v2844
    %v2861 = vtanh.pop %v2845
    %v2862 = vadd.f32 %v2846, 1.0
    %v2863 = vadd.f32 %v2847, 1.0
    %v2864 = vadd.f32 %v2848, 1.0
    %v2865 = vadd.f32 %v2849, 1.0
    %v2866 = vadd.f32 %v2850, 1.0
    %v2867 = vadd.f32 %v2851, 1.0
    %v2868 = vadd.f32 %v2852, 1.0
    %v2869 = vadd.f32 %v2853, 1.0
    %v2870 = vadd.f32 %v2854, 1.0
    %v2871 = vadd.f32 %v2855, 1.0
    %v2872 = vadd.f32 %v2856, 1.0
    %v2873 = vadd.f32 %v2857, 1.0
    %v2874 = vadd.f32 %v2858, 1.0
    %v2875 = vadd.f32 %v2859, 1.0
    %v2876 = vadd.f32 %v2860, 1.0
    %v2877 = vadd.f32 %v2861, 1.0
    %v2878 = vmul.f32 %v2862, 0.5
    %v2879 = vmul.f32 %v2863, 0.5
    %v2880 = vmul.f32 %v2864, 0.5
    %v2881 = vmul.f32 %v2865, 0.5
    %v2882 = vmul.f32 %v2866, 0.5
    %v2883 = vmul.f32 %v2867, 0.5
    %v2884 = vmul.f32 %v2868, 0.5
    %v2885 = vmul.f32 %v2869, 0.5
    %v2886 = vmul.f32 %v2870, 0.5
    %v2887 = vmul.f32 %v2871, 0.5
    %v2888 = vmul.f32 %v2872, 0.5
    %v2889 = vmul.f32 %v2873, 0.5
    %v2890 = vmul.f32 %v2874, 0.5
    %v2891 = vmul.f32 %v2875, 0.5
    %v2892 = vmul.f32 %v2876, 0.5
    %v2893 = vmul.f32 %v2877, 0.5
    %v2894 = vmax.f32 %v2799, 0.0
    %v2895 = vmax.f32 %v2801, 0.0
    %v2896 = vmax.f32 %v2803, 0.0
    %v2897 = vmax.f32 %v2805, 0.0
    %v2898 = vmax.f32 %v2807, 0.0
    %v2899 = vmax.f32 %v2809, 0.0
    %v2900 = vmax.f32 %v2811, 0.0
    %v2901 = vmax.f32 %v2813, 0.0
    %v2902 = vmax.f32 %v2815, 0.0
    %v2903 = vmax.f32 %v2817, 0.0
    %v2904 = vmax.f32 %v2819, 0.0
    %v2905 = vmax.f32 %v2821, 0.0
    %v2906 = vmax.f32 %v2823, 0.0
    %v2907 = vmax.f32 %v2825, 0.0
    %v2908 = vmax.f32 %v2827, 0.0
    %v2909 = vmax.f32 %v2829, 0.0
    %v2910 = vand.u32 2147483647, %v2799
    %v2911 = vand.u32 2147483647, %v2801
    %v2912 = vand.u32 2147483647, %v2803
    %v2913 = vand.u32 2147483647, %v2805
    %v2914 = vand.u32 2147483647, %v2807
    %v2915 = vand.u32 2147483647, %v2809
    %v2916 = vand.u32 2147483647, %v2811
    %v2917 = vand.u32 2147483647, %v2813
    %v2918 = vand.u32 2147483647, %v2815
    %v2919 = vand.u32 2147483647, %v2817
    %v2920 = vand.u32 2147483647, %v2819
    %v2921 = vand.u32 2147483647, %v2821
    %v2922 = vand.u32 2147483647, %v2823
    %v2923 = vand.u32 2147483647, %v2825
    %v2924 = vand.u32 2147483647, %v2827
    %v2925 = vand.u32 2147483647, %v2829
    %v2926 = vsub.f32 0.0, %v2910
    %v2927 = vsub.f32 0.0, %v2911
    %v2928 = vsub.f32 0.0, %v2912
    %v2929 = vsub.f32 0.0, %v2913
    %v2930 = vsub.f32 0.0, %v2914
    %v2931 = vsub.f32 0.0, %v2915
    %v2932 = vsub.f32 0.0, %v2916
    %v2933 = vsub.f32 0.0, %v2917
    %v2934 = vsub.f32 0.0, %v2918
    %v2935 = vsub.f32 0.0, %v2919
    %v2936 = vsub.f32 0.0, %v2920
    %v2937 = vsub.f32 0.0, %v2921
    %v2938 = vsub.f32 0.0, %v2922
    %v2939 = vsub.f32 0.0, %v2923
    %v2940 = vsub.f32 0.0, %v2924
    %v2941 = vsub.f32 0.0, %v2925
    %v2942 = vmul.f32 %v2926, 1.442695
    %v2943 = vpow.pop %v2942
    %v2944 = vmul.f32 %v2927, 1.442695
    %v2945 = vpow.pop %v2944
    %v2946 = vmul.f32 %v2928, 1.442695
    %v2947 = vpow.pop %v2946
    %v2948 = vmul.f32 %v2929, 1.442695
    %v2949 = vpow.pop %v2948
    %v2950 = vmul.f32 %v2930, 1.442695
    %v2951 = vpow.pop %v2950
    %v2952 = vmul.f32 %v2931, 1.442695
    %v2953 = vpow.pop %v2952
    %v2954 = vmul.f32 %v2932, 1.442695
    %v2955 = vpow.pop %v2954
    %v2956 = vmul.f32 %v2933, 1.442695
    %v2957 = vpow.pop %v2956
    %v2958 = vmul.f32 %v2934, 1.442695
    %v2959 = vpow.pop %v2958
    %v2960 = vmul.f32 %v2935, 1.442695
    %v2961 = vpow.pop %v2960
    %v2962 = vmul.f32 %v2936, 1.442695
    %v2963 = vpow.pop %v2962
    %v2964 = vmul.f32 %v2937, 1.442695
    %v2965 = vpow.pop %v2964
    %v2966 = vmul.f32 %v2938, 1.442695
    %v2967 = vpow.pop %v2966
    %v2968 = vmul.f32 %v2939, 1.442695
    %v2969 = vpow.pop %v2968
    %v2970 = vmul.f32 %v2940, 1.442695
    %v2971 = vpow.pop %v2970
    %v2972 = vmul.f32 %v2941, 1.442695
    %v2973 = vpow.pop %v2972
    %v2974 = vadd.f32 %v2943, 1.0
    %v2975 = vlog2.pop %v2974
    %v2976 = vmul.f32 %v2975, 0.6931472
    %v2977 = vmul.f32 -0.5, %v2943
    %v2978 = vadd.f32 %v2977, 1.0
    %v2979 = vmul.f32 %v2978, %v2943
    %v2980 = vand.u32 2147483647, %v2943
    %vm2981 = vcmp.lt.f32.partialorder %v2980, 0.0004427343
    %v2982 = vsel %vm2981, %v2979, %v2976
    %v2983 = vadd.f32 %v2945, 1.0
    %v2984 = vlog2.pop %v2983
    %v2985 = vmul.f32 %v2984, 0.6931472
    %v2986 = vmul.f32 -0.5, %v2945
    %v2987 = vadd.f32 %v2986, 1.0
    %v2988 = vmul.f32 %v2987, %v2945
    %v2989 = vand.u32 2147483647, %v2945
    %vm2990 = vcmp.lt.f32.partialorder %v2989, 0.0004427343
    %v2991 = vsel %vm2990, %v2988, %v2985
    %v2992 = vadd.f32 %v2947, 1.0
    %v2993 = vlog2.pop %v2992
    %v2994 = vmul.f32 %v2993, 0.6931472
    %v2995 = vmul.f32 -0.5, %v2947
    %v2996 = vadd.f32 %v2995, 1.0
    %v2997 = vmul.f32 %v2996, %v2947
    %v2998 = vand.u32 2147483647, %v2947
    %vm2999 = vcmp.lt.f32.partialorder %v2998, 0.0004427343
    %v3000 = vsel %vm2999, %v2997, %v2994
    %v3001 = vadd.f32 %v2949, 1.0
    %v3002 = vlog2.pop %v3001
    %v3003 = vmul.f32 %v3002, 0.6931472
    %v3004 = vmul.f32 -0.5, %v2949
    %v3005 = vadd.f32 %v3004, 1.0
    %v3006 = vmul.f32 %v3005, %v2949
    %v3007 = vand.u32 2147483647, %v2949
    %vm3008 = vcmp.lt.f32.partialorder %v3007, 0.0004427343
    %v3009 = vsel %vm3008, %v3006, %v3003
    %v3010 = vadd.f32 %v2951, 1.0
    %v3011 = vlog2.pop %v3010
    %v3012 = vmul.f32 %v3011, 0.6931472
    %v3013 = vmul.f32 -0.5, %v2951
    %v3014 = vadd.f32 %v3013, 1.0
    %v3015 = vmul.f32 %v3014, %v2951
    %v3016 = vand.u32 2147483647, %v2951
    %vm3017 = vcmp.lt.f32.partialorder %v3016, 0.0004427343
    %v3018 = vsel %vm3017, %v3015, %v3012
    %v3019 = vadd.f32 %v2953, 1.0
    %v3020 = vlog2.pop %v3019
    %v3021 = vmul.f32 %v3020, 0.6931472
    %v3022 = vmul.f32 -0.5, %v2953
    %v3023 = vadd.f32 %v3022, 1.0
    %v3024 = vmul.f32 %v3023, %v2953
    %v3025 = vand.u32 2147483647, %v2953
    %vm3026 = vcmp.lt.f32.partialorder %v3025, 0.0004427343
    %v3027 = vsel %vm3026, %v3024, %v3021
    %v3028 = vadd.f32 %v2955, 1.0
    %v3029 = vlog2.pop %v3028
    %v3030 = vmul.f32 %v3029, 0.6931472
    %v3031 = vmul.f32 -0.5, %v2955
    %v3032 = vadd.f32 %v3031, 1.0
    %v3033 = vmul.f32 %v3032, %v2955
    %v3034 = vand.u32 2147483647, %v2955
    %vm3035 = vcmp.lt.f32.partialorder %v3034, 0.0004427343
    %v3036 = vsel %vm3035, %v3033, %v3030
    %v3037 = vadd.f32 %v2957, 1.0
    %v3038 = vlog2.pop %v3037
    %v3039 = vmul.f32 %v3038, 0.6931472
    %v3040 = vmul.f32 -0.5, %v2957
    %v3041 = vadd.f32 %v3040, 1.0
    %v3042 = vmul.f32 %v3041, %v2957
    %v3043 = vand.u32 2147483647, %v2957
    %vm3044 = vcmp.lt.f32.partialorder %v3043, 0.0004427343
    %v3045 = vsel %vm3044, %v3042, %v3039
    %v3046 = vadd.f32 %v2959, 1.0
    %v3047 = vlog2.pop %v3046
    %v3048 = vmul.f32 %v3047, 0.6931472
    %v3049 = vmul.f32 -0.5, %v2959
    %v3050 = vadd.f32 %v3049, 1.0
    %v3051 = vmul.f32 %v3050, %v2959
    %v3052 = vand.u32 2147483647, %v2959
    %vm3053 = vcmp.lt.f32.partialorder %v3052, 0.0004427343
    %v3054 = vsel %vm3053, %v3051, %v3048
    %v3055 = vadd.f32 %v2961, 1.0
    %v3056 = vlog2.pop %v3055
    %v3057 = vmul.f32 %v3056, 0.6931472
    %v3058 = vmul.f32 -0.5, %v2961
    %v3059 = vadd.f32 %v3058, 1.0
    %v3060 = vmul.f32 %v3059, %v2961
    %v3061 = vand.u32 2147483647, %v2961
    %vm3062 = vcmp.lt.f32.partialorder %v3061, 0.0004427343
    %v3063 = vsel %vm3062, %v3060, %v3057
    %v3064 = vadd.f32 %v2963, 1.0
    %v3065 = vlog2.pop %v3064
    %v3066 = vmul.f32 %v3065, 0.6931472
    %v3067 = vmul.f32 -0.5, %v2963
    %v3068 = vadd.f32 %v3067, 1.0
    %v3069 = vmul.f32 %v3068, %v2963
    %v3070 = vand.u32 2147483647, %v2963
    %vm3071 = vcmp.lt.f32.partialorder %v3070, 0.0004427343
    %v3072 = vsel %vm3071, %v3069, %v3066
    %v3073 = vadd.f32 %v2965, 1.0
    %v3074 = vlog2.pop %v3073
    %v3075 = vmul.f32 %v3074, 0.6931472
    %v3076 = vmul.f32 -0.5, %v2965
    %v3077 = vadd.f32 %v3076, 1.0
    %v3078 = vmul.f32 %v3077, %v2965
    %v3079 = vand.u32 2147483647, %v2965
    %vm3080 = vcmp.lt.f32.partialorder %v3079, 0.0004427343
    %v3081 = vsel %vm3080, %v3078, %v3075
    %v3082 = vadd.f32 %v2967, 1.0
    %v3083 = vlog2.pop %v3082
    %v3084 = vmul.f32 %v3083, 0.6931472
    %v3085 = vmul.f32 -0.5, %v2967
    %v3086 = vadd.f32 %v3085, 1.0
    %v3087 = vmul.f32 %v3086, %v2967
    %v3088 = vand.u32 2147483647, %v2967
    %vm3089 = vcmp.lt.f32.partialorder %v3088, 0.0004427343
    %v3090 = vsel %vm3089, %v3087, %v3084
    %v3091 = vadd.f32 %v2969, 1.0
    %v3092 = vlog2.pop %v3091
    %v3093 = vmul.f32 %v3092, 0.6931472
    %v3094 = vmul.f32 -0.5, %v2969
    %v3095 = vadd.f32 %v3094, 1.0
    %v3096 = vmul.f32 %v3095, %v2969
    %v3097 = vand.u32 2147483647, %v2969
    %vm3098 = vcmp.lt.f32.partialorder %v3097, 0.0004427343
    %v3099 = vsel %vm3098, %v3096, %v3093
    %v3100 = vadd.f32 %v2971, 1.0
    %v3101 = vlog2.pop %v3100
    %v3102 = vmul.f32 %v3101, 0.6931472
    %v3103 = vmul.f32 -0.5, %v2971
    %v3104 = vadd.f32 %v3103, 1.0
    %v3105 = vmul.f32 %v3104, %v2971
    %v3106 = vand.u32 2147483647, %v2971
    %vm3107 = vcmp.lt.f32.partialorder %v3106, 0.0004427343
    %v3108 = vsel %vm3107, %v3105, %v3102
    %v3109 = vadd.f32 %v2973, 1.0
    %v3110 = vlog2.pop %v3109
    %v3111 = vmul.f32 %v3110, 0.6931472
    %v3112 = vmul.f32 -0.5, %v2973
    %v3113 = vadd.f32 %v3112, 1.0
    %v3114 = vmul.f32 %v3113, %v2973
    %v3115 = vand.u32 2147483647, %v2973
    %vm3116 = vcmp.lt.f32.partialorder %v3115, 0.0004427343
    %v3117 = vsel %vm3116, %v3114, %v3111
    %v3118 = vadd.f32 %v2894, %v2982
    %v3119 = vadd.f32 %v2895, %v2991
    %v3120 = vadd.f32 %v2896, %v3000
    %v3121 = vadd.f32 %v2897, %v3009
    %v3122 = vadd.f32 %v2898, %v3018
    %v3123 = vadd.f32 %v2899, %v3027
    %v3124 = vadd.f32 %v2900, %v3036
    %v3125 = vadd.f32 %v2901, %v3045
    %v3126 = vadd.f32 %v2902, %v3054
    %v3127 = vadd.f32 %v2903, %v3063
    %v3128 = vadd.f32 %v2904, %v3072
    %v3129 = vadd.f32 %v2905, %v3081
    %v3130 = vadd.f32 %v2906, %v3090
    %v3131 = vadd.f32 %v2907, %v3099
    %v3132 = vadd.f32 %v2908, %v3108
    %v3133 = vadd.f32 %v2909, %v3117
    %v3134 = vmul.f32 %v2878, %v3118
    %v3135 = vmul.f32 %v2879, %v3119
    %v3136 = vmul.f32 %v2880, %v3120
    %v3137 = vmul.f32 %v2881, %v3121
    %v3138 = vmul.f32 %v2882, %v3122
    %v3139 = vmul.f32 %v2883, %v3123
    %v3140 = vmul.f32 %v2884, %v3124
    %v3141 = vmul.f32 %v2885, %v3125
    %v3142 = vmul.f32 %v2886, %v3126
    %v3143 = vmul.f32 %v2887, %v3127
    %v3144 = vmul.f32 %v2888, %v3128
    %v3145 = vmul.f32 %v2889, %v3129
    %v3146 = vmul.f32 %v2890, %v3130
    %v3147 = vmul.f32 %v2891, %v3131
    %v3148 = vmul.f32 %v2892, %v3132
    %v3149 = vmul.f32 %v2893, %v3133
    %3150 = vmatpush.msra.mxu0 %v3149
    %3151 = vmatpush.msra.mxu0 %v3148
    %3152 = vmatpush.msra.mxu0 %v3147
    %3153 = vmatpush.msra.mxu0 %v3146
    %3154 = vmatpush.msra.mxu0 %v3145
    %3155 = vmatpush.msra.mxu0 %v3144
    %3156 = vmatpush.msra.mxu0 %v3143
    %3157 = vmatpush.msra.mxu0 %v3142
    %3158 = vmatpush.msra.mxu0 %v3141
    %3159 = vmatpush.msra.mxu0 %v3140
    %3160 = vmatpush.msra.mxu0 %v3139
    %3161 = vmatpush.msra.mxu0 %v3138
    %3162 = vmatpush.msra.mxu0 %v3137
    %3163 = vmatpush.msra.mxu0 %v3136
    %3164 = vmatpush.msra.mxu0 %v3135
    %3165 = vmatpush.msra.mxu0 %v3134
    %3166 = vmatmul.f32.gmra.mxu0 %v367
    %v3167 = vpop.f32.mrf.mxu0
    %v3168 = vadd.f32 0.0, %v3167
    %3169 = vmatmul.f32.gmra.mxu0 %v368
    %v3170 = vpop.f32.mrf.mxu0
    %v3171 = vadd.f32 0.0, %v3170
    %3172 = vdwg.mxu0
    %v3173 = vadd.f32 %v3168, %v3171
    %v3174 = vrot.slane %v3173, 4
    %v3175 = vadd.f32 %v3173, %v3174
    %v3176 = vrot.slane %v3175, 2
    %v3177 = vadd.f32 %v3175, %v3176
    %v3178 = vrot.slane %v3177, 1
    %v3179 = vadd.f32 %v3177, %v3178
    %v3180 = vmul.f32 %v3179, %v1820
    %v3181 = vmul.f32 %v3168, %v3168
    %v3182 = vmul.f32 %v3171, %v3171
    %v3183 = vadd.f32 %v3181, %v3182
    %v3184 = vrot.slane %v3183, 4
    %v3185 = vadd.f32 %v3183, %v3184
    %v3186 = vrot.slane %v3185, 2
    %v3187 = vadd.f32 %v3185, %v3186
    %v3188 = vrot.slane %v3187, 1
    %v3189 = vadd.f32 %v3187, %v3188
    %v3190 = vmul.f32 %v3189, %v1820
    %v3191 = vmul.f32 %v3180, %v3180
    %v3192 = vsub.f32 %v3190, %v3191
    %v3193 = vmax.f32 %v3192, 0.0
    %v3194 = vsub.f32 %v3168, %v3180
    %v3195 = vsub.f32 %v3171, %v3180
    %v3196 = vadd.f32 %v3193, 1e-05
    %v3197 = vrsqrt.pop %v3196
    %v3198 = vmul.f32 %v3197, %v3196
    %v3199 = vmul.f32 %v3198, %v3197
    %v3200 = vmul.f32 0.5, %v3199
    %v3201 = vsub.f32 1.5, %v3200
    %v3202 = vmul.f32 %v3197, %v3201
    %vm3203 = vweird.f32 %v3196
    %vm3204 = vweird.f32 %v3197
    %vm3205 = vmor %vm3203, %vm3204
    %v3206 = vsel %vm3205, %v3197, %v3202
    %v3207 = vmul.f32 %v3194, %v3206
    %v3208 = vmul.f32 %v3195, %v3206
    %v3210 = vperm.slane %v1991, 0
    %v3212 = vmul.f32 %v3207, %v3210
    %v3213 = vmul.f32 %v3208, %v3210
    %v3215 = vperm.slane %v1992, 0
    %v3217 = vadd.f32 %v3212, %v3215
    %v3218 = vadd.f32 %v3213, %v3215
    %v3219 = vadd.f32 %v1890, %v3217
    %v3220 = vadd.f32 %v1891, %v3218
    %v3221 = vmax.f32 %v3219, 0.0
    %v3222 = vmax.f32 %v3220, 0.0
    %v3223 = vand.u32 2147483647, %v3219
    %v3224 = vand.u32 2147483647, %v3220
    %v3225 = vsub.f32 0.0, %v3223
    %v3226 = vsub.f32 0.0, %v3224
    %v3227 = vmul.f32 %v3225, 1.442695
    %v3228 = vpow.pop %v3227
    %v3229 = vmul.f32 %v3226, 1.442695
    %v3230 = vpow.pop %v3229
    %v3231 = vadd.f32 %v3228, 1.0
    %v3232 = vlog2.pop %v3231
    %v3233 = vmul.f32 %v3232, 0.6931472
    %v3234 = vmul.f32 -0.5, %v3228
    %v3235 = vadd.f32 %v3234, 1.0
    %v3236 = vmul.f32 %v3235, %v3228
    %v3237 = vand.u32 2147483647, %v3228
    %vm3238 = vcmp.lt.f32.partialorder %v3237, 0.0004427343
    %v3239 = vsel %vm3238, %v3236, %v3233
    %v3240 = vadd.f32 %v3230, 1.0
    %v3241 = vlog2.pop %v3240
    %v3242 = vmul.f32 %v3241, 0.6931472
    %v3243 = vmul.f32 -0.5, %v3230
    %v3244 = vadd.f32 %v3243, 1.0
    %v3245 = vmul.f32 %v3244, %v3230
    %v3246 = vand.u32 2147483647, %v3230
    %vm3247 = vcmp.lt.f32.partialorder %v3246, 0.0004427343
    %v3248 = vsel %vm3247, %v3245, %v3242
    %v3249 = vadd.f32 %v3221, %v3239
    %v3250 = vadd.f32 %v3222, %v3248
    %v3251 = vadd.f32 %v3249, %v1890
    %v3252 = vadd.f32 %v3250, %v1891
    %v3253 = vmax.f32 %v3251, 0.0
    %v3254 = vmax.f32 %v3252, 0.0
    %v3255 = vand.u32 2147483647, %v3251
    %v3256 = vand.u32 2147483647, %v3252
    %v3257 = vsub.f32 0.0, %v3255
    %v3258 = vsub.f32 0.0, %v3256
    %v3259 = vmul.f32 %v3257, 1.442695
    %v3260 = vpow.pop %v3259
    %v3261 = vmul.f32 %v3258, 1.442695
    %v3262 = vpow.pop %v3261
    %v3263 = vadd.f32 %v3260, 1.0
    %v3264 = vlog2.pop %v3263
    %v3265 = vmul.f32 %v3264, 0.6931472
    %v3266 = vmul.f32 -0.5, %v3260
    %v3267 = vadd.f32 %v3266, 1.0
    %v3268 = vmul.f32 %v3267, %v3260
    %v3269 = vand.u32 2147483647, %v3260
    %vm3270 = vcmp.lt.f32.partialorder %v3269, 0.0004427343
    %v3271 = vsel %vm3270, %v3268, %v3265
    %v3272 = vadd.f32 %v3262, 1.0
    %v3273 = vlog2.pop %v3272
    %v3274 = vmul.f32 %v3273, 0.6931472
    %v3275 = vmul.f32 -0.5, %v3262
    %v3276 = vadd.f32 %v3275, 1.0
    %v3277 = vmul.f32 %v3276, %v3262
    %v3278 = vand.u32 2147483647, %v3262
    %vm3279 = vcmp.lt.f32.partialorder %v3278, 0.0004427343
    %v3280 = vsel %vm3279, %v3277, %v3274
    %v3281 = vadd.f32 %v3253, %v3271
    %v3282 = vadd.f32 %v3254, %v3280
    %v3283 = vld [vmem:[#allocation7] sm:$0xff]
    %v3285 = vsel %vm615, %v3283, 0
    %3287 = vmatpush.msra.mxu0 0.0
    %3288 = vmatpush.msra.mxu0 0.0
    %3289 = vmatpush.msra.mxu0 0.0
    %3290 = vmatpush.msra.mxu0 0.0
    %3291 = vmatpush.msra.mxu0 0.0
    %3292 = vmatpush.msra.mxu0 0.0
    %3293 = vmatpush.msra.mxu0 0.0
    %3294 = vmatpush.msra.mxu0 0.0
    %3295 = vmatpush.msra.mxu0 0.0
    %3296 = vmatpush.msra.mxu0 0.0
    %3297 = vmatpush.msra.mxu0 0.0
    %3298 = vmatpush.msra.mxu0 0.0
    %3299 = vmatpush.msra.mxu0 0.0
    %3300 = vmatpush.msra.mxu0 0.0
    %3301 = vmatpush.msra.mxu0 %v3282
    %3302 = vmatpush.msra.mxu0 %v3281
    %3303 = vmatmul.f32.gmra.mxu0 %v3285
    %v3304 = vpop.f32.mrf.mxu0
    %v3305 = vadd.f32 0.0, %v3304
    %3306 = vdwg.mxu0
    %v3307 = vmax.f32 %v3305, 0.0
    %v3308 = vand.u32 2147483647, %v3305
    %v3309 = vsub.f32 0.0, %v3308
    %v3310 = vmul.f32 %v3309, 1.442695
    %v3311 = vpow.pop %v3310
    %v3312 = vadd.f32 %v3311, 1.0
    %v3313 = vlog2.pop %v3312
    %v3314 = vmul.f32 %v3313, 0.6931472
    %v3315 = vmul.f32 -0.5, %v3311
    %v3316 = vadd.f32 %v3315, 1.0
    %v3317 = vmul.f32 %v3316, %v3311
    %v3318 = vand.u32 2147483647, %v3311
    %vm3319 = vcmp.lt.f32.partialorder %v3318, 0.0004427343
    %v3320 = vsel %vm3319, %v3317, %v3314
    %v3321 = vadd.f32 %v3307, %v3320
    %v3322 = vld [vmem:[#allocation23] sm:$0xff]
    %v3323 = vld [vmem:[#allocation23 + $0x8] sm:$0xff]
    %v3324 = vld [vmem:[#allocation23 + $0x10] sm:$0xff]
    %v3325 = vld [vmem:[#allocation23 + $0x18] sm:$0xff]
    %v3326 = vld [vmem:[#allocation23 + $0x20] sm:$0xff]
    %v3327 = vld [vmem:[#allocation23 + $0x28] sm:$0xff]
    %v3328 = vld [vmem:[#allocation23 + $0x30] sm:$0xff]
    %v3329 = vld [vmem:[#allocation23 + $0x38] sm:$0xff]
    %v3330 = vld [vmem:[#allocation23 + $0x40] sm:$0xff]
    %v3331 = vld [vmem:[#allocation23 + $0x48] sm:$0xff]
    %v3332 = vld [vmem:[#allocation23 + $0x50] sm:$0xff]
    %v3333 = vld [vmem:[#allocation23 + $0x58] sm:$0xff]
    %v3334 = vld [vmem:[#allocation23 + $0x60] sm:$0xff]
    %v3335 = vld [vmem:[#allocation23 + $0x68] sm:$0xff]
    %v3336 = vld [vmem:[#allocation23 + $0x70] sm:$0xff]
    %v3337 = vld [vmem:[#allocation23 + $0x78] sm:$0xff]
    %v3338 = vld [vmem:[%s25] sm:$0x1]
    %v3340 = vperm.slane %v3338, 0
    %3342 = vmatpush.msra.mxu0 %v3337
    %3343 = vmatpush.msra.mxu0 %v3336
    %3344 = vmatpush.msra.mxu0 %v3335
    %3345 = vmatpush.msra.mxu0 %v3334
    %3346 = vmatpush.msra.mxu0 %v3333
    %3347 = vmatpush.msra.mxu0 %v3332
    %3348 = vmatpush.msra.mxu0 %v3331
    %3349 = vmatpush.msra.mxu0 %v3330
    %3350 = vmatpush.msra.mxu0 %v3329
    %3351 = vmatpush.msra.mxu0 %v3328
    %3352 = vmatpush.msra.mxu0 %v3327
    %3353 = vmatpush.msra.mxu0 %v3326
    %3354 = vmatpush.msra.mxu0 %v3325
    %3355 = vmatpush.msra.mxu0 %v3324
    %3356 = vmatpush.msra.mxu0 %v3323
    %3357 = vmatpush.msra.mxu0 %v3322
    %3358 = vmatmul.f32.gmra.mxu0 %v3321
    %v3359 = vpop.f32.mrf.mxu0
    %v3360 = vadd.f32 %v3340, %v3359
    %3361 = vdwg.mxu0
    %v3362 = vmax.f32 %v3360, 0.0
    %v3363 = vand.u32 2147483647, %v3360
    %v3364 = vsub.f32 0.0, %v3363
    %v3365 = vmul.f32 %v3364, 1.442695
    %v3366 = vpow.pop %v3365
    %v3367 = vadd.f32 %v3366, 1.0
    %v3368 = vlog2.pop %v3367
    %v3369 = vmul.f32 %v3368, 0.6931472
    %v3370 = vmul.f32 -0.5, %v3366
    %v3371 = vadd.f32 %v3370, 1.0
    %v3372 = vmul.f32 %v3371, %v3366
    %v3373 = vand.u32 2147483647, %v3366
    %vm3374 = vcmp.lt.f32.partialorder %v3373, 0.0004427343
    %v3375 = vsel %vm3374, %v3372, %v3369
    %v3376 = vadd.f32 %v3362, %v3375
    %v3377 = vld [vmem:[#allocation25] sm:$0xff]
    %v3378 = vld [vmem:[#allocation25 + $0x8] sm:$0xff]
    %v3379 = vld [vmem:[#allocation25 + $0x10] sm:$0xff]
    %v3380 = vld [vmem:[#allocation25 + $0x18] sm:$0xff]
    %v3381 = vld [vmem:[#allocation25 + $0x20] sm:$0xff]
    %v3382 = vld [vmem:[#allocation25 + $0x28] sm:$0xff]
    %v3383 = vld [vmem:[#allocation25 + $0x30] sm:$0xff]
    %v3384 = vld [vmem:[#allocation25 + $0x38] sm:$0xff]
    %v3385 = vld [vmem:[#allocation25 + $0x40] sm:$0xff]
    %v3386 = vld [vmem:[#allocation25 + $0x48] sm:$0xff]
    %v3387 = vld [vmem:[#allocation25 + $0x50] sm:$0xff]
    %v3388 = vld [vmem:[#allocation25 + $0x58] sm:$0xff]
    %v3389 = vld [vmem:[#allocation25 + $0x60] sm:$0xff]
    %v3390 = vld [vmem:[#allocation25 + $0x68] sm:$0xff]
    %v3391 = vld [vmem:[#allocation25 + $0x70] sm:$0xff]
    %v3392 = vld [vmem:[#allocation25 + $0x78] sm:$0xff]
    %v3393 = vld [vmem:[%s27] sm:$0x1]
    %v3395 = vperm.slane %v3393, 0
    %3397 = vmatpush.msra.mxu0 %v3392
    %3398 = vmatpush.msra.mxu0 %v3391
    %3399 = vmatpush.msra.mxu0 %v3390
    %3400 = vmatpush.msra.mxu0 %v3389
    %3401 = vmatpush.msra.mxu0 %v3388
    %3402 = vmatpush.msra.mxu0 %v3387
    %3403 = vmatpush.msra.mxu0 %v3386
    %3404 = vmatpush.msra.mxu0 %v3385
    %3405 = vmatpush.msra.mxu0 %v3384
    %3406 = vmatpush.msra.mxu0 %v3383
    %3407 = vmatpush.msra.mxu0 %v3382
    %3408 = vmatpush.msra.mxu0 %v3381
    %3409 = vmatpush.msra.mxu0 %v3380
    %3410 = vmatpush.msra.mxu0 %v3379
    %3411 = vmatpush.msra.mxu0 %v3378
    %3412 = vmatpush.msra.mxu0 %v3377
    %3413 = vmatmul.f32.gmra.mxu0 %v3376
    %v3414 = vpop.f32.mrf.mxu0
    %v3415 = vadd.f32 %v3395, %v3414
    %3416 = vdwg.mxu0
    %3417 = vst [vmem:[#allocation26] sm:$0xff] %v3415
    // Predicated region
    $region174: #{tpu_custom_call.1} parent=1 // pred_check
      _
    $region175: #{tpu_custom_call.1} parent=1 // pred_check_branch
      %3419 = sbr.rel (0) target = $region177
    $region176: #{tpu_custom_call.1} parent=1 // pred_region
      %3421 = vsyncadd [#allocation4], 0
      %s3423 = sshll.u32 [#allocation26], 4
      %s3424 = int_to_ptr.vmem [resolvable:$true] %s3423
      %s3425 = sshll.u32 %s28, 4
      %s3426 = int_to_ptr.hbm [resolvable:$true] %s3425
      %3428 = dma.vmem_to_hbm [thread:$0]  %s3424, 128, %s3426, [#allocation4]
    $region177: #{tpu_custom_call.1} parent=1 // pred_fallthru
      _
    // Predicated region
    $region178: #{tpu_custom_call.1} parent=1 // pred_check
      _
    $region179: #{tpu_custom_call.1} parent=1 // pred_check_branch
      %3430 = sbr.rel (0) target = $region181
    $region180: #{tpu_custom_call.1} parent=1 // pred_region
      %3432 = dma.done [#allocation4], 128
    $region181: #{tpu_custom_call.1} parent=1 // pred_fallthru
      _
    %3433 = vsyncpa [#allocation3], 1
    %3434 = vsyncpa [#allocation6], 1
    %3435 = vsyncpa [#allocation9], 1
    %3436 = vsyncpa [#allocation12], 1
    %3437 = vsyncpa [#allocation15], 1
    %3438 = vsyncpa [#allocation18], 1
    %3439 = vsyncpa [#allocation21], 1
    %3440 = vsyncpa [#allocation24], 1
    %3441 = vsyncpa [#allocation4], 1

</llo_original>
